<compile_context>
chip_gen: v6e
topology: v6e:2x2x1
jax: 0.10.0
libtpu: 0.0.40
codegen_flags: <defaults>
</compile_context>

<pallas_src>
import functools

import numpy as np
import jax
import jax.numpy as jnp
from jax.experimental import pallas as pl
from jax.experimental.pallas import tpu as pltpu

EPS = 1e-5


# ----------------------------------------------------------------------------
# in-kernel helpers
# ----------------------------------------------------------------------------
def _relu(x):
    return jnp.maximum(x, 0.0)


def _bn_apply(x, st_ref, gamma_ref, beta_ref):
    """Normalize with precomputed stats st = [mu ; 1/std] of shape (2, C)."""
    return (x - st_ref[0:1, :]) * st_ref[1:2, :] * gamma_ref[...] + beta_ref[...]


def _accumulate_stats(acc_ref, vals, step):
    """Accumulate per-channel sum / sum-of-squares across grid steps (P3)."""
    @pl.when(step == 0)
    def _():
        acc_ref[...] = jnp.zeros_like(acc_ref)

    acc_ref[0:1, :] += jnp.sum(vals, axis=0, keepdims=True)
    acc_ref[1:2, :] += jnp.sum(vals * vals, axis=0, keepdims=True)


def _fma_matmul(x, w_ref, b_ref):
    """x @ w + b for tiny contraction dim K as unrolled VPU FMAs (MXU stays free).

    Works for 2-D (rows, K) and 3-D (tn, ns, K) operands via broadcasting.
    """
    w = w_ref[...]
    out = b_ref[...] + x[..., 0:1] * w[0:1, :]
    for k in range(1, w.shape[0]):
        out = out + x[..., k:k + 1] * w[k:k + 1, :]
    return out


def _linear_p(gxyz, st3_ref, wp1_ref, bp1_ref, gp_ref, bpb_ref, wp2_ref, bp2_ref):
    """linear_p: Linear(3,3) -> BN(3) -> ReLU -> Linear(3,C); K=3 on the VPU."""
    h = _fma_matmul(gxyz, wp1_ref, bp1_ref)
    h = _relu(_bn_apply(h, st3_ref, gp_ref, bpb_ref))
    return _fma_matmul(h, wp2_ref, bp2_ref)


# ----------------------------------------------------------------------------
# Pallas kernels (one per pipeline pass)
# ----------------------------------------------------------------------------
def _stats0_kernel(x_ref, gxyz_ref, w1_ref, wp1_ref, bp1_ref, acc1_ref, accp_ref):
    """Pass 1: bn1 stats (over x@w1) and linear_p BN(3) stats, fused."""
    i = pl.program_id(0)
    h1 = jnp.dot(x_ref[...], w1_ref[...], preferred_element_type=jnp.float32)
    _accumulate_stats(acc1_ref, h1, i)
    hp = _fma_matmul(gxyz_ref[...], wp1_ref, bp1_ref)
    _accumulate_stats(accp_ref, hp, i)


def _qkv_kernel(x_ref, w1_ref, st1_ref, g1_ref, b1_ref, wqkv_ref, bqkv_ref, qkv_ref):
    """Pass 2: x1 = relu(bn1(x@w1)); fused Q/K/V as one lane-dense (tn, 3c) store."""
    h = jnp.dot(x_ref[...], w1_ref[...], preferred_element_type=jnp.float32)
    x1 = _relu(_bn_apply(h, st1_ref, g1_ref, b1_ref))
    qkv_ref[...] = (jnp.dot(x1, wqkv_ref[...], preferred_element_type=jnp.float32)
                    + bqkv_ref[...])


def _w0_kernel(xq_ref, gk_ref, gv_ref, gxyz_ref, st3_ref,
               wp1_ref, bp1_ref, gp_ref, bpb_ref, wp2_ref, bp2_ref,
               w0_ref, gvpr_ref, acc_ref, *, tn, ns, c):
    """Pass 3: p_r = linear_p(gxyz); cache w0 = gk - xq + p_r and gv + p_r;
    accumulate linear_w BN(c) stats of w0."""
    i = pl.program_id(0)
    pr = _linear_p(gxyz_ref[...], st3_ref, wp1_ref, bp1_ref, gp_ref, bpb_ref,
                   wp2_ref, bp2_ref)                                  # (tn*ns, c)
    gk3 = gk_ref[...].reshape(tn, ns, c)
    w0 = (gk3 - xq_ref[...][:, None, :]).reshape(tn * ns, c) + pr
    w0_ref[...] = w0
    gvpr_ref[...] = gv_ref[...] + pr
    _accumulate_stats(acc_ref, w0, i)


def _whid_kernel(w0_ref, stw_ref, gw1_ref, bw1_ref, ww1_ref, bw1b_ref,
                 w1h_ref, acc_ref, *, tn, ns, c4):
    """Pass 4: w1 = relu(bn_w(w0)) @ ww1 + b; store per-point contiguous rows;
    accumulate BN(c4) stats."""
    i = pl.program_id(0)
    h = _relu(_bn_apply(w0_ref[...], stw_ref, gw1_ref, bw1_ref))
    w1 = jnp.dot(h, ww1_ref[...], preferred_element_type=jnp.float32) + bw1b_ref[...]
    w1h_ref[...] = w1.reshape(tn, ns, c4)       # contiguous (ns*c4) bytes per point
    _accumulate_stats(acc_ref, w1, i)


def _attn_kernel(w1h_ref, gvpr_ref, st4_ref, gw2_ref, bw2_ref, ww2_ref, bw2b_ref,
                 xattn_ref, acc_ref, *, tn, ns, s, c4):
    """Pass 5: w2 = relu(bn4(w1)) @ ww2 + b (K=c4 VPU FMAs); exact softmax over
    neighbors; share-group weighted aggregation; accumulate bn2 stats."""
    i = pl.program_id(0)
    c = s * c4
    h = _relu(_bn_apply(w1h_ref[...], st4_ref, gw2_ref, bw2_ref))     # (tn, ns, c4)
    w2 = _fma_matmul(h, ww2_ref, bw2b_ref)                            # (tn, ns, c4)
    a = jnp.exp(w2 - jnp.max(w2, axis=1, keepdims=True))
    a = a / jnp.sum(a, axis=1, keepdims=True)          # exact softmax (no approx)
    vp = gvpr_ref[...].reshape(tn, ns, c)
    parts = [jnp.sum(vp[:, :, si * c4:(si + 1) * c4] * a, axis=1) for si in range(s)]
    x_attn = jnp.concatenate(parts, axis=-1)                          # (tn, c)
    xattn_ref[...] = x_attn
    _accumulate_stats(acc_ref, x_attn, i)


def _lin3_kernel(xattn_ref, st2_ref, g2_ref, b2_ref, w3_ref, h3_ref, acc_ref):
    """Pass 6: x2 = relu(bn2(x_attn)); h3 = x2 @ w3; accumulate bn3 stats."""
    x2 = _relu(_bn_apply(xattn_ref[...], st2_ref, g2_ref, b2_ref))
    h3 = jnp.dot(x2, w3_ref[...], preferred_element_type=jnp.float32)
    h3_ref[...] = h3
    _accumulate_stats(acc_ref, h3, pl.program_id(0))


def _residual_kernel(h3_ref, x_ref, st3n_ref, g3_ref, b3_ref, y_ref):
    """Pass 7: y = relu(bn3(h3) + identity)."""
    y_ref[...] = _relu(_bn_apply(h3_ref[...], st3n_ref, g3_ref, b3_ref) + x_ref[...])


# ----------------------------------------------------------------------------
# glue
# ----------------------------------------------------------------------------
def _vmem_specs(k):
    return [pl.BlockSpec(memory_space=pltpu.MemorySpace.VMEM) for _ in range(k)]


def _finalize_stats(acc, count):
    mu = acc[0:1, :] / count
    var = jnp.maximum(acc[1:2, :] / count - mu * mu, 0.0)
    return jnp.concatenate([mu, jax.lax.rsqrt(var + EPS)], axis=0)   # (2, C)


def _pick_point_tile(n, ns, c):
    """~1 MiB streamed (tn*ns, c) f32 neighbor block per grid step.

    Keeps the per-call working set (a few such blocks, double-buffered) at a
    handful of MiB, safely inside the default scoped-VMEM limit on every chip
    generation (incl. v7x's 64 MiB physical VMEM), while amortizing grid-step
    overhead and using large contiguous DMAs.
    """
    row_bytes = max(c, 8) * 4
    target_rows = max(512, (1 << 20) // row_bytes)
    cap = max(8, min(n, target_rows // ns))
    cap -= cap % 8
    cap = max(8, cap)
    t = cap
    while t > 8 and n % t != 0:
        t -= 8
    if n % t != 0:
        # TODO(synk): pad n up to a multiple of 8 instead of falling back to a
        # single whole-array tile for awkward point counts.
        t = n
    return t


def _knn_within_batch(p, offsets, nsample):
    """Deterministic per-batch kNN stand-in for boundaryops.boundaryquery."""
    # TODO(synk): boundaryops.boundaryquery (edge/boundary-constrained neighbor
    # search, custom CUDA op) has no Pallas equivalent; O(n^2) kNN used instead.
    n = p.shape[0]
    batch = jnp.searchsorted(offsets, jnp.arange(n), side="right")
    d2 = jnp.sum((p[:, None, :] - p[None, :, :]) ** 2, axis=-1)
    d2 = jnp.where(batch[:, None] == batch[None, :], d2, jnp.inf)
    _, idx = jax.lax.top_k(-d2, nsample)
    return idx.astype(jnp.int32)


def boundary_transformer_block(p, x, o, edges, boundary, params, share_planes, nsample):
    n, cin = x.shape
    c = params["w1"].shape[1]
    s = share_planes
    c4 = c // s
    ns = nsample
    m = n * ns
    assert cin == c, "residual connection requires in_planes == planes"
    del edges, boundary

    idx = _knn_within_batch(p, o, ns)                       # (n, ns)
    idx_flat = idx.reshape(-1)

    tn = _pick_point_tile(n, ns, c)
    gn = n // tn

    # neighbor-relative coordinates: 3 channels, computed once in glue.
    gxyz = (p[idx_flat].reshape(n, ns, 3) - p[:, None, :]).reshape(m, 3)

    # fused Q/K/V weights
    wqkv = jnp.concatenate([params["wq"], params["wk"], params["wv"]], axis=1)
    bqkv = jnp.concatenate([params["bq"], params["bk"], params["bv"]], axis=1)

    arb = pltpu.CompilerParams(dimension_semantics=("arbitrary",))
    par = pltpu.CompilerParams(dimension_semantics=("parallel",))

    row_blk = lambda r, w: pl.BlockSpec((r, w), lambda i: (i, 0))
    acc_blk = lambda w: pl.BlockSpec((2, w), lambda i: (0, 0))
    nbr_blk = pl.BlockSpec((tn, ns, c4), lambda i: (i, 0, 0))

    # ---- pass 1: bn1 stats (x@w1) + linear_p BN(3) stats, fused -------------
    acc1, accp = pl.pallas_call(
        _stats0_kernel,
        grid=(gn,),
        in_specs=[row_blk(tn, cin), row_blk(tn * ns, 3)] + _vmem_specs(3),
        out_specs=[acc_blk(c), acc_blk(3)],
        out_shape=(jax.ShapeDtypeStruct((2, c), jnp.float32),
                   jax.ShapeDtypeStruct((2, 3), jnp.float32)),
        compiler_params=arb,
    )(x, gxyz, params["w1"], params["wp1"], params["bp1"])
    st1 = _finalize_stats(acc1, n)
    stp = _finalize_stats(accp, m)

    # ---- pass 2: linear1 -> bn1 -> relu -> fused QKV (single (n,3c) store) --
    qkv = pl.pallas_call(
        _qkv_kernel,
        grid=(gn,),
        in_specs=[row_blk(tn, cin)] + _vmem_specs(6),
        out_specs=row_blk(tn, 3 * c),
        out_shape=jax.ShapeDtypeStruct((n, 3 * c), jnp.float32),
        compiler_params=par,
    )(x, params["w1"], st1, params["g1"], params["b1"], wqkv, bqkv)

    xq = qkv[:, :c]
    # one-shot XLA gathers -> contiguous (m, c) neighbor streams (no per-row DMAs)
    gk = jnp.take(qkv[:, c:2 * c], idx_flat, axis=0)
    gv = jnp.take(qkv[:, 2 * c:], idx_flat, axis=0)

    # ---- pass 3: w0 / (gv + p_r) cache + linear_w BN(c) stats ----------------
    w0, gvpr, accw = pl.pallas_call(
        functools.partial(_w0_kernel, tn=tn, ns=ns, c=c),
        grid=(gn,),
        in_specs=[row_blk(tn, c), row_blk(tn * ns, c), row_blk(tn * ns, c),
                  row_blk(tn * ns, 3)] + _vmem_specs(7),
        out_specs=[row_blk(tn * ns, c), row_blk(tn * ns, c), acc_blk(c)],
        out_shape=(jax.ShapeDtypeStruct((m, c), jnp.float32),
                   jax.ShapeDtypeStruct((m, c), jnp.float32),
                   jax.ShapeDtypeStruct((2, c), jnp.float32)),
        compiler_params=arb,
    )(xq, gk, gv, gxyz, stp,
      params["wp1"], params["bp1"], params["gp"], params["bpb"],
      params["wp2"], params["bp2"])
    stw = _finalize_stats(accw, m)

    # ---- pass 4: linear_w hidden + BN(c/s) stats ------------------------------
    w1h, acc4 = pl.pallas_call(
        functools.partial(_whid_kernel, tn=tn, ns=ns, c4=c4),
        grid=(gn,),
        in_specs=[row_blk(tn * ns, c)] + _vmem_specs(5),
        out_specs=[nbr_blk, acc_blk(c4)],
        out_shape=(jax.ShapeDtypeStruct((n, ns, c4), jnp.float32),
                   jax.ShapeDtypeStruct((2, c4), jnp.float32)),
        compiler_params=arb,
    )(w0, stw, params["gw1"], params["bw1"], params["ww1"], params["bw1b"])
    st4 = _finalize_stats(acc4, m)

    # ---- pass 5: attention (softmax + share-group aggregation) + bn2 stats ---
    x_attn, acc2 = pl.pallas_call(
        functools.partial(_attn_kernel, tn=tn, ns=ns, s=s, c4=c4),
        grid=(gn,),
        in_specs=[nbr_blk, row_blk(tn * ns, c)] + _vmem_specs(5),
        out_specs=[row_blk(tn, c), acc_blk(c)],
        out_shape=(jax.ShapeDtypeStruct((n, c), jnp.float32),
                   jax.ShapeDtypeStruct((2, c), jnp.float32)),
        compiler_params=arb,
    )(w1h, gvpr, st4, params["gw2"], params["bw2"], params["ww2"], params["bw2b"])
    st2 = _finalize_stats(acc2, n)

    # ---- pass 6: bn2 -> relu -> linear3 + bn3 stats ---------------------------
    h3, acc3 = pl.pallas_call(
        _lin3_kernel,
        grid=(gn,),
        in_specs=[row_blk(tn, c)] + _vmem_specs(4),
        out_specs=[row_blk(tn, c), acc_blk(c)],
        out_shape=(jax.ShapeDtypeStruct((n, c), jnp.float32),
                   jax.ShapeDtypeStruct((2, c), jnp.float32)),
        compiler_params=arb,
    )(x_attn, st2, params["g2"], params["b2"], params["w3"])
    st3n = _finalize_stats(acc3, n)

    # ---- pass 7: bn3 -> residual -> relu --------------------------------------
    y = pl.pallas_call(
        _residual_kernel,
        grid=(gn,),
        in_specs=[row_blk(tn, c), row_blk(tn, c)] + _vmem_specs(3),
        out_specs=row_blk(tn, c),
        out_shape=jax.ShapeDtypeStruct((n, c), jnp.float32),
        compiler_params=par,
    )(h3, x, st3n, params["g3"], params["b3"])

    return p, y, o


# ----------------------------------------------------------------------------
# deterministic parameter init + pure-JAX reference
# ----------------------------------------------------------------------------
def init_params(key, cin, c, s):
    c4 = c // s
    ks = iter(jax.random.split(key, 48))

    def w(shape, scale=0.1):
        return jax.random.normal(next(ks), shape, jnp.float32) * scale

    def gamma(d):
        return jnp.ones((1, d), jnp.float32) + w((1, d), 0.05)

    return dict(
        w1=w((cin, c)), g1=gamma(c), b1=w((1, c), 0.05),
        wq=w((c, c)), bq=w((1, c), 0.05),
        wk=w((c, c)), bk=w((1, c), 0.05),
        wv=w((c, c)), bv=w((1, c), 0.05),
        wp1=w((3, 3), 0.3), bp1=w((1, 3), 0.05),
        gp=gamma(3), bpb=w((1, 3), 0.05),
        wp2=w((3, c), 0.3), bp2=w((1, c), 0.05),
        gw1=gamma(c), bw1=w((1, c), 0.05),
        ww1=w((c, c4)), bw1b=w((1, c4), 0.05),
        gw2=gamma(c4), bw2=w((1, c4), 0.05),
        ww2=w((c4, c4), 0.3), bw2b=w((1, c4), 0.05),
        g2=gamma(c), b2=w((1, c), 0.05),
        w3=w((c, c)), g3=gamma(c), b3=w((1, c), 0.05),
    )


def _bn_train(x, gamma, beta, axes):
    mu = jnp.mean(x, axis=axes, keepdims=True)
    var = jnp.mean((x - mu) ** 2, axis=axes, keepdims=True)
    return (x - mu) * jax.lax.rsqrt(var + EPS) * gamma + beta


def reference_forward(p, x, o, params, s, ns):
    n, cin = x.shape
    c = params["w1"].shape[1]
    c4 = c // s
    idx = _knn_within_batch(p, o, ns)
    x1 = _relu(_bn_train(x @ params["w1"], params["g1"], params["b1"], (0,)))
    xq = x1 @ params["wq"] + params["bq"]
    xk = x1 @ params["wk"] + params["bk"]
    xv = x1 @ params["wv"] + params["bv"]
    idx_flat = idx.reshape(-1)
    gxyz = p[idx_flat].reshape(n, ns, 3) - p[:, None, :]
    gk = xk[idx_flat].reshape(n, ns, c)
    gv = xv[idx_flat].reshape(n, ns, c)
    pr = gxyz @ params["wp1"] + params["bp1"]
    pr = _relu(_bn_train(pr, params["gp"], params["bpb"], (0, 1)))
    pr = pr @ params["wp2"] + params["bp2"]
    w = gk - xq[:, None, :] + pr
    w = _relu(_bn_train(w, params["gw1"], params["bw1"], (0, 1)))
    w = w @ params["ww1"] + params["bw1b"]
    w = _relu(_bn_train(w, params["gw2"], params["bw2"], (0, 1)))
    w = w @ params["ww2"] + params["bw2b"]
    w = jax.nn.softmax(w, axis=1)
    x_attn = jnp.sum((gv + pr).reshape(n, ns, s, c4) * w[:, :, None, :], axis=1).reshape(n, c)
    x2 = _relu(_bn_train(x_attn, params["g2"], params["b2"], (0,)))
    x3 = _bn_train(x2 @ params["w3"], params["g3"], params["b3"], (0,))
    return _relu(x3 + x)


if __name__ == "__main__":
    n, planes, share_planes, nsample = 256, 32, 8, 8
    key = jax.random.PRNGKey(0)
    kp, kx, kparam = jax.random.split(key, 3)

    p = jax.random.normal(kp, (n, 3), jnp.float32)
    x = jax.random.normal(kx, (n, planes), jnp.float32)
    o = jnp.array([n // 2, n], jnp.int32)            # two batches of 128 points
    edges = jnp.zeros((n, nsample), jnp.int32)       # placeholder (see TODO(synk))
    boundary = jnp.zeros((n,), jnp.int32)            # placeholder (see TODO(synk))

    params = init_params(kparam, planes, planes, share_planes)

    p_out, y, o_out = boundary_transformer_block(
        p, x, o, edges, boundary, params, share_planes, nsample)
    y = jax.block_until_ready(y)

    y_ref = reference_forward(p, x, o, params, share_planes, nsample)
    np.testing.assert_allclose(np.asarray(y), np.asarray(y_ref), rtol=1e-2, atol=1e-2)

    print("KERNEL_OK")
</pallas_src>

<mosaic_0001>
module attributes {stable_mosaic.version = 11 : i64} {
  func.func @_stats0_kernel(%arg0: i32, %arg1: memref<256x32xf32, #tpu.memory_space<vmem>>, %arg2: memref<2048x3xf32, #tpu.memory_space<vmem>>, %arg3: memref<32x32xf32, #tpu.memory_space<vmem>>, %arg4: memref<3x3xf32, #tpu.memory_space<vmem>>, %arg5: memref<1x3xf32, #tpu.memory_space<vmem>>, %arg6: memref<2x32xf32, #tpu.memory_space<vmem>>, %arg7: memref<2x3xf32, #tpu.memory_space<vmem>>) attributes {dimension_semantics = [#tpu.dimension_semantics<arbitrary>], iteration_bounds = array<i64: 1>, scalar_prefetch = 0 : i64, scratch_operands = 0 : i64, tpu.core_type = #tpu.core_type<tc>, window_params = [{transform_indices = @transform_0, window_bounds = array<i64: 256, 32>}, {transform_indices = @transform_1, window_bounds = array<i64: 2048, 3>}, {pipeline_mode = #tpu.pipeline_mode<synchronous>, transform_indices = @transform_2, window_bounds = array<i64: 32, 32>}, {pipeline_mode = #tpu.pipeline_mode<synchronous>, transform_indices = @transform_3, window_bounds = array<i64: 3, 3>}, {pipeline_mode = #tpu.pipeline_mode<synchronous>, transform_indices = @transform_4, window_bounds = array<i64: 1, 3>}, {pipeline_mode = #tpu.pipeline_mode<synchronous>, transform_indices = @transform_5, window_bounds = array<i64: 2, 32>}, {pipeline_mode = #tpu.pipeline_mode<synchronous>, transform_indices = @transform_6, window_bounds = array<i64: 2, 3>}]} {
    %c0 = arith.constant 0 : index
    %c0_0 = arith.constant 0 : index
    %0 = vector.load %arg1[%c0, %c0_0] : memref<256x32xf32, #tpu.memory_space<vmem>>, vector<256x32xf32>
    %c0_1 = arith.constant 0 : index
    %c0_2 = arith.constant 0 : index
    %1 = vector.load %arg3[%c0_1, %c0_2] : memref<32x32xf32, #tpu.memory_space<vmem>>, vector<32x32xf32>
    %cst = arith.constant dense<0.000000e+00> : vector<256x32xf32>
    %2 = tpu.matmul %0, %1, %cst {dimension_numbers = #tpu.dot_dimension_numbers<[1], [0], [0], [1], [0, 0, 1, 1], [], []>} : vector<256x32xf32>, vector<32x32xf32>, vector<256x32xf32> -> vector<256x32xf32>
    %c0_i32 = arith.constant 0 : i32
    %3 = arith.cmpi eq, %arg0, %c0_i32 : i32
    %4 = arith.extui %3 : i1 to i32
    %c0_i32_3 = arith.constant 0 : i32
    %5 = arith.cmpi ne, %4, %c0_i32_3 : i32
    scf.if %5 {
      %cst_31 = arith.constant 0.000000e+00 : f32
      %53 = vector.broadcast %cst_31 : f32 to vector<2x32xf32>
      %c0_32 = arith.constant 0 : index
      %c0_33 = arith.constant 0 : index
      %54 = vector.load %arg6[%c0_32, %c0_33] : memref<2x32xf32, #tpu.memory_space<vmem>>, vector<2x32xf32>
      tpu.vector_store %arg6[%c0_32, %c0_33], %53 {strides = array<i32>} : memref<2x32xf32, #tpu.memory_space<vmem>>, vector<2x32xf32>,
    } else {
    }
    %c0_4 = arith.constant 0 : index
    %c0_5 = arith.constant 0 : index
    %6 = vector.load %arg6[%c0_4, %c0_5] : memref<2x32xf32, #tpu.memory_space<vmem>>, vector<1x32xf32>
    %cst_6 = arith.constant dense<0.000000e+00> : vector<32xf32>
    %7 = vector.multi_reduction <add>, %2, %cst_6 [0] : vector<256x32xf32> to vector<32xf32>
    %8 = vector.shape_cast %7 : vector<32xf32> to vector<1x32xf32>
    %9 = arith.addf %6, %8 : vector<1x32xf32>
    %c0_7 = arith.constant 0 : index
    %c0_8 = arith.constant 0 : index
    %10 = vector.load %arg6[%c0_7, %c0_8] : memref<2x32xf32, #tpu.memory_space<vmem>>, vector<1x32xf32>
    tpu.vector_store %arg6[%c0_7, %c0_8], %9 {strides = array<i32>} : memref<2x32xf32, #tpu.memory_space<vmem>>, vector<1x32xf32>,
    %c1 = arith.constant 1 : index
    %c0_9 = arith.constant 0 : index
    %11 = vector.load %arg6[%c1, %c0_9] : memref<2x32xf32, #tpu.memory_space<vmem>>, vector<1x32xf32>
    %12 = arith.mulf %2, %2 : vector<256x32xf32>
    %cst_10 = arith.constant dense<0.000000e+00> : vector<32xf32>
    %13 = vector.multi_reduction <add>, %12, %cst_10 [0] : vector<256x32xf32> to vector<32xf32>
    %14 = vector.shape_cast %13 : vector<32xf32> to vector<1x32xf32>
    %15 = arith.addf %11, %14 : vector<1x32xf32>
    %c1_11 = arith.constant 1 : index
    %c0_12 = arith.constant 0 : index
    %16 = vector.load %arg6[%c1_11, %c0_12] : memref<2x32xf32, #tpu.memory_space<vmem>>, vector<1x32xf32>
    tpu.vector_store %arg6[%c1_11, %c0_12], %15 {strides = array<i32>} : memref<2x32xf32, #tpu.memory_space<vmem>>, vector<1x32xf32>,
    %c0_13 = arith.constant 0 : index
    %c0_14 = arith.constant 0 : index
    %17 = vector.load %arg2[%c0_13, %c0_14] : memref<2048x3xf32, #tpu.memory_space<vmem>>, vector<2048x3xf32>
    %c0_15 = arith.constant 0 : index
    %c0_16 = arith.constant 0 : index
    %18 = vector.load %arg4[%c0_15, %c0_16] : memref<3x3xf32, #tpu.memory_space<vmem>>, vector<3x3xf32>
    %c0_17 = arith.constant 0 : index
    %c0_18 = arith.constant 0 : index
    %19 = vector.load %arg5[%c0_17, %c0_18] : memref<1x3xf32, #tpu.memory_space<vmem>>, vector<1x3xf32>
    %20 = vector.extract_strided_slice %17 {offsets = [0, 0], sizes = [2048, 1], strides = [1, 1]} : vector<2048x3xf32> to vector<2048x1xf32>
    %21 = vector.extract_strided_slice %18 {offsets = [0, 0], sizes = [1, 3], strides = [1, 1]} : vector<3x3xf32> to vector<1x3xf32>
    %22 = vector.broadcast %20 : vector<2048x1xf32> to vector<2048x3xf32>
    %23 = vector.broadcast %21 : vector<1x3xf32> to vector<2048x3xf32>
    %24 = arith.mulf %22, %23 : vector<2048x3xf32>
    %25 = vector.broadcast %19 : vector<1x3xf32> to vector<2048x3xf32>
    %26 = arith.addf %25, %24 : vector<2048x3xf32>
    %27 = vector.extract_strided_slice %17 {offsets = [0, 1], sizes = [2048, 1], strides = [1, 1]} : vector<2048x3xf32> to vector<2048x1xf32>
    %28 = vector.extract_strided_slice %18 {offsets = [1, 0], sizes = [1, 3], strides = [1, 1]} : vector<3x3xf32> to vector<1x3xf32>
    %29 = vector.broadcast %27 : vector<2048x1xf32> to vector<2048x3xf32>
    %30 = vector.broadcast %28 : vector<1x3xf32> to vector<2048x3xf32>
    %31 = arith.mulf %29, %30 : vector<2048x3xf32>
    %32 = arith.addf %26, %31 : vector<2048x3xf32>
    %33 = vector.extract_strided_slice %17 {offsets = [0, 2], sizes = [2048, 1], strides = [1, 1]} : vector<2048x3xf32> to vector<2048x1xf32>
    %34 = vector.extract_strided_slice %18 {offsets = [2, 0], sizes = [1, 3], strides = [1, 1]} : vector<3x3xf32> to vector<1x3xf32>
    %35 = vector.broadcast %33 : vector<2048x1xf32> to vector<2048x3xf32>
    %36 = vector.broadcast %34 : vector<1x3xf32> to vector<2048x3xf32>
    %37 = arith.mulf %35, %36 : vector<2048x3xf32>
    %38 = arith.addf %32, %37 : vector<2048x3xf32>
    %c0_i32_19 = arith.constant 0 : i32
    %39 = arith.cmpi eq, %arg0, %c0_i32_19 : i32
    %40 = arith.extui %39 : i1 to i32
    %c0_i32_20 = arith.constant 0 : i32
    %41 = arith.cmpi ne, %40, %c0_i32_20 : i32
    scf.if %41 {
      %cst_31 = arith.constant 0.000000e+00 : f32
      %53 = vector.broadcast %cst_31 : f32 to vector<2x3xf32>
      %c0_32 = arith.constant 0 : index
      %c0_33 = arith.constant 0 : index
      %54 = vector.load %arg7[%c0_32, %c0_33] : memref<2x3xf32, #tpu.memory_space<vmem>>, vector<2x3xf32>
      tpu.vector_store %arg7[%c0_32, %c0_33], %53 {strides = array<i32>} : memref<2x3xf32, #tpu.memory_space<vmem>>, vector<2x3xf32>,
    } else {
    }
    %c0_21 = arith.constant 0 : index
    %c0_22 = arith.constant 0 : index
    %42 = vector.load %arg7[%c0_21, %c0_22] : memref<2x3xf32, #tpu.memory_space<vmem>>, vector<1x3xf32>
    %cst_23 = arith.constant dense<0.000000e+00> : vector<3xf32>
    %43 = vector.multi_reduction <add>, %38, %cst_23 [0] : vector<2048x3xf32> to vector<3xf32>
    %44 = vector.shape_cast %43 : vector<3xf32> to vector<1x3xf32>
    %45 = arith.addf %42, %44 : vector<1x3xf32>
    %c0_24 = arith.constant 0 : index
    %c0_25 = arith.constant 0 : index
    %46 = vector.load %arg7[%c0_24, %c0_25] : memref<2x3xf32, #tpu.memory_space<vmem>>, vector<1x3xf32>
    tpu.vector_store %arg7[%c0_24, %c0_25], %45 {strides = array<i32>} : memref<2x3xf32, #tpu.memory_space<vmem>>, vector<1x3xf32>,
    %c1_26 = arith.constant 1 : index
    %c0_27 = arith.constant 0 : index
    %47 = vector.load %arg7[%c1_26, %c0_27] : memref<2x3xf32, #tpu.memory_space<vmem>>, vector<1x3xf32>
    %48 = arith.mulf %38, %38 : vector<2048x3xf32>
    %cst_28 = arith.constant dense<0.000000e+00> : vector<3xf32>
    %49 = vector.multi_reduction <add>, %48, %cst_28 [0] : vector<2048x3xf32> to vector<3xf32>
    %50 = vector.shape_cast %49 : vector<3xf32> to vector<1x3xf32>
    %51 = arith.addf %47, %50 : vector<1x3xf32>
    %c1_29 = arith.constant 1 : index
    %c0_30 = arith.constant 0 : index
    %52 = vector.load %arg7[%c1_29, %c0_30] : memref<2x3xf32, #tpu.memory_space<vmem>>, vector<1x3xf32>
    tpu.vector_store %arg7[%c1_29, %c0_30], %51 {strides = array<i32>} : memref<2x3xf32, #tpu.memory_space<vmem>>, vector<1x3xf32>,
    return
  }
  func.func @transform_0(%arg0: i32) -> (i32, i32) {
    %c0_i32 = arith.constant 0 : i32
    %c0_i32_0 = arith.constant 0 : i32
    return %arg0, %c0_i32 : i32, i32
  }
  func.func @transform_1(%arg0: i32) -> (i32, i32) {
    %c0_i32 = arith.constant 0 : i32
    %c0_i32_0 = arith.constant 0 : i32
    return %arg0, %c0_i32 : i32, i32
  }
  func.func @transform_2(%arg0: i32) -> (i32, i32) {
    %c0_i32 = arith.constant 0 : i32
    %c0_i32_0 = arith.constant 0 : i32
    %c0_i32_1 = arith.constant 0 : i32
    return %c0_i32, %c0_i32_0 : i32, i32
  }
  func.func @transform_3(%arg0: i32) -> (i32, i32) {
    %c0_i32 = arith.constant 0 : i32
    %c0_i32_0 = arith.constant 0 : i32
    %c0_i32_1 = arith.constant 0 : i32
    return %c0_i32, %c0_i32_0 : i32, i32
  }
  func.func @transform_4(%arg0: i32) -> (i32, i32) {
    %c0_i32 = arith.constant 0 : i32
    %c0_i32_0 = arith.constant 0 : i32
    %c0_i32_1 = arith.constant 0 : i32
    return %c0_i32, %c0_i32_0 : i32, i32
  }
  func.func @transform_5(%arg0: i32) -> (i32, i32) {
    %c0_i32 = arith.constant 0 : i32
    %c0_i32_0 = arith.constant 0 : i32
    %c0_i32_1 = arith.constant 0 : i32
    return %c0_i32, %c0_i32_0 : i32, i32
  }
  func.func @transform_6(%arg0: i32) -> (i32, i32) {
    %c0_i32 = arith.constant 0 : i32
    %c0_i32_0 = arith.constant 0 : i32
    %c0_i32_1 = arith.constant 0 : i32
    return %c0_i32, %c0_i32_0 : i32, i32
  }
}

</mosaic_0001>

<llo_original>
// kernel: tpu_custom_call.1
$region0: #{tpu_custom_call.1}
  #allocation0 [shape = 'u32[]', space=smem, size = 0x4, offset = 0x4, fixed_abs, tag = 'smem constant byte address 0x4 - core index']
  #allocation1 [shape = 'u32[144,128]{1,0:T(1,128)}', space=vmem, size = 0x12000, scoped, tag = 'internal scratch']
  %s0 = inlined_call_operand.vmem [shape: f32[256,32], index: 0, kind: input, shape index: {}]
  %s1 = inlined_call_operand.vmem [shape: f32[2048,3], index: 1, kind: input, shape index: {}]
  %s2 = inlined_call_operand.vmem [shape: f32[32,32], index: 2, kind: input, shape index: {}]
  %s3 = inlined_call_operand.vmem [shape: f32[3,3], index: 3, kind: input, shape index: {}]
  %s4 = inlined_call_operand.vmem [shape: f32[1,3], index: 4, kind: input, shape index: {}]
  %s5 = inlined_call_operand.hbm [shape: f32[2,32], index: 5, kind: output, shape index: {0}]
  %s6 = inlined_call_operand.hbm [shape: f32[2,3], index: 6, kind: output, shape index: {1}]
  %7 = xla_tuple %s5, %s6
  %s8 = sld [smem:[#allocation0]]
  $region46: #{tpu_custom_call.1} parent=0
    _
  %s10 = ssub.s32 1, %s8
  %s11 = scalar_select 0, %s10, %s8
  $region1: #{tpu_custom_call.1} parent=0
    #allocation2 [shape = 'u8[1024]{0}', space=vmem, size = 0x400, scoped, tag = 'output window, operand 0, single buffered']
    #allocation3 [shape = 's32[1]{0}', space=sflag, size = 0x4, scoped, tag = 'scoped memory for tpu_custom_call.1']
    #allocation4 [shape = 'u8[1024]{0}', space=vmem, size = 0x400, scoped, tag = 'output window, operand 1, single buffered']
    #allocation5 [shape = 's32[1]{0}', space=sflag, size = 0x4, scoped, tag = 'scoped memory for tpu_custom_call.1']
    %12 = vsyncpa [#allocation3], 0
    %13 = vsyncpa [#allocation5], 0
    // Predicated region
    $region2: #{tpu_custom_call.1} parent=1 // pred_check
      _
    $region3: #{tpu_custom_call.1} parent=1 // pred_check_branch
      %15 = sbr.rel (0) target = $region5
    $region4: #{tpu_custom_call.1} parent=1 // pred_region
      _
    $region5: #{tpu_custom_call.1} parent=1 // pred_fallthru
      _
    // Predicated region
    $region6: #{tpu_custom_call.1} parent=1 // pred_check
      _
    $region7: #{tpu_custom_call.1} parent=1 // pred_check_branch
      %17 = sbr.rel (0) target = $region9
    $region8: #{tpu_custom_call.1} parent=1 // pred_region
      _
    $region9: #{tpu_custom_call.1} parent=1 // pred_fallthru
      _
    // Predicated region
    $region10: #{tpu_custom_call.1} parent=1 // pred_check
      _
    $region11: #{tpu_custom_call.1} parent=1 // pred_check_branch
      %19 = sbr.rel (0) target = $region13
    $region12: #{tpu_custom_call.1} parent=1 // pred_region
      _
    $region13: #{tpu_custom_call.1} parent=1 // pred_fallthru
      _
    // Predicated region
    $region14: #{tpu_custom_call.1} parent=1 // pred_check
      _
    $region15: #{tpu_custom_call.1} parent=1 // pred_check_branch
      %21 = sbr.rel (0) target = $region17
    $region16: #{tpu_custom_call.1} parent=1 // pred_region
      _
    $region17: #{tpu_custom_call.1} parent=1 // pred_fallthru
      _
    // Predicated region
    $region18: #{tpu_custom_call.1} parent=1 // pred_check
      _
    $region19: #{tpu_custom_call.1} parent=1 // pred_check_branch
      %23 = sbr.rel (0) target = $region21
    $region20: #{tpu_custom_call.1} parent=1 // pred_region
      _
    $region21: #{tpu_custom_call.1} parent=1 // pred_fallthru
      _
    %v24 = vld [vmem:[%s0] sm:$0xff]
    %v25 = vld [vmem:[%s0 + $0x8] sm:$0xff]
    %v26 = vld [vmem:[%s0 + $0x10] sm:$0xff]
    %v27 = vld [vmem:[%s0 + $0x18] sm:$0xff]
    %v28 = vld [vmem:[%s0 + $0x20] sm:$0xff]
    %v29 = vld [vmem:[%s0 + $0x28] sm:$0xff]
    %v30 = vld [vmem:[%s0 + $0x30] sm:$0xff]
    %v31 = vld [vmem:[%s0 + $0x38] sm:$0xff]
    %v32 = vld [vmem:[%s0 + $0x40] sm:$0xff]
    %v33 = vld [vmem:[%s0 + $0x48] sm:$0xff]
    %v34 = vld [vmem:[%s0 + $0x50] sm:$0xff]
    %v35 = vld [vmem:[%s0 + $0x58] sm:$0xff]
    %v36 = vld [vmem:[%s0 + $0x60] sm:$0xff]
    %v37 = vld [vmem:[%s0 + $0x68] sm:$0xff]
    %v38 = vld [vmem:[%s0 + $0x70] sm:$0xff]
    %v39 = vld [vmem:[%s0 + $0x78] sm:$0xff]
    %v40 = vld [vmem:[%s0 + $0x80] sm:$0xff]
    %v41 = vld [vmem:[%s0 + $0x88] sm:$0xff]
    %v42 = vld [vmem:[%s0 + $0x90] sm:$0xff]
    %v43 = vld [vmem:[%s0 + $0x98] sm:$0xff]
    %v44 = vld [vmem:[%s0 + $0xa0] sm:$0xff]
    %v45 = vld [vmem:[%s0 + $0xa8] sm:$0xff]
    %v46 = vld [vmem:[%s0 + $0xb0] sm:$0xff]
    %v47 = vld [vmem:[%s0 + $0xb8] sm:$0xff]
    %v48 = vld [vmem:[%s0 + $0xc0] sm:$0xff]
    %v49 = vld [vmem:[%s0 + $0xc8] sm:$0xff]
    %v50 = vld [vmem:[%s0 + $0xd0] sm:$0xff]
    %v51 = vld [vmem:[%s0 + $0xd8] sm:$0xff]
    %v52 = vld [vmem:[%s0 + $0xe0] sm:$0xff]
    %v53 = vld [vmem:[%s0 + $0xe8] sm:$0xff]
    %v54 = vld [vmem:[%s0 + $0xf0] sm:$0xff]
    %v55 = vld [vmem:[%s0 + $0xf8] sm:$0xff]
    %v56 = vld [vmem:[%s2] sm:$0xff]
    %v57 = vld [vmem:[%s2 + $0x8] sm:$0xff]
    %v58 = vld [vmem:[%s2 + $0x10] sm:$0xff]
    %v59 = vld [vmem:[%s2 + $0x18] sm:$0xff]
    %vm60 = vcmask 261120
    %v62 = vsel %vm60, %v24, 0
    %v65 = vsel %vm60, %v25, 0
    %v68 = vsel %vm60, %v26, 0
    %v71 = vsel %vm60, %v27, 0
    %v74 = vsel %vm60, %v28, 0
    %v77 = vsel %vm60, %v29, 0
    %v80 = vsel %vm60, %v30, 0
    %v83 = vsel %vm60, %v31, 0
    %v86 = vsel %vm60, %v32, 0
    %v89 = vsel %vm60, %v33, 0
    %v92 = vsel %vm60, %v34, 0
    %v95 = vsel %vm60, %v35, 0
    %v98 = vsel %vm60, %v36, 0
    %v101 = vsel %vm60, %v37, 0
    %v104 = vsel %vm60, %v38, 0
    %v107 = vsel %vm60, %v39, 0
    %v110 = vsel %vm60, %v40, 0
    %v113 = vsel %vm60, %v41, 0
    %v116 = vsel %vm60, %v42, 0
    %v119 = vsel %vm60, %v43, 0
    %v122 = vsel %vm60, %v44, 0
    %v125 = vsel %vm60, %v45, 0
    %v128 = vsel %vm60, %v46, 0
    %v131 = vsel %vm60, %v47, 0
    %v134 = vsel %vm60, %v48, 0
    %v137 = vsel %vm60, %v49, 0
    %v140 = vsel %vm60, %v50, 0
    %v143 = vsel %vm60, %v51, 0
    %v146 = vsel %vm60, %v52, 0
    %v149 = vsel %vm60, %v53, 0
    %v152 = vsel %vm60, %v54, 0
    %v155 = vsel %vm60, %v55, 0
    %157 = vmatprep.subr.mxu0 0.0
    %158 = vmatpush1.msra.mxu0 0.0
    %159 = vmatprep.subr.mxu0 0.0
    %160 = vmatpush1.msra.mxu0 0.0
    %161 = vmatprep.subr.mxu0 0.0
    %162 = vmatpush1.msra.mxu0 0.0
    %163 = vmatprep.subr.mxu0 0.0
    %164 = vmatpush1.msra.mxu0 0.0
    %165 = vmatprep.subr.mxu0 0.0
    %166 = vmatpush1.msra.mxu0 0.0
    %167 = vmatprep.subr.mxu0 0.0
    %168 = vmatpush1.msra.mxu0 0.0
    %169 = vmatprep.subr.mxu0 0.0
    %170 = vmatpush1.msra.mxu0 0.0
    %171 = vmatprep.subr.mxu0 0.0
    %172 = vmatpush1.msra.mxu0 0.0
    %173 = vmatprep.subr.mxu0 0.0
    %174 = vmatpush1.msra.mxu0 0.0
    %175 = vmatprep.subr.mxu0 0.0
    %176 = vmatpush1.msra.mxu0 0.0
    %177 = vmatprep.subr.mxu0 0.0
    %178 = vmatpush1.msra.mxu0 0.0
    %179 = vmatprep.subr.mxu0 0.0
    %180 = vmatpush1.msra.mxu0 0.0
    %181 = vmatprep.subr.mxu0 0.0
    %182 = vmatpush1.msra.mxu0 %v59
    %183 = vmatprep.subr.mxu0 0.0
    %184 = vmatpush1.msra.mxu0 %v58
    %185 = vmatprep.subr.mxu0 0.0
    %186 = vmatpush1.msra.mxu0 %v57
    %187 = vmatprep.subr.mxu0 0.0
    %188 = vmatpush1.msra.mxu0 %v56
    %189 = vmatprep.subr.mxu0 0.0
    %190 = vmatpush2.msra.mxu0 0.0
    %191 = vmatprep.subr.mxu0 0.0
    %192 = vmatpush2.msra.mxu0 0.0
    %193 = vmatprep.subr.mxu0 0.0
    %194 = vmatpush2.msra.mxu0 0.0
    %195 = vmatprep.subr.mxu0 0.0
    %196 = vmatpush2.msra.mxu0 0.0
    %197 = vmatprep.subr.mxu0 0.0
    %198 = vmatpush2.msra.mxu0 0.0
    %199 = vmatprep.subr.mxu0 0.0
    %200 = vmatpush2.msra.mxu0 0.0
    %201 = vmatprep.subr.mxu0 0.0
    %202 = vmatpush2.msra.mxu0 0.0
    %203 = vmatprep.subr.mxu0 0.0
    %204 = vmatpush2.msra.mxu0 0.0
    %205 = vmatprep.subr.mxu0 0.0
    %206 = vmatpush2.msra.mxu0 0.0
    %207 = vmatprep.subr.mxu0 0.0
    %208 = vmatpush2.msra.mxu0 0.0
    %209 = vmatprep.subr.mxu0 0.0
    %210 = vmatpush2.msra.mxu0 0.0
    %211 = vmatprep.subr.mxu0 0.0
    %212 = vmatpush2.msra.mxu0 0.0
    %213 = vmatprep.subr.mxu0 0.0
    %214 = vmatpush2.msra.mxu0 0.0
    %215 = vmatprep.subr.mxu0 0.0
    %216 = vmatpush2.msra.mxu0 0.0
    %217 = vmatprep.subr.mxu0 0.0
    %218 = vmatpush2.msra.mxu0 0.0
    %219 = vmatprep.subr.mxu0 0.0
    %220 = vmatpush2.msra.mxu0 0.0
    %221 = vmatprep.mubr.f32.mxu0 0.0
    %222 = vmatmul.mubr.f32.gmra.mxu0 %v62
    %v223 = vpop.f32.mrf.mxu0
    %v224 = vadd.f32 0.0, %v223
    %v225 = vpop.f32.mrf.mxu0
    %226 = vmatprep.mubr.f32.mxu0 0.0
    %227 = vmatmul.mubr.f32.gmra.mxu0 %v65
    %v228 = vpop.f32.mrf.mxu0
    %v229 = vadd.f32 0.0, %v228
    %v230 = vpop.f32.mrf.mxu0
    %231 = vmatprep.mubr.f32.mxu0 0.0
    %232 = vmatmul.mubr.f32.gmra.mxu0 %v68
    %v233 = vpop.f32.mrf.mxu0
    %v234 = vadd.f32 0.0, %v233
    %v235 = vpop.f32.mrf.mxu0
    %236 = vmatprep.mubr.f32.mxu0 0.0
    %237 = vmatmul.mubr.f32.gmra.mxu0 %v71
    %v238 = vpop.f32.mrf.mxu0
    %v239 = vadd.f32 0.0, %v238
    %v240 = vpop.f32.mrf.mxu0
    %241 = vmatprep.mubr.f32.mxu0 0.0
    %242 = vmatmul.mubr.f32.gmra.mxu0 %v74
    %v243 = vpop.f32.mrf.mxu0
    %v244 = vadd.f32 0.0, %v243
    %v245 = vpop.f32.mrf.mxu0
    %246 = vmatprep.mubr.f32.mxu0 0.0
    %247 = vmatmul.mubr.f32.gmra.mxu0 %v77
    %v248 = vpop.f32.mrf.mxu0
    %v249 = vadd.f32 0.0, %v248
    %v250 = vpop.f32.mrf.mxu0
    %251 = vmatprep.mubr.f32.mxu0 0.0
    %252 = vmatmul.mubr.f32.gmra.mxu0 %v80
    %v253 = vpop.f32.mrf.mxu0
    %v254 = vadd.f32 0.0, %v253
    %v255 = vpop.f32.mrf.mxu0
    %256 = vmatprep.mubr.f32.mxu0 0.0
    %257 = vmatmul.mubr.f32.gmra.mxu0 %v83
    %v258 = vpop.f32.mrf.mxu0
    %v259 = vadd.f32 0.0, %v258
    %v260 = vpop.f32.mrf.mxu0
    %261 = vmatprep.mubr.f32.mxu0 0.0
    %262 = vmatmul.mubr.f32.gmra.mxu0 %v86
    %v263 = vpop.f32.mrf.mxu0
    %v264 = vadd.f32 0.0, %v263
    %v265 = vpop.f32.mrf.mxu0
    %266 = vmatprep.mubr.f32.mxu0 0.0
    %267 = vmatmul.mubr.f32.gmra.mxu0 %v89
    %v268 = vpop.f32.mrf.mxu0
    %v269 = vadd.f32 0.0, %v268
    %v270 = vpop.f32.mrf.mxu0
    %271 = vmatprep.mubr.f32.mxu0 0.0
    %272 = vmatmul.mubr.f32.gmra.mxu0 %v92
    %v273 = vpop.f32.mrf.mxu0
    %v274 = vadd.f32 0.0, %v273
    %v275 = vpop.f32.mrf.mxu0
    %276 = vmatprep.mubr.f32.mxu0 0.0
    %277 = vmatmul.mubr.f32.gmra.mxu0 %v95
    %v278 = vpop.f32.mrf.mxu0
    %v279 = vadd.f32 0.0, %v278
    %v280 = vpop.f32.mrf.mxu0
    %281 = vmatprep.mubr.f32.mxu0 0.0
    %282 = vmatmul.mubr.f32.gmra.mxu0 %v98
    %v283 = vpop.f32.mrf.mxu0
    %v284 = vadd.f32 0.0, %v283
    %v285 = vpop.f32.mrf.mxu0
    %286 = vmatprep.mubr.f32.mxu0 0.0
    %287 = vmatmul.mubr.f32.gmra.mxu0 %v101
    %v288 = vpop.f32.mrf.mxu0
    %v289 = vadd.f32 0.0, %v288
    %v290 = vpop.f32.mrf.mxu0
    %291 = vmatprep.mubr.f32.mxu0 0.0
    %292 = vmatmul.mubr.f32.gmra.mxu0 %v104
    %v293 = vpop.f32.mrf.mxu0
    %v294 = vadd.f32 0.0, %v293
    %v295 = vpop.f32.mrf.mxu0
    %296 = vmatprep.mubr.f32.mxu0 0.0
    %297 = vmatmul.mubr.f32.gmra.mxu0 %v107
    %v298 = vpop.f32.mrf.mxu0
    %v299 = vadd.f32 0.0, %v298
    %v300 = vpop.f32.mrf.mxu0
    %301 = vmatprep.mubr.f32.mxu0 0.0
    %302 = vmatmul.mubr.f32.gmra.mxu0 %v110
    %v303 = vpop.f32.mrf.mxu0
    %v304 = vadd.f32 0.0, %v303
    %v305 = vpop.f32.mrf.mxu0
    %306 = vmatprep.mubr.f32.mxu0 0.0
    %307 = vmatmul.mubr.f32.gmra.mxu0 %v113
    %v308 = vpop.f32.mrf.mxu0
    %v309 = vadd.f32 0.0, %v308
    %v310 = vpop.f32.mrf.mxu0
    %311 = vmatprep.mubr.f32.mxu0 0.0
    %312 = vmatmul.mubr.f32.gmra.mxu0 %v116
    %v313 = vpop.f32.mrf.mxu0
    %v314 = vadd.f32 0.0, %v313
    %v315 = vpop.f32.mrf.mxu0
    %316 = vmatprep.mubr.f32.mxu0 0.0
    %317 = vmatmul.mubr.f32.gmra.mxu0 %v119
    %v318 = vpop.f32.mrf.mxu0
    %v319 = vadd.f32 0.0, %v318
    %v320 = vpop.f32.mrf.mxu0
    %321 = vmatprep.mubr.f32.mxu0 0.0
    %322 = vmatmul.mubr.f32.gmra.mxu0 %v122
    %v323 = vpop.f32.mrf.mxu0
    %v324 = vadd.f32 0.0, %v323
    %v325 = vpop.f32.mrf.mxu0
    %326 = vmatprep.mubr.f32.mxu0 0.0
    %327 = vmatmul.mubr.f32.gmra.mxu0 %v125
    %v328 = vpop.f32.mrf.mxu0
    %v329 = vadd.f32 0.0, %v328
    %v330 = vpop.f32.mrf.mxu0
    %331 = vmatprep.mubr.f32.mxu0 0.0
    %332 = vmatmul.mubr.f32.gmra.mxu0 %v128
    %v333 = vpop.f32.mrf.mxu0
    %v334 = vadd.f32 0.0, %v333
    %v335 = vpop.f32.mrf.mxu0
    %336 = vmatprep.mubr.f32.mxu0 0.0
    %337 = vmatmul.mubr.f32.gmra.mxu0 %v131
    %v338 = vpop.f32.mrf.mxu0
    %v339 = vadd.f32 0.0, %v338
    %v340 = vpop.f32.mrf.mxu0
    %341 = vmatprep.mubr.f32.mxu0 0.0
    %342 = vmatmul.mubr.f32.gmra.mxu0 %v134
    %v343 = vpop.f32.mrf.mxu0
    %v344 = vadd.f32 0.0, %v343
    %v345 = vpop.f32.mrf.mxu0
    %346 = vmatprep.mubr.f32.mxu0 0.0
    %347 = vmatmul.mubr.f32.gmra.mxu0 %v137
    %v348 = vpop.f32.mrf.mxu0
    %v349 = vadd.f32 0.0, %v348
    %v350 = vpop.f32.mrf.mxu0
    %351 = vmatprep.mubr.f32.mxu0 0.0
    %352 = vmatmul.mubr.f32.gmra.mxu0 %v140
    %v353 = vpop.f32.mrf.mxu0
    %v354 = vadd.f32 0.0, %v353
    %v355 = vpop.f32.mrf.mxu0
    %356 = vmatprep.mubr.f32.mxu0 0.0
    %357 = vmatmul.mubr.f32.gmra.mxu0 %v143
    %v358 = vpop.f32.mrf.mxu0
    %v359 = vadd.f32 0.0, %v358
    %v360 = vpop.f32.mrf.mxu0
    %361 = vmatprep.mubr.f32.mxu0 0.0
    %362 = vmatmul.mubr.f32.gmra.mxu0 %v146
    %v363 = vpop.f32.mrf.mxu0
    %v364 = vadd.f32 0.0, %v363
    %v365 = vpop.f32.mrf.mxu0
    %366 = vmatprep.mubr.f32.mxu0 0.0
    %367 = vmatmul.mubr.f32.gmra.mxu0 %v149
    %v368 = vpop.f32.mrf.mxu0
    %v369 = vadd.f32 0.0, %v368
    %v370 = vpop.f32.mrf.mxu0
    %371 = vmatprep.mubr.f32.mxu0 0.0
    %372 = vmatmul.mubr.f32.gmra.mxu0 %v152
    %v373 = vpop.f32.mrf.mxu0
    %v374 = vadd.f32 0.0, %v373
    %v375 = vpop.f32.mrf.mxu0
    %376 = vmatprep.mubr.f32.mxu0 0.0
    %377 = vmatmul.mubr.f32.gmra.mxu0 %v155
    %v378 = vpop.f32.mrf.mxu0
    %v379 = vadd.f32 0.0, %v378
    %v380 = vpop.f32.mrf.mxu0
    %381 = vdwg.mxu0
    %p382 = scmp.eq.s32.totalorder 0, 0
    // Predicated region
    $region22: #{tpu_custom_call.1} parent=1 // pred_check
      %p383 = pneg %p382
    $region23: #{tpu_custom_call.1} parent=1 // pred_check_branch
      %385 = sbr.rel (%p383) target = $region25
    $region24: #{tpu_custom_call.1} parent=1 // pred_region
      %vm386 = vcmask 254976
      %387 = vst.msk [vmem:[#allocation2] sm:$0x3] %vm386, 0.0
    $region25: #{tpu_custom_call.1} parent=1 // pred_fallthru
      _
    %v388 = vld [vmem:[#allocation2] sm:$0x1]
    %v389 = vsel %vm60, %v224, 0.0
    %v390 = vsel %vm60, %v229, 0.0
    %v391 = vadd.f32 %v389, %v390
    %v392 = vsel %vm60, %v234, 0.0
    %v393 = vadd.f32 %v391, %v392
    %v394 = vsel %vm60, %v239, 0.0
    %v395 = vadd.f32 %v393, %v394
    %v396 = vsel %vm60, %v244, 0.0
    %v397 = vadd.f32 %v395, %v396
    %v398 = vsel %vm60, %v249, 0.0
    %v399 = vadd.f32 %v397, %v398
    %v400 = vsel %vm60, %v254, 0.0
    %v401 = vadd.f32 %v399, %v400
    %v402 = vsel %vm60, %v259, 0.0
    %v403 = vadd.f32 %v401, %v402
    %v404 = vsel %vm60, %v264, 0.0
    %v405 = vadd.f32 %v403, %v404
    %v406 = vsel %vm60, %v269, 0.0
    %v407 = vadd.f32 %v405, %v406
    %v408 = vsel %vm60, %v274, 0.0
    %v409 = vadd.f32 %v407, %v408
    %v410 = vsel %vm60, %v279, 0.0
    %v411 = vadd.f32 %v409, %v410
    %v412 = vsel %vm60, %v284, 0.0
    %v413 = vadd.f32 %v411, %v412
    %v414 = vsel %vm60, %v289, 0.0
    %v415 = vadd.f32 %v413, %v414
    %v416 = vsel %vm60, %v294, 0.0
    %v417 = vadd.f32 %v415, %v416
    %v418 = vsel %vm60, %v299, 0.0
    %v419 = vadd.f32 %v417, %v418
    %v420 = vsel %vm60, %v304, 0.0
    %v421 = vadd.f32 %v419, %v420
    %v422 = vsel %vm60, %v309, 0.0
    %v423 = vadd.f32 %v421, %v422
    %v424 = vsel %vm60, %v314, 0.0
    %v425 = vadd.f32 %v423, %v424
    %v426 = vsel %vm60, %v319, 0.0
    %v427 = vadd.f32 %v425, %v426
    %v428 = vsel %vm60, %v324, 0.0
    %v429 = vadd.f32 %v427, %v428
    %v430 = vsel %vm60, %v329, 0.0
    %v431 = vadd.f32 %v429, %v430
    %v432 = vsel %vm60, %v334, 0.0
    %v433 = vadd.f32 %v431, %v432
    %v434 = vsel %vm60, %v339, 0.0
    %v435 = vadd.f32 %v433, %v434
    %v436 = vsel %vm60, %v344, 0.0
    %v437 = vadd.f32 %v435, %v436
    %v438 = vsel %vm60, %v349, 0.0
    %v439 = vadd.f32 %v437, %v438
    %v440 = vsel %vm60, %v354, 0.0
    %v441 = vadd.f32 %v439, %v440
    %v442 = vsel %vm60, %v359, 0.0
    %v443 = vadd.f32 %v441, %v442
    %v444 = vsel %vm60, %v364, 0.0
    %v445 = vadd.f32 %v443, %v444
    %v446 = vsel %vm60, %v369, 0.0
    %v447 = vadd.f32 %v445, %v446
    %v448 = vsel %vm60, %v374, 0.0
    %v449 = vadd.f32 %v447, %v448
    %v450 = vsel %vm60, %v379, 0.0
    %v451 = vadd.f32 %v449, %v450
    %v452 = vrot.slane %v451, 4
    %v453 = vadd.f32 %v451, %v452
    %v454 = vrot.slane %v453, 2
    %v455 = vadd.f32 %v453, %v454
    %v456 = vrot.slane %v455, 1
    %v457 = vadd.f32 %v455, %v456
    %v458 = vadd.f32 %v388, %v457
    %vm459 = vcmask 253952
    %460 = vst.msk [vmem:[#allocation2] sm:$0x1] %vm459, %v458
    %v461 = vld [vmem:[#allocation2 + $0x1] sm:$0x1]
    %v462 = vmul.f32 %v224, %v224
    %v463 = vmul.f32 %v229, %v229
    %v464 = vmul.f32 %v234, %v234
    %v465 = vmul.f32 %v239, %v239
    %v466 = vmul.f32 %v244, %v244
    %v467 = vmul.f32 %v249, %v249
    %v468 = vmul.f32 %v254, %v254
    %v469 = vmul.f32 %v259, %v259
    %v470 = vmul.f32 %v264, %v264
    %v471 = vmul.f32 %v269, %v269
    %v472 = vmul.f32 %v274, %v274
    %v473 = vmul.f32 %v279, %v279
    %v474 = vmul.f32 %v284, %v284
    %v475 = vmul.f32 %v289, %v289
    %v476 = vmul.f32 %v294, %v294
    %v477 = vmul.f32 %v299, %v299
    %v478 = vmul.f32 %v304, %v304
    %v479 = vmul.f32 %v309, %v309
    %v480 = vmul.f32 %v314, %v314
    %v481 = vmul.f32 %v319, %v319
    %v482 = vmul.f32 %v324, %v324
    %v483 = vmul.f32 %v329, %v329
    %v484 = vmul.f32 %v334, %v334
    %v485 = vmul.f32 %v339, %v339
    %v486 = vmul.f32 %v344, %v344
    %v487 = vmul.f32 %v349, %v349
    %v488 = vmul.f32 %v354, %v354
    %v489 = vmul.f32 %v359, %v359
    %v490 = vmul.f32 %v364, %v364
    %v491 = vmul.f32 %v369, %v369
    %v492 = vmul.f32 %v374, %v374
    %v493 = vmul.f32 %v379, %v379
    %v494 = vsel %vm60, %v462, 0.0
    %v495 = vsel %vm60, %v463, 0.0
    %v496 = vadd.f32 %v494, %v495
    %v497 = vsel %vm60, %v464, 0.0
    %v498 = vadd.f32 %v496, %v497
    %v499 = vsel %vm60, %v465, 0.0
    %v500 = vadd.f32 %v498, %v499
    %v501 = vsel %vm60, %v466, 0.0
    %v502 = vadd.f32 %v500, %v501
    %v503 = vsel %vm60, %v467, 0.0
    %v504 = vadd.f32 %v502, %v503
    %v505 = vsel %vm60, %v468, 0.0
    %v506 = vadd.f32 %v504, %v505
    %v507 = vsel %vm60, %v469, 0.0
    %v508 = vadd.f32 %v506, %v507
    %v509 = vsel %vm60, %v470, 0.0
    %v510 = vadd.f32 %v508, %v509
    %v511 = vsel %vm60, %v471, 0.0
    %v512 = vadd.f32 %v510, %v511
    %v513 = vsel %vm60, %v472, 0.0
    %v514 = vadd.f32 %v512, %v513
    %v515 = vsel %vm60, %v473, 0.0
    %v516 = vadd.f32 %v514, %v515
    %v517 = vsel %vm60, %v474, 0.0
    %v518 = vadd.f32 %v516, %v517
    %v519 = vsel %vm60, %v475, 0.0
    %v520 = vadd.f32 %v518, %v519
    %v521 = vsel %vm60, %v476, 0.0
    %v522 = vadd.f32 %v520, %v521
    %v523 = vsel %vm60, %v477, 0.0
    %v524 = vadd.f32 %v522, %v523
    %v525 = vsel %vm60, %v478, 0.0
    %v526 = vadd.f32 %v524, %v525
    %v527 = vsel %vm60, %v479, 0.0
    %v528 = vadd.f32 %v526, %v527
    %v529 = vsel %vm60, %v480, 0.0
    %v530 = vadd.f32 %v528, %v529
    %v531 = vsel %vm60, %v481, 0.0
    %v532 = vadd.f32 %v530, %v531
    %v533 = vsel %vm60, %v482, 0.0
    %v534 = vadd.f32 %v532, %v533
    %v535 = vsel %vm60, %v483, 0.0
    %v536 = vadd.f32 %v534, %v535
    %v537 = vsel %vm60, %v484, 0.0
    %v538 = vadd.f32 %v536, %v537
    %v539 = vsel %vm60, %v485, 0.0
    %v540 = vadd.f32 %v538, %v539
    %v541 = vsel %vm60, %v486, 0.0
    %v542 = vadd.f32 %v540, %v541
    %v543 = vsel %vm60, %v487, 0.0
    %v544 = vadd.f32 %v542, %v543
    %v545 = vsel %vm60, %v488, 0.0
    %v546 = vadd.f32 %v544, %v545
    %v547 = vsel %vm60, %v489, 0.0
    %v548 = vadd.f32 %v546, %v547
    %v549 = vsel %vm60, %v490, 0.0
    %v550 = vadd.f32 %v548, %v549
    %v551 = vsel %vm60, %v491, 0.0
    %v552 = vadd.f32 %v550, %v551
    %v553 = vsel %vm60, %v492, 0.0
    %v554 = vadd.f32 %v552, %v553
    %v555 = vsel %vm60, %v493, 0.0
    %v556 = vadd.f32 %v554, %v555
    %v557 = vrot.slane %v556, 4
    %v558 = vadd.f32 %v556, %v557
    %v559 = vrot.slane %v558, 2
    %v560 = vadd.f32 %v558, %v559
    %v561 = vrot.slane %v560, 1
    %v562 = vadd.f32 %v560, %v561
    %v563 = vadd.f32 %v461, %v562
    %564 = vst.msk [vmem:[#allocation2 + $0x1] sm:$0x1] %vm459, %v563
    %v565 = vld [vmem:[%s1] sm:$0xff]
    %v566 = vld [vmem:[%s1 + $0x8] sm:$0xff]
    %v567 = vld [vmem:[%s1 + $0x10] sm:$0xff]
    %v568 = vld [vmem:[%s1 + $0x18] sm:$0xff]
    %v569 = vld [vmem:[%s1 + $0x20] sm:$0xff]
    %v570 = vld [vmem:[%s1 + $0x28] sm:$0xff]
    %v571 = vld [vmem:[%s1 + $0x30] sm:$0xff]
    %v572 = vld [vmem:[%s1 + $0x38] sm:$0xff]
    %v573 = vld [vmem:[%s1 + $0x40] sm:$0xff]
    %v574 = vld [vmem:[%s1 + $0x48] sm:$0xff]
    %v575 = vld [vmem:[%s1 + $0x50] sm:$0xff]
    %v576 = vld [vmem:[%s1 + $0x58] sm:$0xff]
    %v577 = vld [vmem:[%s1 + $0x60] sm:$0xff]
    %v578 = vld [vmem:[%s1 + $0x68] sm:$0xff]
    %v579 = vld [vmem:[%s1 + $0x70] sm:$0xff]
    %v580 = vld [vmem:[%s1 + $0x78] sm:$0xff]
    %v581 = vld [vmem:[%s1 + $0x80] sm:$0xff]
    %v582 = vld [vmem:[%s1 + $0x88] sm:$0xff]
    %v583 = vld [vmem:[%s1 + $0x90] sm:$0xff]
    %v584 = vld [vmem:[%s1 + $0x98] sm:$0xff]
    %v585 = vld [vmem:[%s1 + $0xa0] sm:$0xff]
    %v586 = vld [vmem:[%s1 + $0xa8] sm:$0xff]
    %v587 = vld [vmem:[%s1 + $0xb0] sm:$0xff]
    %v588 = vld [vmem:[%s1 + $0xb8] sm:$0xff]
    %v589 = vld [vmem:[%s1 + $0xc0] sm:$0xff]
    %v590 = vld [vmem:[%s1 + $0xc8] sm:$0xff]
    %v591 = vld [vmem:[%s1 + $0xd0] sm:$0xff]
    %v592 = vld [vmem:[%s1 + $0xd8] sm:$0xff]
    %v593 = vld [vmem:[%s1 + $0xe0] sm:$0xff]
    %v594 = vld [vmem:[%s1 + $0xe8] sm:$0xff]
    %v595 = vld [vmem:[%s1 + $0xf0] sm:$0xff]
    %v596 = vld [vmem:[%s1 + $0xf8] sm:$0xff]
    %v597 = vld [vmem:[%s1 + $0x100] sm:$0xff]
    %v598 = vld [vmem:[%s1 + $0x108] sm:$0xff]
    %v599 = vld [vmem:[%s1 + $0x110] sm:$0xff]
    %v600 = vld [vmem:[%s1 + $0x118] sm:$0xff]
    %v601 = vld [vmem:[%s1 + $0x120] sm:$0xff]
    %v602 = vld [vmem:[%s1 + $0x128] sm:$0xff]
    %v603 = vld [vmem:[%s1 + $0x130] sm:$0xff]
    %v604 = vld [vmem:[%s1 + $0x138] sm:$0xff]
    %v605 = vld [vmem:[%s1 + $0x140] sm:$0xff]
    %v606 = vld [vmem:[%s1 + $0x148] sm:$0xff]
    %v607 = vld [vmem:[%s1 + $0x150] sm:$0xff]
    %v608 = vld [vmem:[%s1 + $0x158] sm:$0xff]
    %v609 = vld [vmem:[%s1 + $0x160] sm:$0xff]
    %v610 = vld [vmem:[%s1 + $0x168] sm:$0xff]
    %v611 = vld [vmem:[%s1 + $0x170] sm:$0xff]
    %v612 = vld [vmem:[%s1 + $0x178] sm:$0xff]
    %v613 = vld [vmem:[%s1 + $0x180] sm:$0xff]
    %v614 = vld [vmem:[%s1 + $0x188] sm:$0xff]
    %v615 = vld [vmem:[%s1 + $0x190] sm:$0xff]
    %v616 = vld [vmem:[%s1 + $0x198] sm:$0xff]
    %v617 = vld [vmem:[%s1 + $0x1a0] sm:$0xff]
    %v618 = vld [vmem:[%s1 + $0x1a8] sm:$0xff]
    %v619 = vld [vmem:[%s1 + $0x1b0] sm:$0xff]
    %v620 = vld [vmem:[%s1 + $0x1b8] sm:$0xff]
    %v621 = vld [vmem:[%s1 + $0x1c0] sm:$0xff]
    %v622 = vld [vmem:[%s1 + $0x1c8] sm:$0xff]
    %v623 = vld [vmem:[%s1 + $0x1d0] sm:$0xff]
    %v624 = vld [vmem:[%s1 + $0x1d8] sm:$0xff]
    %v625 = vld [vmem:[%s1 + $0x1e0] sm:$0xff]
    %v626 = vld [vmem:[%s1 + $0x1e8] sm:$0xff]
    %v627 = vld [vmem:[%s1 + $0x1f0] sm:$0xff]
    %v628 = vld [vmem:[%s1 + $0x1f8] sm:$0xff]
    %v629 = vld [vmem:[%s1 + $0x200] sm:$0xff]
    %v630 = vld [vmem:[%s1 + $0x208] sm:$0xff]
    %v631 = vld [vmem:[%s1 + $0x210] sm:$0xff]
    %v632 = vld [vmem:[%s1 + $0x218] sm:$0xff]
    %v633 = vld [vmem:[%s1 + $0x220] sm:$0xff]
    %v634 = vld [vmem:[%s1 + $0x228] sm:$0xff]
    %v635 = vld [vmem:[%s1 + $0x230] sm:$0xff]
    %v636 = vld [vmem:[%s1 + $0x238] sm:$0xff]
    %v637 = vld [vmem:[%s1 + $0x240] sm:$0xff]
    %v638 = vld [vmem:[%s1 + $0x248] sm:$0xff]
    %v639 = vld [vmem:[%s1 + $0x250] sm:$0xff]
    %v640 = vld [vmem:[%s1 + $0x258] sm:$0xff]
    %v641 = vld [vmem:[%s1 + $0x260] sm:$0xff]
    %v642 = vld [vmem:[%s1 + $0x268] sm:$0xff]
    %v643 = vld [vmem:[%s1 + $0x270] sm:$0xff]
    %v644 = vld [vmem:[%s1 + $0x278] sm:$0xff]
    %v645 = vld [vmem:[%s1 + $0x280] sm:$0xff]
    %v646 = vld [vmem:[%s1 + $0x288] sm:$0xff]
    %v647 = vld [vmem:[%s1 + $0x290] sm:$0xff]
    %v648 = vld [vmem:[%s1 + $0x298] sm:$0xff]
    %v649 = vld [vmem:[%s1 + $0x2a0] sm:$0xff]
    %v650 = vld [vmem:[%s1 + $0x2a8] sm:$0xff]
    %v651 = vld [vmem:[%s1 + $0x2b0] sm:$0xff]
    %v652 = vld [vmem:[%s1 + $0x2b8] sm:$0xff]
    %v653 = vld [vmem:[%s1 + $0x2c0] sm:$0xff]
    %v654 = vld [vmem:[%s1 + $0x2c8] sm:$0xff]
    %v655 = vld [vmem:[%s1 + $0x2d0] sm:$0xff]
    %v656 = vld [vmem:[%s1 + $0x2d8] sm:$0xff]
    %v657 = vld [vmem:[%s1 + $0x2e0] sm:$0xff]
    %v658 = vld [vmem:[%s1 + $0x2e8] sm:$0xff]
    %v659 = vld [vmem:[%s1 + $0x2f0] sm:$0xff]
    %v660 = vld [vmem:[%s1 + $0x2f8] sm:$0xff]
    %v661 = vld [vmem:[%s1 + $0x300] sm:$0xff]
    %v662 = vld [vmem:[%s1 + $0x308] sm:$0xff]
    %v663 = vld [vmem:[%s1 + $0x310] sm:$0xff]
    %v664 = vld [vmem:[%s1 + $0x318] sm:$0xff]
    %v665 = vld [vmem:[%s1 + $0x320] sm:$0xff]
    %v666 = vld [vmem:[%s1 + $0x328] sm:$0xff]
    %v667 = vld [vmem:[%s1 + $0x330] sm:$0xff]
    %v668 = vld [vmem:[%s1 + $0x338] sm:$0xff]
    %v669 = vld [vmem:[%s1 + $0x340] sm:$0xff]
    %v670 = vld [vmem:[%s1 + $0x348] sm:$0xff]
    %v671 = vld [vmem:[%s1 + $0x350] sm:$0xff]
    %v672 = vld [vmem:[%s1 + $0x358] sm:$0xff]
    %v673 = vld [vmem:[%s1 + $0x360] sm:$0xff]
    %v674 = vld [vmem:[%s1 + $0x368] sm:$0xff]
    %v675 = vld [vmem:[%s1 + $0x370] sm:$0xff]
    %v676 = vld [vmem:[%s1 + $0x378] sm:$0xff]
    %v677 = vld [vmem:[%s1 + $0x380] sm:$0xff]
    %v678 = vld [vmem:[%s1 + $0x388] sm:$0xff]
    %v679 = vld [vmem:[%s1 + $0x390] sm:$0xff]
    %v680 = vld [vmem:[%s1 + $0x398] sm:$0xff]
    %v681 = vld [vmem:[%s1 + $0x3a0] sm:$0xff]
    %v682 = vld [vmem:[%s1 + $0x3a8] sm:$0xff]
    %v683 = vld [vmem:[%s1 + $0x3b0] sm:$0xff]
    %v684 = vld [vmem:[%s1 + $0x3b8] sm:$0xff]
    %v685 = vld [vmem:[%s1 + $0x3c0] sm:$0xff]
    %v686 = vld [vmem:[%s1 + $0x3c8] sm:$0xff]
    %v687 = vld [vmem:[%s1 + $0x3d0] sm:$0xff]
    %v688 = vld [vmem:[%s1 + $0x3d8] sm:$0xff]
    %v689 = vld [vmem:[%s1 + $0x3e0] sm:$0xff]
    %v690 = vld [vmem:[%s1 + $0x3e8] sm:$0xff]
    %v691 = vld [vmem:[%s1 + $0x3f0] sm:$0xff]
    %v692 = vld [vmem:[%s1 + $0x3f8] sm:$0xff]
    %v693 = vld [vmem:[%s1 + $0x400] sm:$0xff]
    %v694 = vld [vmem:[%s1 + $0x408] sm:$0xff]
    %v695 = vld [vmem:[%s1 + $0x410] sm:$0xff]
    %v696 = vld [vmem:[%s1 + $0x418] sm:$0xff]
    %v697 = vld [vmem:[%s1 + $0x420] sm:$0xff]
    %v698 = vld [vmem:[%s1 + $0x428] sm:$0xff]
    %v699 = vld [vmem:[%s1 + $0x430] sm:$0xff]
    %v700 = vld [vmem:[%s1 + $0x438] sm:$0xff]
    %v701 = vld [vmem:[%s1 + $0x440] sm:$0xff]
    %v702 = vld [vmem:[%s1 + $0x448] sm:$0xff]
    %v703 = vld [vmem:[%s1 + $0x450] sm:$0xff]
    %v704 = vld [vmem:[%s1 + $0x458] sm:$0xff]
    %v705 = vld [vmem:[%s1 + $0x460] sm:$0xff]
    %v706 = vld [vmem:[%s1 + $0x468] sm:$0xff]
    %v707 = vld [vmem:[%s1 + $0x470] sm:$0xff]
    %v708 = vld [vmem:[%s1 + $0x478] sm:$0xff]
    %v709 = vld [vmem:[%s1 + $0x480] sm:$0xff]
    %v710 = vld [vmem:[%s1 + $0x488] sm:$0xff]
    %v711 = vld [vmem:[%s1 + $0x490] sm:$0xff]
    %v712 = vld [vmem:[%s1 + $0x498] sm:$0xff]
    %v713 = vld [vmem:[%s1 + $0x4a0] sm:$0xff]
    %v714 = vld [vmem:[%s1 + $0x4a8] sm:$0xff]
    %v715 = vld [vmem:[%s1 + $0x4b0] sm:$0xff]
    %v716 = vld [vmem:[%s1 + $0x4b8] sm:$0xff]
    %v717 = vld [vmem:[%s1 + $0x4c0] sm:$0xff]
    %v718 = vld [vmem:[%s1 + $0x4c8] sm:$0xff]
    %v719 = vld [vmem:[%s1 + $0x4d0] sm:$0xff]
    %v720 = vld [vmem:[%s1 + $0x4d8] sm:$0xff]
    %v721 = vld [vmem:[%s1 + $0x4e0] sm:$0xff]
    %v722 = vld [vmem:[%s1 + $0x4e8] sm:$0xff]
    %v723 = vld [vmem:[%s1 + $0x4f0] sm:$0xff]
    %v724 = vld [vmem:[%s1 + $0x4f8] sm:$0xff]
    %v725 = vld [vmem:[%s1 + $0x500] sm:$0xff]
    %v726 = vld [vmem:[%s1 + $0x508] sm:$0xff]
    %v727 = vld [vmem:[%s1 + $0x510] sm:$0xff]
    %v728 = vld [vmem:[%s1 + $0x518] sm:$0xff]
    %v729 = vld [vmem:[%s1 + $0x520] sm:$0xff]
    %v730 = vld [vmem:[%s1 + $0x528] sm:$0xff]
    %v731 = vld [vmem:[%s1 + $0x530] sm:$0xff]
    %v732 = vld [vmem:[%s1 + $0x538] sm:$0xff]
    %v733 = vld [vmem:[%s1 + $0x540] sm:$0xff]
    %v734 = vld [vmem:[%s1 + $0x548] sm:$0xff]
    %v735 = vld [vmem:[%s1 + $0x550] sm:$0xff]
    %v736 = vld [vmem:[%s1 + $0x558] sm:$0xff]
    %v737 = vld [vmem:[%s1 + $0x560] sm:$0xff]
    %v738 = vld [vmem:[%s1 + $0x568] sm:$0xff]
    %v739 = vld [vmem:[%s1 + $0x570] sm:$0xff]
    %v740 = vld [vmem:[%s1 + $0x578] sm:$0xff]
    %v741 = vld [vmem:[%s1 + $0x580] sm:$0xff]
    %v742 = vld [vmem:[%s1 + $0x588] sm:$0xff]
    %v743 = vld [vmem:[%s1 + $0x590] sm:$0xff]
    %v744 = vld [vmem:[%s1 + $0x598] sm:$0xff]
    %v745 = vld [vmem:[%s1 + $0x5a0] sm:$0xff]
    %v746 = vld [vmem:[%s1 + $0x5a8] sm:$0xff]
    %v747 = vld [vmem:[%s1 + $0x5b0] sm:$0xff]
    %v748 = vld [vmem:[%s1 + $0x5b8] sm:$0xff]
    %v749 = vld [vmem:[%s1 + $0x5c0] sm:$0xff]
    %v750 = vld [vmem:[%s1 + $0x5c8] sm:$0xff]
    %v751 = vld [vmem:[%s1 + $0x5d0] sm:$0xff]
    %v752 = vld [vmem:[%s1 + $0x5d8] sm:$0xff]
    %v753 = vld [vmem:[%s1 + $0x5e0] sm:$0xff]
    %v754 = vld [vmem:[%s1 + $0x5e8] sm:$0xff]
    %v755 = vld [vmem:[%s1 + $0x5f0] sm:$0xff]
    %v756 = vld [vmem:[%s1 + $0x5f8] sm:$0xff]
    %v757 = vld [vmem:[%s1 + $0x600] sm:$0xff]
    %v758 = vld [vmem:[%s1 + $0x608] sm:$0xff]
    %v759 = vld [vmem:[%s1 + $0x610] sm:$0xff]
    %v760 = vld [vmem:[%s1 + $0x618] sm:$0xff]
    %v761 = vld [vmem:[%s1 + $0x620] sm:$0xff]
    %v762 = vld [vmem:[%s1 + $0x628] sm:$0xff]
    %v763 = vld [vmem:[%s1 + $0x630] sm:$0xff]
    %v764 = vld [vmem:[%s1 + $0x638] sm:$0xff]
    %v765 = vld [vmem:[%s1 + $0x640] sm:$0xff]
    %v766 = vld [vmem:[%s1 + $0x648] sm:$0xff]
    %v767 = vld [vmem:[%s1 + $0x650] sm:$0xff]
    %v768 = vld [vmem:[%s1 + $0x658] sm:$0xff]
    %v769 = vld [vmem:[%s1 + $0x660] sm:$0xff]
    %v770 = vld [vmem:[%s1 + $0x668] sm:$0xff]
    %v771 = vld [vmem:[%s1 + $0x670] sm:$0xff]
    %v772 = vld [vmem:[%s1 + $0x678] sm:$0xff]
    %v773 = vld [vmem:[%s1 + $0x680] sm:$0xff]
    %v774 = vld [vmem:[%s1 + $0x688] sm:$0xff]
    %v775 = vld [vmem:[%s1 + $0x690] sm:$0xff]
    %v776 = vld [vmem:[%s1 + $0x698] sm:$0xff]
    %v777 = vld [vmem:[%s1 + $0x6a0] sm:$0xff]
    %v778 = vld [vmem:[%s1 + $0x6a8] sm:$0xff]
    %v779 = vld [vmem:[%s1 + $0x6b0] sm:$0xff]
    %v780 = vld [vmem:[%s1 + $0x6b8] sm:$0xff]
    %v781 = vld [vmem:[%s1 + $0x6c0] sm:$0xff]
    %v782 = vld [vmem:[%s1 + $0x6c8] sm:$0xff]
    %v783 = vld [vmem:[%s1 + $0x6d0] sm:$0xff]
    %v784 = vld [vmem:[%s1 + $0x6d8] sm:$0xff]
    %v785 = vld [vmem:[%s1 + $0x6e0] sm:$0xff]
    %v786 = vld [vmem:[%s1 + $0x6e8] sm:$0xff]
    %v787 = vld [vmem:[%s1 + $0x6f0] sm:$0xff]
    %v788 = vld [vmem:[%s1 + $0x6f8] sm:$0xff]
    %v789 = vld [vmem:[%s1 + $0x700] sm:$0xff]
    %v790 = vld [vmem:[%s1 + $0x708] sm:$0xff]
    %v791 = vld [vmem:[%s1 + $0x710] sm:$0xff]
    %v792 = vld [vmem:[%s1 + $0x718] sm:$0xff]
    %v793 = vld [vmem:[%s1 + $0x720] sm:$0xff]
    %v794 = vld [vmem:[%s1 + $0x728] sm:$0xff]
    %v795 = vld [vmem:[%s1 + $0x730] sm:$0xff]
    %v796 = vld [vmem:[%s1 + $0x738] sm:$0xff]
    %v797 = vld [vmem:[%s1 + $0x740] sm:$0xff]
    %v798 = vld [vmem:[%s1 + $0x748] sm:$0xff]
    %v799 = vld [vmem:[%s1 + $0x750] sm:$0xff]
    %v800 = vld [vmem:[%s1 + $0x758] sm:$0xff]
    %v801 = vld [vmem:[%s1 + $0x760] sm:$0xff]
    %v802 = vld [vmem:[%s1 + $0x768] sm:$0xff]
    %v803 = vld [vmem:[%s1 + $0x770] sm:$0xff]
    %v804 = vld [vmem:[%s1 + $0x778] sm:$0xff]
    %v805 = vld [vmem:[%s1 + $0x780] sm:$0xff]
    %v806 = vld [vmem:[%s1 + $0x788] sm:$0xff]
    %v807 = vld [vmem:[%s1 + $0x790] sm:$0xff]
    %v808 = vld [vmem:[%s1 + $0x798] sm:$0xff]
    %v809 = vld [vmem:[%s1 + $0x7a0] sm:$0xff]
    %v810 = vld [vmem:[%s1 + $0x7a8] sm:$0xff]
    %v811 = vld [vmem:[%s1 + $0x7b0] sm:$0xff]
    %v812 = vld [vmem:[%s1 + $0x7b8] sm:$0xff]
    %v813 = vld [vmem:[%s1 + $0x7c0] sm:$0xff]
    %v814 = vld [vmem:[%s1 + $0x7c8] sm:$0xff]
    %v815 = vld [vmem:[%s1 + $0x7d0] sm:$0xff]
    %v816 = vld [vmem:[%s1 + $0x7d8] sm:$0xff]
    %v817 = vld [vmem:[%s1 + $0x7e0] sm:$0xff]
    %v818 = vld [vmem:[%s1 + $0x7e8] sm:$0xff]
    %v819 = vld [vmem:[%s1 + $0x7f0] sm:$0xff]
    %v820 = vld [vmem:[%s1 + $0x7f8] sm:$0xff]
    %v821 = vld [vmem:[%s3] sm:$0x7]
    %v822 = vld [vmem:[%s4] sm:$0x1]
    %824 = vset.pattern.permute.xlu0 0
    %825 = vperm.xlu0 %824, %v565
    %v826 = vpop.permute.xlu0 %825
    %829 = vset.pattern.permute.xlu0 0
    %830 = vperm.xlu0 %829, %v566
    %v831 = vpop.permute.xlu0 %830
    %834 = vset.pattern.permute.xlu0 0
    %835 = vperm.xlu0 %834, %v567
    %v836 = vpop.permute.xlu0 %835
    %839 = vset.pattern.permute.xlu0 0
    %840 = vperm.xlu0 %839, %v568
    %v841 = vpop.permute.xlu0 %840
    %844 = vset.pattern.permute.xlu0 0
    %845 = vperm.xlu0 %844, %v569
    %v846 = vpop.permute.xlu0 %845
    %849 = vset.pattern.permute.xlu0 0
    %850 = vperm.xlu0 %849, %v570
    %v851 = vpop.permute.xlu0 %850
    %854 = vset.pattern.permute.xlu0 0
    %855 = vperm.xlu0 %854, %v571
    %v856 = vpop.permute.xlu0 %855
    %859 = vset.pattern.permute.xlu0 0
    %860 = vperm.xlu0 %859, %v572
    %v861 = vpop.permute.xlu0 %860
    %864 = vset.pattern.permute.xlu0 0
    %865 = vperm.xlu0 %864, %v573
    %v866 = vpop.permute.xlu0 %865
    %869 = vset.pattern.permute.xlu0 0
    %870 = vperm.xlu0 %869, %v574
    %v871 = vpop.permute.xlu0 %870
    %874 = vset.pattern.permute.xlu0 0
    %875 = vperm.xlu0 %874, %v575
    %v876 = vpop.permute.xlu0 %875
    %879 = vset.pattern.permute.xlu0 0
    %880 = vperm.xlu0 %879, %v576
    %v881 = vpop.permute.xlu0 %880
    %884 = vset.pattern.permute.xlu0 0
    %885 = vperm.xlu0 %884, %v577
    %v886 = vpop.permute.xlu0 %885
    %889 = vset.pattern.permute.xlu0 0
    %890 = vperm.xlu0 %889, %v578
    %v891 = vpop.permute.xlu0 %890
    %894 = vset.pattern.permute.xlu0 0
    %895 = vperm.xlu0 %894, %v579
    %v896 = vpop.permute.xlu0 %895
    %899 = vset.pattern.permute.xlu0 0
    %900 = vperm.xlu0 %899, %v580
    %v901 = vpop.permute.xlu0 %900
    %904 = vset.pattern.permute.xlu0 0
    %905 = vperm.xlu0 %904, %v581
    %v906 = vpop.permute.xlu0 %905
    %909 = vset.pattern.permute.xlu0 0
    %910 = vperm.xlu0 %909, %v582
    %v911 = vpop.permute.xlu0 %910
    %914 = vset.pattern.permute.xlu0 0
    %915 = vperm.xlu0 %914, %v583
    %v916 = vpop.permute.xlu0 %915
    %919 = vset.pattern.permute.xlu0 0
    %920 = vperm.xlu0 %919, %v584
    %v921 = vpop.permute.xlu0 %920
    %924 = vset.pattern.permute.xlu0 0
    %925 = vperm.xlu0 %924, %v585
    %v926 = vpop.permute.xlu0 %925
    %929 = vset.pattern.permute.xlu0 0
    %930 = vperm.xlu0 %929, %v586
    %v931 = vpop.permute.xlu0 %930
    %934 = vset.pattern.permute.xlu0 0
    %935 = vperm.xlu0 %934, %v587
    %v936 = vpop.permute.xlu0 %935
    %939 = vset.pattern.permute.xlu0 0
    %940 = vperm.xlu0 %939, %v588
    %v941 = vpop.permute.xlu0 %940
    %944 = vset.pattern.permute.xlu0 0
    %945 = vperm.xlu0 %944, %v589
    %v946 = vpop.permute.xlu0 %945
    %949 = vset.pattern.permute.xlu0 0
    %950 = vperm.xlu0 %949, %v590
    %v951 = vpop.permute.xlu0 %950
    %954 = vset.pattern.permute.xlu0 0
    %955 = vperm.xlu0 %954, %v591
    %v956 = vpop.permute.xlu0 %955
    %959 = vset.pattern.permute.xlu0 0
    %960 = vperm.xlu0 %959, %v592
    %v961 = vpop.permute.xlu0 %960
    %964 = vset.pattern.permute.xlu0 0
    %965 = vperm.xlu0 %964, %v593
    %v966 = vpop.permute.xlu0 %965
    %969 = vset.pattern.permute.xlu0 0
    %970 = vperm.xlu0 %969, %v594
    %v971 = vpop.permute.xlu0 %970
    %974 = vset.pattern.permute.xlu0 0
    %975 = vperm.xlu0 %974, %v595
    %v976 = vpop.permute.xlu0 %975
    %979 = vset.pattern.permute.xlu0 0
    %980 = vperm.xlu0 %979, %v596
    %v981 = vpop.permute.xlu0 %980
    %984 = vset.pattern.permute.xlu0 0
    %985 = vperm.xlu0 %984, %v597
    %v986 = vpop.permute.xlu0 %985
    %989 = vset.pattern.permute.xlu0 0
    %990 = vperm.xlu0 %989, %v598
    %v991 = vpop.permute.xlu0 %990
    %994 = vset.pattern.permute.xlu0 0
    %995 = vperm.xlu0 %994, %v599
    %v996 = vpop.permute.xlu0 %995
    %999 = vset.pattern.permute.xlu0 0
    %1000 = vperm.xlu0 %999, %v600
    %v1001 = vpop.permute.xlu0 %1000
    %1004 = vset.pattern.permute.xlu0 0
    %1005 = vperm.xlu0 %1004, %v601
    %v1006 = vpop.permute.xlu0 %1005
    %1009 = vset.pattern.permute.xlu0 0
    %1010 = vperm.xlu0 %1009, %v602
    %v1011 = vpop.permute.xlu0 %1010
    %1014 = vset.pattern.permute.xlu0 0
    %1015 = vperm.xlu0 %1014, %v603
    %v1016 = vpop.permute.xlu0 %1015
    %1019 = vset.pattern.permute.xlu0 0
    %1020 = vperm.xlu0 %1019, %v604
    %v1021 = vpop.permute.xlu0 %1020
    %1024 = vset.pattern.permute.xlu0 0
    %1025 = vperm.xlu0 %1024, %v605
    %v1026 = vpop.permute.xlu0 %1025
    %1029 = vset.pattern.permute.xlu0 0
    %1030 = vperm.xlu0 %1029, %v606
    %v1031 = vpop.permute.xlu0 %1030
    %1034 = vset.pattern.permute.xlu0 0
    %1035 = vperm.xlu0 %1034, %v607
    %v1036 = vpop.permute.xlu0 %1035
    %1039 = vset.pattern.permute.xlu0 0
    %1040 = vperm.xlu0 %1039, %v608
    %v1041 = vpop.permute.xlu0 %1040
    %1044 = vset.pattern.permute.xlu0 0
    %1045 = vperm.xlu0 %1044, %v609
    %v1046 = vpop.permute.xlu0 %1045
    %1049 = vset.pattern.permute.xlu0 0
    %1050 = vperm.xlu0 %1049, %v610
    %v1051 = vpop.permute.xlu0 %1050
    %1054 = vset.pattern.permute.xlu0 0
    %1055 = vperm.xlu0 %1054, %v611
    %v1056 = vpop.permute.xlu0 %1055
    %1059 = vset.pattern.permute.xlu0 0
    %1060 = vperm.xlu0 %1059, %v612
    %v1061 = vpop.permute.xlu0 %1060
    %1064 = vset.pattern.permute.xlu0 0
    %1065 = vperm.xlu0 %1064, %v613
    %v1066 = vpop.permute.xlu0 %1065
    %1069 = vset.pattern.permute.xlu0 0
    %1070 = vperm.xlu0 %1069, %v614
    %v1071 = vpop.permute.xlu0 %1070
    %1074 = vset.pattern.permute.xlu0 0
    %1075 = vperm.xlu0 %1074, %v615
    %v1076 = vpop.permute.xlu0 %1075
    %1079 = vset.pattern.permute.xlu0 0
    %1080 = vperm.xlu0 %1079, %v616
    %v1081 = vpop.permute.xlu0 %1080
    %1084 = vset.pattern.permute.xlu0 0
    %1085 = vperm.xlu0 %1084, %v617
    %v1086 = vpop.permute.xlu0 %1085
    %1089 = vset.pattern.permute.xlu0 0
    %1090 = vperm.xlu0 %1089, %v618
    %v1091 = vpop.permute.xlu0 %1090
    %1094 = vset.pattern.permute.xlu0 0
    %1095 = vperm.xlu0 %1094, %v619
    %v1096 = vpop.permute.xlu0 %1095
    %1099 = vset.pattern.permute.xlu0 0
    %1100 = vperm.xlu0 %1099, %v620
    %v1101 = vpop.permute.xlu0 %1100
    %1104 = vset.pattern.permute.xlu0 0
    %1105 = vperm.xlu0 %1104, %v621
    %v1106 = vpop.permute.xlu0 %1105
    %1109 = vset.pattern.permute.xlu0 0
    %1110 = vperm.xlu0 %1109, %v622
    %v1111 = vpop.permute.xlu0 %1110
    %1114 = vset.pattern.permute.xlu0 0
    %1115 = vperm.xlu0 %1114, %v623
    %v1116 = vpop.permute.xlu0 %1115
    %1119 = vset.pattern.permute.xlu0 0
    %1120 = vperm.xlu0 %1119, %v624
    %v1121 = vpop.permute.xlu0 %1120
    %1124 = vset.pattern.permute.xlu0 0
    %1125 = vperm.xlu0 %1124, %v625
    %v1126 = vpop.permute.xlu0 %1125
    %1129 = vset.pattern.permute.xlu0 0
    %1130 = vperm.xlu0 %1129, %v626
    %v1131 = vpop.permute.xlu0 %1130
    %1134 = vset.pattern.permute.xlu0 0
    %1135 = vperm.xlu0 %1134, %v627
    %v1136 = vpop.permute.xlu0 %1135
    %1139 = vset.pattern.permute.xlu0 0
    %1140 = vperm.xlu0 %1139, %v628
    %v1141 = vpop.permute.xlu0 %1140
    %1144 = vset.pattern.permute.xlu0 0
    %1145 = vperm.xlu0 %1144, %v629
    %v1146 = vpop.permute.xlu0 %1145
    %1149 = vset.pattern.permute.xlu0 0
    %1150 = vperm.xlu0 %1149, %v630
    %v1151 = vpop.permute.xlu0 %1150
    %1154 = vset.pattern.permute.xlu0 0
    %1155 = vperm.xlu0 %1154, %v631
    %v1156 = vpop.permute.xlu0 %1155
    %1159 = vset.pattern.permute.xlu0 0
    %1160 = vperm.xlu0 %1159, %v632
    %v1161 = vpop.permute.xlu0 %1160
    %1164 = vset.pattern.permute.xlu0 0
    %1165 = vperm.xlu0 %1164, %v633
    %v1166 = vpop.permute.xlu0 %1165
    %1169 = vset.pattern.permute.xlu0 0
    %1170 = vperm.xlu0 %1169, %v634
    %v1171 = vpop.permute.xlu0 %1170
    %1174 = vset.pattern.permute.xlu0 0
    %1175 = vperm.xlu0 %1174, %v635
    %v1176 = vpop.permute.xlu0 %1175
    %1179 = vset.pattern.permute.xlu0 0
    %1180 = vperm.xlu0 %1179, %v636
    %v1181 = vpop.permute.xlu0 %1180
    %1184 = vset.pattern.permute.xlu0 0
    %1185 = vperm.xlu0 %1184, %v637
    %v1186 = vpop.permute.xlu0 %1185
    %1189 = vset.pattern.permute.xlu0 0
    %1190 = vperm.xlu0 %1189, %v638
    %v1191 = vpop.permute.xlu0 %1190
    %1194 = vset.pattern.permute.xlu0 0
    %1195 = vperm.xlu0 %1194, %v639
    %v1196 = vpop.permute.xlu0 %1195
    %1199 = vset.pattern.permute.xlu0 0
    %1200 = vperm.xlu0 %1199, %v640
    %v1201 = vpop.permute.xlu0 %1200
    %1204 = vset.pattern.permute.xlu0 0
    %1205 = vperm.xlu0 %1204, %v641
    %v1206 = vpop.permute.xlu0 %1205
    %1209 = vset.pattern.permute.xlu0 0
    %1210 = vperm.xlu0 %1209, %v642
    %v1211 = vpop.permute.xlu0 %1210
    %1214 = vset.pattern.permute.xlu0 0
    %1215 = vperm.xlu0 %1214, %v643
    %v1216 = vpop.permute.xlu0 %1215
    %1219 = vset.pattern.permute.xlu0 0
    %1220 = vperm.xlu0 %1219, %v644
    %v1221 = vpop.permute.xlu0 %1220
    %1224 = vset.pattern.permute.xlu0 0
    %1225 = vperm.xlu0 %1224, %v645
    %v1226 = vpop.permute.xlu0 %1225
    %1229 = vset.pattern.permute.xlu0 0
    %1230 = vperm.xlu0 %1229, %v646
    %v1231 = vpop.permute.xlu0 %1230
    %1234 = vset.pattern.permute.xlu0 0
    %1235 = vperm.xlu0 %1234, %v647
    %v1236 = vpop.permute.xlu0 %1235
    %1239 = vset.pattern.permute.xlu0 0
    %1240 = vperm.xlu0 %1239, %v648
    %v1241 = vpop.permute.xlu0 %1240
    %1244 = vset.pattern.permute.xlu0 0
    %1245 = vperm.xlu0 %1244, %v649
    %v1246 = vpop.permute.xlu0 %1245
    %1249 = vset.pattern.permute.xlu0 0
    %1250 = vperm.xlu0 %1249, %v650
    %v1251 = vpop.permute.xlu0 %1250
    %1254 = vset.pattern.permute.xlu0 0
    %1255 = vperm.xlu0 %1254, %v651
    %v1256 = vpop.permute.xlu0 %1255
    %1259 = vset.pattern.permute.xlu0 0
    %1260 = vperm.xlu0 %1259, %v652
    %v1261 = vpop.permute.xlu0 %1260
    %1264 = vset.pattern.permute.xlu0 0
    %1265 = vperm.xlu0 %1264, %v653
    %v1266 = vpop.permute.xlu0 %1265
    %1269 = vset.pattern.permute.xlu0 0
    %1270 = vperm.xlu0 %1269, %v654
    %v1271 = vpop.permute.xlu0 %1270
    %1274 = vset.pattern.permute.xlu0 0
    %1275 = vperm.xlu0 %1274, %v655
    %v1276 = vpop.permute.xlu0 %1275
    %1279 = vset.pattern.permute.xlu0 0
    %1280 = vperm.xlu0 %1279, %v656
    %v1281 = vpop.permute.xlu0 %1280
    %1284 = vset.pattern.permute.xlu0 0
    %1285 = vperm.xlu0 %1284, %v657
    %v1286 = vpop.permute.xlu0 %1285
    %1289 = vset.pattern.permute.xlu0 0
    %1290 = vperm.xlu0 %1289, %v658
    %v1291 = vpop.permute.xlu0 %1290
    %1294 = vset.pattern.permute.xlu0 0
    %1295 = vperm.xlu0 %1294, %v659
    %v1296 = vpop.permute.xlu0 %1295
    %1299 = vset.pattern.permute.xlu0 0
    %1300 = vperm.xlu0 %1299, %v660
    %v1301 = vpop.permute.xlu0 %1300
    %1304 = vset.pattern.permute.xlu0 0
    %1305 = vperm.xlu0 %1304, %v661
    %v1306 = vpop.permute.xlu0 %1305
    %1309 = vset.pattern.permute.xlu0 0
    %1310 = vperm.xlu0 %1309, %v662
    %v1311 = vpop.permute.xlu0 %1310
    %1314 = vset.pattern.permute.xlu0 0
    %1315 = vperm.xlu0 %1314, %v663
    %v1316 = vpop.permute.xlu0 %1315
    %1319 = vset.pattern.permute.xlu0 0
    %1320 = vperm.xlu0 %1319, %v664
    %v1321 = vpop.permute.xlu0 %1320
    %1324 = vset.pattern.permute.xlu0 0
    %1325 = vperm.xlu0 %1324, %v665
    %v1326 = vpop.permute.xlu0 %1325
    %1329 = vset.pattern.permute.xlu0 0
    %1330 = vperm.xlu0 %1329, %v666
    %v1331 = vpop.permute.xlu0 %1330
    %1334 = vset.pattern.permute.xlu0 0
    %1335 = vperm.xlu0 %1334, %v667
    %v1336 = vpop.permute.xlu0 %1335
    %1339 = vset.pattern.permute.xlu0 0
    %1340 = vperm.xlu0 %1339, %v668
    %v1341 = vpop.permute.xlu0 %1340
    %1344 = vset.pattern.permute.xlu0 0
    %1345 = vperm.xlu0 %1344, %v669
    %v1346 = vpop.permute.xlu0 %1345
    %1349 = vset.pattern.permute.xlu0 0
    %1350 = vperm.xlu0 %1349, %v670
    %v1351 = vpop.permute.xlu0 %1350
    %1354 = vset.pattern.permute.xlu0 0
    %1355 = vperm.xlu0 %1354, %v671
    %v1356 = vpop.permute.xlu0 %1355
    %1359 = vset.pattern.permute.xlu0 0
    %1360 = vperm.xlu0 %1359, %v672
    %v1361 = vpop.permute.xlu0 %1360
    %1364 = vset.pattern.permute.xlu0 0
    %1365 = vperm.xlu0 %1364, %v673
    %v1366 = vpop.permute.xlu0 %1365
    %1369 = vset.pattern.permute.xlu0 0
    %1370 = vperm.xlu0 %1369, %v674
    %v1371 = vpop.permute.xlu0 %1370
    %1374 = vset.pattern.permute.xlu0 0
    %1375 = vperm.xlu0 %1374, %v675
    %v1376 = vpop.permute.xlu0 %1375
    %1379 = vset.pattern.permute.xlu0 0
    %1380 = vperm.xlu0 %1379, %v676
    %v1381 = vpop.permute.xlu0 %1380
    %1384 = vset.pattern.permute.xlu0 0
    %1385 = vperm.xlu0 %1384, %v677
    %v1386 = vpop.permute.xlu0 %1385
    %1389 = vset.pattern.permute.xlu0 0
    %1390 = vperm.xlu0 %1389, %v678
    %v1391 = vpop.permute.xlu0 %1390
    %1394 = vset.pattern.permute.xlu0 0
    %1395 = vperm.xlu0 %1394, %v679
    %v1396 = vpop.permute.xlu0 %1395
    %1399 = vset.pattern.permute.xlu0 0
    %1400 = vperm.xlu0 %1399, %v680
    %v1401 = vpop.permute.xlu0 %1400
    %1404 = vset.pattern.permute.xlu0 0
    %1405 = vperm.xlu0 %1404, %v681
    %v1406 = vpop.permute.xlu0 %1405
    %1409 = vset.pattern.permute.xlu0 0
    %1410 = vperm.xlu0 %1409, %v682
    %v1411 = vpop.permute.xlu0 %1410
    %1414 = vset.pattern.permute.xlu0 0
    %1415 = vperm.xlu0 %1414, %v683
    %v1416 = vpop.permute.xlu0 %1415
    %1419 = vset.pattern.permute.xlu0 0
    %1420 = vperm.xlu0 %1419, %v684
    %v1421 = vpop.permute.xlu0 %1420
    %1424 = vset.pattern.permute.xlu0 0
    %1425 = vperm.xlu0 %1424, %v685
    %v1426 = vpop.permute.xlu0 %1425
    %1429 = vset.pattern.permute.xlu0 0
    %1430 = vperm.xlu0 %1429, %v686
    %v1431 = vpop.permute.xlu0 %1430
    %1434 = vset.pattern.permute.xlu0 0
    %1435 = vperm.xlu0 %1434, %v687
    %v1436 = vpop.permute.xlu0 %1435
    %1439 = vset.pattern.permute.xlu0 0
    %1440 = vperm.xlu0 %1439, %v688
    %v1441 = vpop.permute.xlu0 %1440
    %1444 = vset.pattern.permute.xlu0 0
    %1445 = vperm.xlu0 %1444, %v689
    %v1446 = vpop.permute.xlu0 %1445
    %1449 = vset.pattern.permute.xlu0 0
    %1450 = vperm.xlu0 %1449, %v690
    %v1451 = vpop.permute.xlu0 %1450
    %1454 = vset.pattern.permute.xlu0 0
    %1455 = vperm.xlu0 %1454, %v691
    %v1456 = vpop.permute.xlu0 %1455
    %1459 = vset.pattern.permute.xlu0 0
    %1460 = vperm.xlu0 %1459, %v692
    %v1461 = vpop.permute.xlu0 %1460
    %1464 = vset.pattern.permute.xlu0 0
    %1465 = vperm.xlu0 %1464, %v693
    %v1466 = vpop.permute.xlu0 %1465
    %1469 = vset.pattern.permute.xlu0 0
    %1470 = vperm.xlu0 %1469, %v694
    %v1471 = vpop.permute.xlu0 %1470
    %1474 = vset.pattern.permute.xlu0 0
    %1475 = vperm.xlu0 %1474, %v695
    %v1476 = vpop.permute.xlu0 %1475
    %1479 = vset.pattern.permute.xlu0 0
    %1480 = vperm.xlu0 %1479, %v696
    %v1481 = vpop.permute.xlu0 %1480
    %1484 = vset.pattern.permute.xlu0 0
    %1485 = vperm.xlu0 %1484, %v697
    %v1486 = vpop.permute.xlu0 %1485
    %1489 = vset.pattern.permute.xlu0 0
    %1490 = vperm.xlu0 %1489, %v698
    %v1491 = vpop.permute.xlu0 %1490
    %1494 = vset.pattern.permute.xlu0 0
    %1495 = vperm.xlu0 %1494, %v699
    %v1496 = vpop.permute.xlu0 %1495
    %1499 = vset.pattern.permute.xlu0 0
    %1500 = vperm.xlu0 %1499, %v700
    %v1501 = vpop.permute.xlu0 %1500
    %1504 = vset.pattern.permute.xlu0 0
    %1505 = vperm.xlu0 %1504, %v701
    %v1506 = vpop.permute.xlu0 %1505
    %1509 = vset.pattern.permute.xlu0 0
    %1510 = vperm.xlu0 %1509, %v702
    %v1511 = vpop.permute.xlu0 %1510
    %1514 = vset.pattern.permute.xlu0 0
    %1515 = vperm.xlu0 %1514, %v703
    %v1516 = vpop.permute.xlu0 %1515
    %1519 = vset.pattern.permute.xlu0 0
    %1520 = vperm.xlu0 %1519, %v704
    %v1521 = vpop.permute.xlu0 %1520
    %1524 = vset.pattern.permute.xlu0 0
    %1525 = vperm.xlu0 %1524, %v705
    %v1526 = vpop.permute.xlu0 %1525
    %1529 = vset.pattern.permute.xlu0 0
    %1530 = vperm.xlu0 %1529, %v706
    %v1531 = vpop.permute.xlu0 %1530
    %1534 = vset.pattern.permute.xlu0 0
    %1535 = vperm.xlu0 %1534, %v707
    %v1536 = vpop.permute.xlu0 %1535
    %1539 = vset.pattern.permute.xlu0 0
    %1540 = vperm.xlu0 %1539, %v708
    %v1541 = vpop.permute.xlu0 %1540
    %1544 = vset.pattern.permute.xlu0 0
    %1545 = vperm.xlu0 %1544, %v709
    %v1546 = vpop.permute.xlu0 %1545
    %1549 = vset.pattern.permute.xlu0 0
    %1550 = vperm.xlu0 %1549, %v710
    %v1551 = vpop.permute.xlu0 %1550
    %1554 = vset.pattern.permute.xlu0 0
    %1555 = vperm.xlu0 %1554, %v711
    %v1556 = vpop.permute.xlu0 %1555
    %1559 = vset.pattern.permute.xlu0 0
    %1560 = vperm.xlu0 %1559, %v712
    %v1561 = vpop.permute.xlu0 %1560
    %1564 = vset.pattern.permute.xlu0 0
    %1565 = vperm.xlu0 %1564, %v713
    %v1566 = vpop.permute.xlu0 %1565
    %1569 = vset.pattern.permute.xlu0 0
    %1570 = vperm.xlu0 %1569, %v714
    %v1571 = vpop.permute.xlu0 %1570
    %1574 = vset.pattern.permute.xlu0 0
    %1575 = vperm.xlu0 %1574, %v715
    %v1576 = vpop.permute.xlu0 %1575
    %1579 = vset.pattern.permute.xlu0 0
    %1580 = vperm.xlu0 %1579, %v716
    %v1581 = vpop.permute.xlu0 %1580
    %1584 = vset.pattern.permute.xlu0 0
    %1585 = vperm.xlu0 %1584, %v717
    %v1586 = vpop.permute.xlu0 %1585
    %1589 = vset.pattern.permute.xlu0 0
    %1590 = vperm.xlu0 %1589, %v718
    %v1591 = vpop.permute.xlu0 %1590
    %1594 = vset.pattern.permute.xlu0 0
    %1595 = vperm.xlu0 %1594, %v719
    %v1596 = vpop.permute.xlu0 %1595
    %1599 = vset.pattern.permute.xlu0 0
    %1600 = vperm.xlu0 %1599, %v720
    %v1601 = vpop.permute.xlu0 %1600
    %1604 = vset.pattern.permute.xlu0 0
    %1605 = vperm.xlu0 %1604, %v721
    %v1606 = vpop.permute.xlu0 %1605
    %1609 = vset.pattern.permute.xlu0 0
    %1610 = vperm.xlu0 %1609, %v722
    %v1611 = vpop.permute.xlu0 %1610
    %1614 = vset.pattern.permute.xlu0 0
    %1615 = vperm.xlu0 %1614, %v723
    %v1616 = vpop.permute.xlu0 %1615
    %1619 = vset.pattern.permute.xlu0 0
    %1620 = vperm.xlu0 %1619, %v724
    %v1621 = vpop.permute.xlu0 %1620
    %1624 = vset.pattern.permute.xlu0 0
    %1625 = vperm.xlu0 %1624, %v725
    %v1626 = vpop.permute.xlu0 %1625
    %1629 = vset.pattern.permute.xlu0 0
    %1630 = vperm.xlu0 %1629, %v726
    %v1631 = vpop.permute.xlu0 %1630
    %1634 = vset.pattern.permute.xlu0 0
    %1635 = vperm.xlu0 %1634, %v727
    %v1636 = vpop.permute.xlu0 %1635
    %1639 = vset.pattern.permute.xlu0 0
    %1640 = vperm.xlu0 %1639, %v728
    %v1641 = vpop.permute.xlu0 %1640
    %1644 = vset.pattern.permute.xlu0 0
    %1645 = vperm.xlu0 %1644, %v729
    %v1646 = vpop.permute.xlu0 %1645
    %1649 = vset.pattern.permute.xlu0 0
    %1650 = vperm.xlu0 %1649, %v730
    %v1651 = vpop.permute.xlu0 %1650
    %1654 = vset.pattern.permute.xlu0 0
    %1655 = vperm.xlu0 %1654, %v731
    %v1656 = vpop.permute.xlu0 %1655
    %1659 = vset.pattern.permute.xlu0 0
    %1660 = vperm.xlu0 %1659, %v732
    %v1661 = vpop.permute.xlu0 %1660
    %1664 = vset.pattern.permute.xlu0 0
    %1665 = vperm.xlu0 %1664, %v733
    %v1666 = vpop.permute.xlu0 %1665
    %1669 = vset.pattern.permute.xlu0 0
    %1670 = vperm.xlu0 %1669, %v734
    %v1671 = vpop.permute.xlu0 %1670
    %1674 = vset.pattern.permute.xlu0 0
    %1675 = vperm.xlu0 %1674, %v735
    %v1676 = vpop.permute.xlu0 %1675
    %1679 = vset.pattern.permute.xlu0 0
    %1680 = vperm.xlu0 %1679, %v736
    %v1681 = vpop.permute.xlu0 %1680
    %1684 = vset.pattern.permute.xlu0 0
    %1685 = vperm.xlu0 %1684, %v737
    %v1686 = vpop.permute.xlu0 %1685
    %1689 = vset.pattern.permute.xlu0 0
    %1690 = vperm.xlu0 %1689, %v738
    %v1691 = vpop.permute.xlu0 %1690
    %1694 = vset.pattern.permute.xlu0 0
    %1695 = vperm.xlu0 %1694, %v739
    %v1696 = vpop.permute.xlu0 %1695
    %1699 = vset.pattern.permute.xlu0 0
    %1700 = vperm.xlu0 %1699, %v740
    %v1701 = vpop.permute.xlu0 %1700
    %1704 = vset.pattern.permute.xlu0 0
    %1705 = vperm.xlu0 %1704, %v741
    %v1706 = vpop.permute.xlu0 %1705
    %1709 = vset.pattern.permute.xlu0 0
    %1710 = vperm.xlu0 %1709, %v742
    %v1711 = vpop.permute.xlu0 %1710
    %1714 = vset.pattern.permute.xlu0 0
    %1715 = vperm.xlu0 %1714, %v743
    %v1716 = vpop.permute.xlu0 %1715
    %1719 = vset.pattern.permute.xlu0 0
    %1720 = vperm.xlu0 %1719, %v744
    %v1721 = vpop.permute.xlu0 %1720
    %1724 = vset.pattern.permute.xlu0 0
    %1725 = vperm.xlu0 %1724, %v745
    %v1726 = vpop.permute.xlu0 %1725
    %1729 = vset.pattern.permute.xlu0 0
    %1730 = vperm.xlu0 %1729, %v746
    %v1731 = vpop.permute.xlu0 %1730
    %1734 = vset.pattern.permute.xlu0 0
    %1735 = vperm.xlu0 %1734, %v747
    %v1736 = vpop.permute.xlu0 %1735
    %1739 = vset.pattern.permute.xlu0 0
    %1740 = vperm.xlu0 %1739, %v748
    %v1741 = vpop.permute.xlu0 %1740
    %1744 = vset.pattern.permute.xlu0 0
    %1745 = vperm.xlu0 %1744, %v749
    %v1746 = vpop.permute.xlu0 %1745
    %1749 = vset.pattern.permute.xlu0 0
    %1750 = vperm.xlu0 %1749, %v750
    %v1751 = vpop.permute.xlu0 %1750
    %1754 = vset.pattern.permute.xlu0 0
    %1755 = vperm.xlu0 %1754, %v751
    %v1756 = vpop.permute.xlu0 %1755
    %1759 = vset.pattern.permute.xlu0 0
    %1760 = vperm.xlu0 %1759, %v752
    %v1761 = vpop.permute.xlu0 %1760
    %1764 = vset.pattern.permute.xlu0 0
    %1765 = vperm.xlu0 %1764, %v753
    %v1766 = vpop.permute.xlu0 %1765
    %1769 = vset.pattern.permute.xlu0 0
    %1770 = vperm.xlu0 %1769, %v754
    %v1771 = vpop.permute.xlu0 %1770
    %1774 = vset.pattern.permute.xlu0 0
    %1775 = vperm.xlu0 %1774, %v755
    %v1776 = vpop.permute.xlu0 %1775
    %1779 = vset.pattern.permute.xlu0 0
    %1780 = vperm.xlu0 %1779, %v756
    %v1781 = vpop.permute.xlu0 %1780
    %1784 = vset.pattern.permute.xlu0 0
    %1785 = vperm.xlu0 %1784, %v757
    %v1786 = vpop.permute.xlu0 %1785
    %1789 = vset.pattern.permute.xlu0 0
    %1790 = vperm.xlu0 %1789, %v758
    %v1791 = vpop.permute.xlu0 %1790
    %1794 = vset.pattern.permute.xlu0 0
    %1795 = vperm.xlu0 %1794, %v759
    %v1796 = vpop.permute.xlu0 %1795
    %1799 = vset.pattern.permute.xlu0 0
    %1800 = vperm.xlu0 %1799, %v760
    %v1801 = vpop.permute.xlu0 %1800
    %1804 = vset.pattern.permute.xlu0 0
    %1805 = vperm.xlu0 %1804, %v761
    %v1806 = vpop.permute.xlu0 %1805
    %1809 = vset.pattern.permute.xlu0 0
    %1810 = vperm.xlu0 %1809, %v762
    %v1811 = vpop.permute.xlu0 %1810
    %1814 = vset.pattern.permute.xlu0 0
    %1815 = vperm.xlu0 %1814, %v763
    %v1816 = vpop.permute.xlu0 %1815
    %1819 = vset.pattern.permute.xlu0 0
    %1820 = vperm.xlu0 %1819, %v764
    %v1821 = vpop.permute.xlu0 %1820
    %1824 = vset.pattern.permute.xlu0 0
    %1825 = vperm.xlu0 %1824, %v765
    %v1826 = vpop.permute.xlu0 %1825
    %1829 = vset.pattern.permute.xlu0 0
    %1830 = vperm.xlu0 %1829, %v766
    %v1831 = vpop.permute.xlu0 %1830
    %1834 = vset.pattern.permute.xlu0 0
    %1835 = vperm.xlu0 %1834, %v767
    %v1836 = vpop.permute.xlu0 %1835
    %1839 = vset.pattern.permute.xlu0 0
    %1840 = vperm.xlu0 %1839, %v768
    %v1841 = vpop.permute.xlu0 %1840
    %1844 = vset.pattern.permute.xlu0 0
    %1845 = vperm.xlu0 %1844, %v769
    %v1846 = vpop.permute.xlu0 %1845
    %1849 = vset.pattern.permute.xlu0 0
    %1850 = vperm.xlu0 %1849, %v770
    %v1851 = vpop.permute.xlu0 %1850
    %1854 = vset.pattern.permute.xlu0 0
    %1855 = vperm.xlu0 %1854, %v771
    %v1856 = vpop.permute.xlu0 %1855
    %1859 = vset.pattern.permute.xlu0 0
    %1860 = vperm.xlu0 %1859, %v772
    %v1861 = vpop.permute.xlu0 %1860
    %1864 = vset.pattern.permute.xlu0 0
    %1865 = vperm.xlu0 %1864, %v773
    %v1866 = vpop.permute.xlu0 %1865
    %1869 = vset.pattern.permute.xlu0 0
    %1870 = vperm.xlu0 %1869, %v774
    %v1871 = vpop.permute.xlu0 %1870
    %1874 = vset.pattern.permute.xlu0 0
    %1875 = vperm.xlu0 %1874, %v775
    %v1876 = vpop.permute.xlu0 %1875
    %1879 = vset.pattern.permute.xlu0 0
    %1880 = vperm.xlu0 %1879, %v776
    %v1881 = vpop.permute.xlu0 %1880
    %1884 = vset.pattern.permute.xlu0 0
    %1885 = vperm.xlu0 %1884, %v777
    %v1886 = vpop.permute.xlu0 %1885
    %1889 = vset.pattern.permute.xlu0 0
    %1890 = vperm.xlu0 %1889, %v778
    %v1891 = vpop.permute.xlu0 %1890
    %1894 = vset.pattern.permute.xlu0 0
    %1895 = vperm.xlu0 %1894, %v779
    %v1896 = vpop.permute.xlu0 %1895
    %1899 = vset.pattern.permute.xlu0 0
    %1900 = vperm.xlu0 %1899, %v780
    %v1901 = vpop.permute.xlu0 %1900
    %1904 = vset.pattern.permute.xlu0 0
    %1905 = vperm.xlu0 %1904, %v781
    %v1906 = vpop.permute.xlu0 %1905
    %1909 = vset.pattern.permute.xlu0 0
    %1910 = vperm.xlu0 %1909, %v782
    %v1911 = vpop.permute.xlu0 %1910
    %1914 = vset.pattern.permute.xlu0 0
    %1915 = vperm.xlu0 %1914, %v783
    %v1916 = vpop.permute.xlu0 %1915
    %1919 = vset.pattern.permute.xlu0 0
    %1920 = vperm.xlu0 %1919, %v784
    %v1921 = vpop.permute.xlu0 %1920
    %1924 = vset.pattern.permute.xlu0 0
    %1925 = vperm.xlu0 %1924, %v785
    %v1926 = vpop.permute.xlu0 %1925
    %1929 = vset.pattern.permute.xlu0 0
    %1930 = vperm.xlu0 %1929, %v786
    %v1931 = vpop.permute.xlu0 %1930
    %1934 = vset.pattern.permute.xlu0 0
    %1935 = vperm.xlu0 %1934, %v787
    %v1936 = vpop.permute.xlu0 %1935
    %1939 = vset.pattern.permute.xlu0 0
    %1940 = vperm.xlu0 %1939, %v788
    %v1941 = vpop.permute.xlu0 %1940
    %1944 = vset.pattern.permute.xlu0 0
    %1945 = vperm.xlu0 %1944, %v789
    %v1946 = vpop.permute.xlu0 %1945
    %1949 = vset.pattern.permute.xlu0 0
    %1950 = vperm.xlu0 %1949, %v790
    %v1951 = vpop.permute.xlu0 %1950
    %1954 = vset.pattern.permute.xlu0 0
    %1955 = vperm.xlu0 %1954, %v791
    %v1956 = vpop.permute.xlu0 %1955
    %1959 = vset.pattern.permute.xlu0 0
    %1960 = vperm.xlu0 %1959, %v792
    %v1961 = vpop.permute.xlu0 %1960
    %1964 = vset.pattern.permute.xlu0 0
    %1965 = vperm.xlu0 %1964, %v793
    %v1966 = vpop.permute.xlu0 %1965
    %1969 = vset.pattern.permute.xlu0 0
    %1970 = vperm.xlu0 %1969, %v794
    %v1971 = vpop.permute.xlu0 %1970
    %1974 = vset.pattern.permute.xlu0 0
    %1975 = vperm.xlu0 %1974, %v795
    %v1976 = vpop.permute.xlu0 %1975
    %1979 = vset.pattern.permute.xlu0 0
    %1980 = vperm.xlu0 %1979, %v796
    %v1981 = vpop.permute.xlu0 %1980
    %1984 = vset.pattern.permute.xlu0 0
    %1985 = vperm.xlu0 %1984, %v797
    %v1986 = vpop.permute.xlu0 %1985
    %1989 = vset.pattern.permute.xlu0 0
    %1990 = vperm.xlu0 %1989, %v798
    %v1991 = vpop.permute.xlu0 %1990
    %1994 = vset.pattern.permute.xlu0 0
    %1995 = vperm.xlu0 %1994, %v799
    %v1996 = vpop.permute.xlu0 %1995
    %1999 = vset.pattern.permute.xlu0 0
    %2000 = vperm.xlu0 %1999, %v800
    %v2001 = vpop.permute.xlu0 %2000
    %2004 = vset.pattern.permute.xlu0 0
    %2005 = vperm.xlu0 %2004, %v801
    %v2006 = vpop.permute.xlu0 %2005
    %2009 = vset.pattern.permute.xlu0 0
    %2010 = vperm.xlu0 %2009, %v802
    %v2011 = vpop.permute.xlu0 %2010
    %2014 = vset.pattern.permute.xlu0 0
    %2015 = vperm.xlu0 %2014, %v803
    %v2016 = vpop.permute.xlu0 %2015
    %2019 = vset.pattern.permute.xlu0 0
    %2020 = vperm.xlu0 %2019, %v804
    %v2021 = vpop.permute.xlu0 %2020
    %2024 = vset.pattern.permute.xlu0 0
    %2025 = vperm.xlu0 %2024, %v805
    %v2026 = vpop.permute.xlu0 %2025
    %2029 = vset.pattern.permute.xlu0 0
    %2030 = vperm.xlu0 %2029, %v806
    %v2031 = vpop.permute.xlu0 %2030
    %2034 = vset.pattern.permute.xlu0 0
    %2035 = vperm.xlu0 %2034, %v807
    %v2036 = vpop.permute.xlu0 %2035
    %2039 = vset.pattern.permute.xlu0 0
    %2040 = vperm.xlu0 %2039, %v808
    %v2041 = vpop.permute.xlu0 %2040
    %2044 = vset.pattern.permute.xlu0 0
    %2045 = vperm.xlu0 %2044, %v809
    %v2046 = vpop.permute.xlu0 %2045
    %2049 = vset.pattern.permute.xlu0 0
    %2050 = vperm.xlu0 %2049, %v810
    %v2051 = vpop.permute.xlu0 %2050
    %2054 = vset.pattern.permute.xlu0 0
    %2055 = vperm.xlu0 %2054, %v811
    %v2056 = vpop.permute.xlu0 %2055
    %2059 = vset.pattern.permute.xlu0 0
    %2060 = vperm.xlu0 %2059, %v812
    %v2061 = vpop.permute.xlu0 %2060
    %2064 = vset.pattern.permute.xlu0 0
    %2065 = vperm.xlu0 %2064, %v813
    %v2066 = vpop.permute.xlu0 %2065
    %2069 = vset.pattern.permute.xlu0 0
    %2070 = vperm.xlu0 %2069, %v814
    %v2071 = vpop.permute.xlu0 %2070
    %2074 = vset.pattern.permute.xlu0 0
    %2075 = vperm.xlu0 %2074, %v815
    %v2076 = vpop.permute.xlu0 %2075
    %2079 = vset.pattern.permute.xlu0 0
    %2080 = vperm.xlu0 %2079, %v816
    %v2081 = vpop.permute.xlu0 %2080
    %2084 = vset.pattern.permute.xlu0 0
    %2085 = vperm.xlu0 %2084, %v817
    %v2086 = vpop.permute.xlu0 %2085
    %2089 = vset.pattern.permute.xlu0 0
    %2090 = vperm.xlu0 %2089, %v818
    %v2091 = vpop.permute.xlu0 %2090
    %2094 = vset.pattern.permute.xlu0 0
    %2095 = vperm.xlu0 %2094, %v819
    %v2096 = vpop.permute.xlu0 %2095
    %2099 = vset.pattern.permute.xlu0 0
    %2100 = vperm.xlu0 %2099, %v820
    %v2101 = vpop.permute.xlu0 %2100
    %v2103 = vlaneseq
    %v2104 = vshrl.u32 %v2103, 7
    %v2105 = vsub.s32 0, %v2104
    %v2106 = vrot.slane %v821, %v2105
    %v2107 = vmul.f32 %v826, %v2106
    %v2108 = vmul.f32 %v831, %v2106
    %v2109 = vmul.f32 %v836, %v2106
    %v2110 = vmul.f32 %v841, %v2106
    %v2111 = vmul.f32 %v846, %v2106
    %v2112 = vmul.f32 %v851, %v2106
    %v2113 = vmul.f32 %v856, %v2106
    %v2114 = vmul.f32 %v861, %v2106
    %v2115 = vmul.f32 %v866, %v2106
    %v2116 = vmul.f32 %v871, %v2106
    %v2117 = vmul.f32 %v876, %v2106
    %v2118 = vmul.f32 %v881, %v2106
    %v2119 = vmul.f32 %v886, %v2106
    %v2120 = vmul.f32 %v891, %v2106
    %v2121 = vmul.f32 %v896, %v2106
    %v2122 = vmul.f32 %v901, %v2106
    %v2123 = vmul.f32 %v906, %v2106
    %v2124 = vmul.f32 %v911, %v2106
    %v2125 = vmul.f32 %v916, %v2106
    %v2126 = vmul.f32 %v921, %v2106
    %v2127 = vmul.f32 %v926, %v2106
    %v2128 = vmul.f32 %v931, %v2106
    %v2129 = vmul.f32 %v936, %v2106
    %v2130 = vmul.f32 %v941, %v2106
    %v2131 = vmul.f32 %v946, %v2106
    %v2132 = vmul.f32 %v951, %v2106
    %v2133 = vmul.f32 %v956, %v2106
    %v2134 = vmul.f32 %v961, %v2106
    %v2135 = vmul.f32 %v966, %v2106
    %v2136 = vmul.f32 %v971, %v2106
    %v2137 = vmul.f32 %v976, %v2106
    %v2138 = vmul.f32 %v981, %v2106
    %v2139 = vmul.f32 %v986, %v2106
    %v2140 = vmul.f32 %v991, %v2106
    %v2141 = vmul.f32 %v996, %v2106
    %v2142 = vmul.f32 %v1001, %v2106
    %v2143 = vmul.f32 %v1006, %v2106
    %v2144 = vmul.f32 %v1011, %v2106
    %v2145 = vmul.f32 %v1016, %v2106
    %v2146 = vmul.f32 %v1021, %v2106
    %v2147 = vmul.f32 %v1026, %v2106
    %v2148 = vmul.f32 %v1031, %v2106
    %v2149 = vmul.f32 %v1036, %v2106
    %v2150 = vmul.f32 %v1041, %v2106
    %v2151 = vmul.f32 %v1046, %v2106
    %v2152 = vmul.f32 %v1051, %v2106
    %v2153 = vmul.f32 %v1056, %v2106
    %v2154 = vmul.f32 %v1061, %v2106
    %v2155 = vmul.f32 %v1066, %v2106
    %v2156 = vmul.f32 %v1071, %v2106
    %v2157 = vmul.f32 %v1076, %v2106
    %v2158 = vmul.f32 %v1081, %v2106
    %v2159 = vmul.f32 %v1086, %v2106
    %v2160 = vmul.f32 %v1091, %v2106
    %v2161 = vmul.f32 %v1096, %v2106
    %v2162 = vmul.f32 %v1101, %v2106
    %v2163 = vmul.f32 %v1106, %v2106
    %v2164 = vmul.f32 %v1111, %v2106
    %v2165 = vmul.f32 %v1116, %v2106
    %v2166 = vmul.f32 %v1121, %v2106
    %v2167 = vmul.f32 %v1126, %v2106
    %v2168 = vmul.f32 %v1131, %v2106
    %v2169 = vmul.f32 %v1136, %v2106
    %v2170 = vmul.f32 %v1141, %v2106
    %v2171 = vmul.f32 %v1146, %v2106
    %v2172 = vmul.f32 %v1151, %v2106
    %v2173 = vmul.f32 %v1156, %v2106
    %v2174 = vmul.f32 %v1161, %v2106
    %v2175 = vmul.f32 %v1166, %v2106
    %v2176 = vmul.f32 %v1171, %v2106
    %v2177 = vmul.f32 %v1176, %v2106
    %v2178 = vmul.f32 %v1181, %v2106
    %v2179 = vmul.f32 %v1186, %v2106
    %v2180 = vmul.f32 %v1191, %v2106
    %v2181 = vmul.f32 %v1196, %v2106
    %v2182 = vmul.f32 %v1201, %v2106
    %v2183 = vmul.f32 %v1206, %v2106
    %v2184 = vmul.f32 %v1211, %v2106
    %v2185 = vmul.f32 %v1216, %v2106
    %v2186 = vmul.f32 %v1221, %v2106
    %v2187 = vmul.f32 %v1226, %v2106
    %v2188 = vmul.f32 %v1231, %v2106
    %v2189 = vmul.f32 %v1236, %v2106
    %v2190 = vmul.f32 %v1241, %v2106
    %v2191 = vmul.f32 %v1246, %v2106
    %v2192 = vmul.f32 %v1251, %v2106
    %v2193 = vmul.f32 %v1256, %v2106
    %v2194 = vmul.f32 %v1261, %v2106
    %v2195 = vmul.f32 %v1266, %v2106
    %v2196 = vmul.f32 %v1271, %v2106
    %v2197 = vmul.f32 %v1276, %v2106
    %v2198 = vmul.f32 %v1281, %v2106
    %v2199 = vmul.f32 %v1286, %v2106
    %v2200 = vmul.f32 %v1291, %v2106
    %v2201 = vmul.f32 %v1296, %v2106
    %v2202 = vmul.f32 %v1301, %v2106
    %v2203 = vmul.f32 %v1306, %v2106
    %v2204 = vmul.f32 %v1311, %v2106
    %v2205 = vmul.f32 %v1316, %v2106
    %v2206 = vmul.f32 %v1321, %v2106
    %v2207 = vmul.f32 %v1326, %v2106
    %v2208 = vmul.f32 %v1331, %v2106
    %v2209 = vmul.f32 %v1336, %v2106
    %v2210 = vmul.f32 %v1341, %v2106
    %v2211 = vmul.f32 %v1346, %v2106
    %v2212 = vmul.f32 %v1351, %v2106
    %v2213 = vmul.f32 %v1356, %v2106
    %v2214 = vmul.f32 %v1361, %v2106
    %v2215 = vmul.f32 %v1366, %v2106
    %v2216 = vmul.f32 %v1371, %v2106
    %v2217 = vmul.f32 %v1376, %v2106
    %v2218 = vmul.f32 %v1381, %v2106
    %v2219 = vmul.f32 %v1386, %v2106
    %v2220 = vmul.f32 %v1391, %v2106
    %v2221 = vmul.f32 %v1396, %v2106
    %v2222 = vmul.f32 %v1401, %v2106
    %v2223 = vmul.f32 %v1406, %v2106
    %v2224 = vmul.f32 %v1411, %v2106
    %v2225 = vmul.f32 %v1416, %v2106
    %v2226 = vmul.f32 %v1421, %v2106
    %v2227 = vmul.f32 %v1426, %v2106
    %v2228 = vmul.f32 %v1431, %v2106
    %v2229 = vmul.f32 %v1436, %v2106
    %v2230 = vmul.f32 %v1441, %v2106
    %v2231 = vmul.f32 %v1446, %v2106
    %v2232 = vmul.f32 %v1451, %v2106
    %v2233 = vmul.f32 %v1456, %v2106
    %v2234 = vmul.f32 %v1461, %v2106
    %v2235 = vmul.f32 %v1466, %v2106
    %v2236 = vmul.f32 %v1471, %v2106
    %v2237 = vmul.f32 %v1476, %v2106
    %v2238 = vmul.f32 %v1481, %v2106
    %v2239 = vmul.f32 %v1486, %v2106
    %v2240 = vmul.f32 %v1491, %v2106
    %v2241 = vmul.f32 %v1496, %v2106
    %v2242 = vmul.f32 %v1501, %v2106
    %v2243 = vmul.f32 %v1506, %v2106
    %v2244 = vmul.f32 %v1511, %v2106
    %v2245 = vmul.f32 %v1516, %v2106
    %v2246 = vmul.f32 %v1521, %v2106
    %v2247 = vmul.f32 %v1526, %v2106
    %v2248 = vmul.f32 %v1531, %v2106
    %v2249 = vmul.f32 %v1536, %v2106
    %v2250 = vmul.f32 %v1541, %v2106
    %v2251 = vmul.f32 %v1546, %v2106
    %v2252 = vmul.f32 %v1551, %v2106
    %v2253 = vmul.f32 %v1556, %v2106
    %v2254 = vmul.f32 %v1561, %v2106
    %v2255 = vmul.f32 %v1566, %v2106
    %v2256 = vmul.f32 %v1571, %v2106
    %v2257 = vmul.f32 %v1576, %v2106
    %v2258 = vmul.f32 %v1581, %v2106
    %v2259 = vmul.f32 %v1586, %v2106
    %v2260 = vmul.f32 %v1591, %v2106
    %v2261 = vmul.f32 %v1596, %v2106
    %v2262 = vmul.f32 %v1601, %v2106
    %v2263 = vmul.f32 %v1606, %v2106
    %v2264 = vmul.f32 %v1611, %v2106
    %v2265 = vmul.f32 %v1616, %v2106
    %v2266 = vmul.f32 %v1621, %v2106
    %v2267 = vmul.f32 %v1626, %v2106
    %v2268 = vmul.f32 %v1631, %v2106
    %v2269 = vmul.f32 %v1636, %v2106
    %v2270 = vmul.f32 %v1641, %v2106
    %v2271 = vmul.f32 %v1646, %v2106
    %v2272 = vmul.f32 %v1651, %v2106
    %v2273 = vmul.f32 %v1656, %v2106
    %v2274 = vmul.f32 %v1661, %v2106
    %v2275 = vmul.f32 %v1666, %v2106
    %v2276 = vmul.f32 %v1671, %v2106
    %v2277 = vmul.f32 %v1676, %v2106
    %v2278 = vmul.f32 %v1681, %v2106
    %v2279 = vmul.f32 %v1686, %v2106
    %v2280 = vmul.f32 %v1691, %v2106
    %v2281 = vmul.f32 %v1696, %v2106
    %v2282 = vmul.f32 %v1701, %v2106
    %v2283 = vmul.f32 %v1706, %v2106
    %v2284 = vmul.f32 %v1711, %v2106
    %v2285 = vmul.f32 %v1716, %v2106
    %v2286 = vmul.f32 %v1721, %v2106
    %v2287 = vmul.f32 %v1726, %v2106
    %v2288 = vmul.f32 %v1731, %v2106
    %v2289 = vmul.f32 %v1736, %v2106
    %v2290 = vmul.f32 %v1741, %v2106
    %v2291 = vmul.f32 %v1746, %v2106
    %v2292 = vmul.f32 %v1751, %v2106
    %v2293 = vmul.f32 %v1756, %v2106
    %v2294 = vmul.f32 %v1761, %v2106
    %v2295 = vmul.f32 %v1766, %v2106
    %v2296 = vmul.f32 %v1771, %v2106
    %v2297 = vmul.f32 %v1776, %v2106
    %v2298 = vmul.f32 %v1781, %v2106
    %v2299 = vmul.f32 %v1786, %v2106
    %v2300 = vmul.f32 %v1791, %v2106
    %v2301 = vmul.f32 %v1796, %v2106
    %v2302 = vmul.f32 %v1801, %v2106
    %v2303 = vmul.f32 %v1806, %v2106
    %v2304 = vmul.f32 %v1811, %v2106
    %v2305 = vmul.f32 %v1816, %v2106
    %v2306 = vmul.f32 %v1821, %v2106
    %v2307 = vmul.f32 %v1826, %v2106
    %v2308 = vmul.f32 %v1831, %v2106
    %v2309 = vmul.f32 %v1836, %v2106
    %v2310 = vmul.f32 %v1841, %v2106
    %v2311 = vmul.f32 %v1846, %v2106
    %v2312 = vmul.f32 %v1851, %v2106
    %v2313 = vmul.f32 %v1856, %v2106
    %v2314 = vmul.f32 %v1861, %v2106
    %v2315 = vmul.f32 %v1866, %v2106
    %v2316 = vmul.f32 %v1871, %v2106
    %v2317 = vmul.f32 %v1876, %v2106
    %v2318 = vmul.f32 %v1881, %v2106
    %v2319 = vmul.f32 %v1886, %v2106
    %v2320 = vmul.f32 %v1891, %v2106
    %v2321 = vmul.f32 %v1896, %v2106
    %v2322 = vmul.f32 %v1901, %v2106
    %v2323 = vmul.f32 %v1906, %v2106
    %v2324 = vmul.f32 %v1911, %v2106
    %v2325 = vmul.f32 %v1916, %v2106
    %v2326 = vmul.f32 %v1921, %v2106
    %v2327 = vmul.f32 %v1926, %v2106
    %v2328 = vmul.f32 %v1931, %v2106
    %v2329 = vmul.f32 %v1936, %v2106
    %v2330 = vmul.f32 %v1941, %v2106
    %v2331 = vmul.f32 %v1946, %v2106
    %v2332 = vmul.f32 %v1951, %v2106
    %v2333 = vmul.f32 %v1956, %v2106
    %v2334 = vmul.f32 %v1961, %v2106
    %v2335 = vmul.f32 %v1966, %v2106
    %v2336 = vmul.f32 %v1971, %v2106
    %v2337 = vmul.f32 %v1976, %v2106
    %v2338 = vmul.f32 %v1981, %v2106
    %v2339 = vmul.f32 %v1986, %v2106
    %v2340 = vmul.f32 %v1991, %v2106
    %v2341 = vmul.f32 %v1996, %v2106
    %v2342 = vmul.f32 %v2001, %v2106
    %v2343 = vmul.f32 %v2006, %v2106
    %v2344 = vmul.f32 %v2011, %v2106
    %v2345 = vmul.f32 %v2016, %v2106
    %v2346 = vmul.f32 %v2021, %v2106
    %v2347 = vmul.f32 %v2026, %v2106
    %v2348 = vmul.f32 %v2031, %v2106
    %v2349 = vmul.f32 %v2036, %v2106
    %v2350 = vmul.f32 %v2041, %v2106
    %v2351 = vmul.f32 %v2046, %v2106
    %v2352 = vmul.f32 %v2051, %v2106
    %v2353 = vmul.f32 %v2056, %v2106
    %v2354 = vmul.f32 %v2061, %v2106
    %v2355 = vmul.f32 %v2066, %v2106
    %v2356 = vmul.f32 %v2071, %v2106
    %v2357 = vmul.f32 %v2076, %v2106
    %v2358 = vmul.f32 %v2081, %v2106
    %v2359 = vmul.f32 %v2086, %v2106
    %v2360 = vmul.f32 %v2091, %v2106
    %v2361 = vmul.f32 %v2096, %v2106
    %v2362 = vmul.f32 %v2101, %v2106
    %v2364 = vlaneseq
    %v2365 = vshrl.u32 %v2364, 7
    %v2366 = vsub.s32 0, %v2365
    %v2367 = vrot.slane %v822, %v2366
    %v2369 = vadd.f32 %v2367, %v2107
    %v2370 = vadd.f32 %v2367, %v2108
    %v2371 = vadd.f32 %v2367, %v2109
    %v2372 = vadd.f32 %v2367, %v2110
    %v2373 = vadd.f32 %v2367, %v2111
    %v2374 = vadd.f32 %v2367, %v2112
    %v2375 = vadd.f32 %v2367, %v2113
    %v2376 = vadd.f32 %v2367, %v2114
    %v2377 = vadd.f32 %v2367, %v2115
    %v2378 = vadd.f32 %v2367, %v2116
    %v2379 = vadd.f32 %v2367, %v2117
    %v2380 = vadd.f32 %v2367, %v2118
    %v2381 = vadd.f32 %v2367, %v2119
    %v2382 = vadd.f32 %v2367, %v2120
    %v2383 = vadd.f32 %v2367, %v2121
    %v2384 = vadd.f32 %v2367, %v2122
    %v2385 = vadd.f32 %v2367, %v2123
    %v2386 = vadd.f32 %v2367, %v2124
    %v2387 = vadd.f32 %v2367, %v2125
    %v2388 = vadd.f32 %v2367, %v2126
    %v2389 = vadd.f32 %v2367, %v2127
    %v2390 = vadd.f32 %v2367, %v2128
    %v2391 = vadd.f32 %v2367, %v2129
    %v2392 = vadd.f32 %v2367, %v2130
    %v2393 = vadd.f32 %v2367, %v2131
    %v2394 = vadd.f32 %v2367, %v2132
    %v2395 = vadd.f32 %v2367, %v2133
    %v2396 = vadd.f32 %v2367, %v2134
    %v2397 = vadd.f32 %v2367, %v2135
    %v2398 = vadd.f32 %v2367, %v2136
    %v2399 = vadd.f32 %v2367, %v2137
    %v2400 = vadd.f32 %v2367, %v2138
    %v2401 = vadd.f32 %v2367, %v2139
    %v2402 = vadd.f32 %v2367, %v2140
    %v2403 = vadd.f32 %v2367, %v2141
    %v2404 = vadd.f32 %v2367, %v2142
    %v2405 = vadd.f32 %v2367, %v2143
    %v2406 = vadd.f32 %v2367, %v2144
    %v2407 = vadd.f32 %v2367, %v2145
    %v2408 = vadd.f32 %v2367, %v2146
    %v2409 = vadd.f32 %v2367, %v2147
    %v2410 = vadd.f32 %v2367, %v2148
    %v2411 = vadd.f32 %v2367, %v2149
    %v2412 = vadd.f32 %v2367, %v2150
    %v2413 = vadd.f32 %v2367, %v2151
    %v2414 = vadd.f32 %v2367, %v2152
    %v2415 = vadd.f32 %v2367, %v2153
    %v2416 = vadd.f32 %v2367, %v2154
    %v2417 = vadd.f32 %v2367, %v2155
    %v2418 = vadd.f32 %v2367, %v2156
    %v2419 = vadd.f32 %v2367, %v2157
    %v2420 = vadd.f32 %v2367, %v2158
    %v2421 = vadd.f32 %v2367, %v2159
    %v2422 = vadd.f32 %v2367, %v2160
    %v2423 = vadd.f32 %v2367, %v2161
    %v2424 = vadd.f32 %v2367, %v2162
    %v2425 = vadd.f32 %v2367, %v2163
    %v2426 = vadd.f32 %v2367, %v2164
    %v2427 = vadd.f32 %v2367, %v2165
    %v2428 = vadd.f32 %v2367, %v2166
    %v2429 = vadd.f32 %v2367, %v2167
    %v2430 = vadd.f32 %v2367, %v2168
    %v2431 = vadd.f32 %v2367, %v2169
    %v2432 = vadd.f32 %v2367, %v2170
    %v2433 = vadd.f32 %v2367, %v2171
    %v2434 = vadd.f32 %v2367, %v2172
    %v2435 = vadd.f32 %v2367, %v2173
    %v2436 = vadd.f32 %v2367, %v2174
    %v2437 = vadd.f32 %v2367, %v2175
    %v2438 = vadd.f32 %v2367, %v2176
    %v2439 = vadd.f32 %v2367, %v2177
    %v2440 = vadd.f32 %v2367, %v2178
    %v2441 = vadd.f32 %v2367, %v2179
    %v2442 = vadd.f32 %v2367, %v2180
    %v2443 = vadd.f32 %v2367, %v2181
    %v2444 = vadd.f32 %v2367, %v2182
    %v2445 = vadd.f32 %v2367, %v2183
    %v2446 = vadd.f32 %v2367, %v2184
    %v2447 = vadd.f32 %v2367, %v2185
    %v2448 = vadd.f32 %v2367, %v2186
    %v2449 = vadd.f32 %v2367, %v2187
    %v2450 = vadd.f32 %v2367, %v2188
    %v2451 = vadd.f32 %v2367, %v2189
    %v2452 = vadd.f32 %v2367, %v2190
    %v2453 = vadd.f32 %v2367, %v2191
    %v2454 = vadd.f32 %v2367, %v2192
    %v2455 = vadd.f32 %v2367, %v2193
    %v2456 = vadd.f32 %v2367, %v2194
    %v2457 = vadd.f32 %v2367, %v2195
    %v2458 = vadd.f32 %v2367, %v2196
    %v2459 = vadd.f32 %v2367, %v2197
    %v2460 = vadd.f32 %v2367, %v2198
    %v2461 = vadd.f32 %v2367, %v2199
    %v2462 = vadd.f32 %v2367, %v2200
    %v2463 = vadd.f32 %v2367, %v2201
    %v2464 = vadd.f32 %v2367, %v2202
    %v2465 = vadd.f32 %v2367, %v2203
    %v2466 = vadd.f32 %v2367, %v2204
    %v2467 = vadd.f32 %v2367, %v2205
    %v2468 = vadd.f32 %v2367, %v2206
    %v2469 = vadd.f32 %v2367, %v2207
    %v2470 = vadd.f32 %v2367, %v2208
    %v2471 = vadd.f32 %v2367, %v2209
    %v2472 = vadd.f32 %v2367, %v2210
    %v2473 = vadd.f32 %v2367, %v2211
    %v2474 = vadd.f32 %v2367, %v2212
    %v2475 = vadd.f32 %v2367, %v2213
    %v2476 = vadd.f32 %v2367, %v2214
    %v2477 = vadd.f32 %v2367, %v2215
    %v2478 = vadd.f32 %v2367, %v2216
    %v2479 = vadd.f32 %v2367, %v2217
    %v2480 = vadd.f32 %v2367, %v2218
    %v2481 = vadd.f32 %v2367, %v2219
    %v2482 = vadd.f32 %v2367, %v2220
    %v2483 = vadd.f32 %v2367, %v2221
    %v2484 = vadd.f32 %v2367, %v2222
    %v2485 = vadd.f32 %v2367, %v2223
    %v2486 = vadd.f32 %v2367, %v2224
    %v2487 = vadd.f32 %v2367, %v2225
    %v2488 = vadd.f32 %v2367, %v2226
    %v2489 = vadd.f32 %v2367, %v2227
    %v2490 = vadd.f32 %v2367, %v2228
    %v2491 = vadd.f32 %v2367, %v2229
    %v2492 = vadd.f32 %v2367, %v2230
    %v2493 = vadd.f32 %v2367, %v2231
    %v2494 = vadd.f32 %v2367, %v2232
    %v2495 = vadd.f32 %v2367, %v2233
    %v2496 = vadd.f32 %v2367, %v2234
    %v2497 = vadd.f32 %v2367, %v2235
    %v2498 = vadd.f32 %v2367, %v2236
    %v2499 = vadd.f32 %v2367, %v2237
    %v2500 = vadd.f32 %v2367, %v2238
    %v2501 = vadd.f32 %v2367, %v2239
    %v2502 = vadd.f32 %v2367, %v2240
    %v2503 = vadd.f32 %v2367, %v2241
    %v2504 = vadd.f32 %v2367, %v2242
    %v2505 = vadd.f32 %v2367, %v2243
    %v2506 = vadd.f32 %v2367, %v2244
    %v2507 = vadd.f32 %v2367, %v2245
    %v2508 = vadd.f32 %v2367, %v2246
    %v2509 = vadd.f32 %v2367, %v2247
    %v2510 = vadd.f32 %v2367, %v2248
    %v2511 = vadd.f32 %v2367, %v2249
    %v2512 = vadd.f32 %v2367, %v2250
    %v2513 = vadd.f32 %v2367, %v2251
    %v2514 = vadd.f32 %v2367, %v2252
    %v2515 = vadd.f32 %v2367, %v2253
    %v2516 = vadd.f32 %v2367, %v2254
    %v2517 = vadd.f32 %v2367, %v2255
    %v2518 = vadd.f32 %v2367, %v2256
    %v2519 = vadd.f32 %v2367, %v2257
    %v2520 = vadd.f32 %v2367, %v2258
    %v2521 = vadd.f32 %v2367, %v2259
    %v2522 = vadd.f32 %v2367, %v2260
    %v2523 = vadd.f32 %v2367, %v2261
    %v2524 = vadd.f32 %v2367, %v2262
    %v2525 = vadd.f32 %v2367, %v2263
    %v2526 = vadd.f32 %v2367, %v2264
    %v2527 = vadd.f32 %v2367, %v2265
    %v2528 = vadd.f32 %v2367, %v2266
    %v2529 = vadd.f32 %v2367, %v2267
    %v2530 = vadd.f32 %v2367, %v2268
    %v2531 = vadd.f32 %v2367, %v2269
    %v2532 = vadd.f32 %v2367, %v2270
    %v2533 = vadd.f32 %v2367, %v2271
    %v2534 = vadd.f32 %v2367, %v2272
    %v2535 = vadd.f32 %v2367, %v2273
    %v2536 = vadd.f32 %v2367, %v2274
    %v2537 = vadd.f32 %v2367, %v2275
    %v2538 = vadd.f32 %v2367, %v2276
    %v2539 = vadd.f32 %v2367, %v2277
    %v2540 = vadd.f32 %v2367, %v2278
    %v2541 = vadd.f32 %v2367, %v2279
    %v2542 = vadd.f32 %v2367, %v2280
    %v2543 = vadd.f32 %v2367, %v2281
    %v2544 = vadd.f32 %v2367, %v2282
    %v2545 = vadd.f32 %v2367, %v2283
    %v2546 = vadd.f32 %v2367, %v2284
    %v2547 = vadd.f32 %v2367, %v2285
    %v2548 = vadd.f32 %v2367, %v2286
    %v2549 = vadd.f32 %v2367, %v2287
    %v2550 = vadd.f32 %v2367, %v2288
    %v2551 = vadd.f32 %v2367, %v2289
    %v2552 = vadd.f32 %v2367, %v2290
    %v2553 = vadd.f32 %v2367, %v2291
    %v2554 = vadd.f32 %v2367, %v2292
    %v2555 = vadd.f32 %v2367, %v2293
    %v2556 = vadd.f32 %v2367, %v2294
    %v2557 = vadd.f32 %v2367, %v2295
    %v2558 = vadd.f32 %v2367, %v2296
    %v2559 = vadd.f32 %v2367, %v2297
    %v2560 = vadd.f32 %v2367, %v2298
    %v2561 = vadd.f32 %v2367, %v2299
    %v2562 = vadd.f32 %v2367, %v2300
    %v2563 = vadd.f32 %v2367, %v2301
    %v2564 = vadd.f32 %v2367, %v2302
    %v2565 = vadd.f32 %v2367, %v2303
    %v2566 = vadd.f32 %v2367, %v2304
    %v2567 = vadd.f32 %v2367, %v2305
    %v2568 = vadd.f32 %v2367, %v2306
    %v2569 = vadd.f32 %v2367, %v2307
    %v2570 = vadd.f32 %v2367, %v2308
    %v2571 = vadd.f32 %v2367, %v2309
    %v2572 = vadd.f32 %v2367, %v2310
    %v2573 = vadd.f32 %v2367, %v2311
    %v2574 = vadd.f32 %v2367, %v2312
    %v2575 = vadd.f32 %v2367, %v2313
    %v2576 = vadd.f32 %v2367, %v2314
    %v2577 = vadd.f32 %v2367, %v2315
    %v2578 = vadd.f32 %v2367, %v2316
    %v2579 = vadd.f32 %v2367, %v2317
    %v2580 = vadd.f32 %v2367, %v2318
    %v2581 = vadd.f32 %v2367, %v2319
    %v2582 = vadd.f32 %v2367, %v2320
    %v2583 = vadd.f32 %v2367, %v2321
    %v2584 = vadd.f32 %v2367, %v2322
    %v2585 = vadd.f32 %v2367, %v2323
    %v2586 = vadd.f32 %v2367, %v2324
    %v2587 = vadd.f32 %v2367, %v2325
    %v2588 = vadd.f32 %v2367, %v2326
    %v2589 = vadd.f32 %v2367, %v2327
    %v2590 = vadd.f32 %v2367, %v2328
    %v2591 = vadd.f32 %v2367, %v2329
    %v2592 = vadd.f32 %v2367, %v2330
    %v2593 = vadd.f32 %v2367, %v2331
    %v2594 = vadd.f32 %v2367, %v2332
    %v2595 = vadd.f32 %v2367, %v2333
    %v2596 = vadd.f32 %v2367, %v2334
    %v2597 = vadd.f32 %v2367, %v2335
    %v2598 = vadd.f32 %v2367, %v2336
    %v2599 = vadd.f32 %v2367, %v2337
    %v2600 = vadd.f32 %v2367, %v2338
    %v2601 = vadd.f32 %v2367, %v2339
    %v2602 = vadd.f32 %v2367, %v2340
    %v2603 = vadd.f32 %v2367, %v2341
    %v2604 = vadd.f32 %v2367, %v2342
    %v2605 = vadd.f32 %v2367, %v2343
    %v2606 = vadd.f32 %v2367, %v2344
    %v2607 = vadd.f32 %v2367, %v2345
    %v2608 = vadd.f32 %v2367, %v2346
    %v2609 = vadd.f32 %v2367, %v2347
    %v2610 = vadd.f32 %v2367, %v2348
    %v2611 = vadd.f32 %v2367, %v2349
    %v2612 = vadd.f32 %v2367, %v2350
    %v2613 = vadd.f32 %v2367, %v2351
    %v2614 = vadd.f32 %v2367, %v2352
    %v2615 = vadd.f32 %v2367, %v2353
    %v2616 = vadd.f32 %v2367, %v2354
    %v2617 = vadd.f32 %v2367, %v2355
    %v2618 = vadd.f32 %v2367, %v2356
    %v2619 = vadd.f32 %v2367, %v2357
    %v2620 = vadd.f32 %v2367, %v2358
    %v2621 = vadd.f32 %v2367, %v2359
    %v2622 = vadd.f32 %v2367, %v2360
    %v2623 = vadd.f32 %v2367, %v2361
    %v2624 = vadd.f32 %v2367, %v2362
    %2625 = vset.pattern.permute.xlu0 1
    %2626 = vperm.xlu0 %2625, %v565
    %v2627 = vpop.permute.xlu0 %2626
    %2629 = vset.pattern.permute.xlu0 1
    %2630 = vperm.xlu0 %2629, %v566
    %v2631 = vpop.permute.xlu0 %2630
    %2633 = vset.pattern.permute.xlu0 1
    %2634 = vperm.xlu0 %2633, %v567
    %v2635 = vpop.permute.xlu0 %2634
    %2637 = vset.pattern.permute.xlu0 1
    %2638 = vperm.xlu0 %2637, %v568
    %v2639 = vpop.permute.xlu0 %2638
    %2641 = vset.pattern.permute.xlu0 1
    %2642 = vperm.xlu0 %2641, %v569
    %v2643 = vpop.permute.xlu0 %2642
    %2645 = vset.pattern.permute.xlu0 1
    %2646 = vperm.xlu0 %2645, %v570
    %v2647 = vpop.permute.xlu0 %2646
    %2649 = vset.pattern.permute.xlu0 1
    %2650 = vperm.xlu0 %2649, %v571
    %v2651 = vpop.permute.xlu0 %2650
    %2653 = vset.pattern.permute.xlu0 1
    %2654 = vperm.xlu0 %2653, %v572
    %v2655 = vpop.permute.xlu0 %2654
    %2657 = vset.pattern.permute.xlu0 1
    %2658 = vperm.xlu0 %2657, %v573
    %v2659 = vpop.permute.xlu0 %2658
    %2661 = vset.pattern.permute.xlu0 1
    %2662 = vperm.xlu0 %2661, %v574
    %v2663 = vpop.permute.xlu0 %2662
    %2665 = vset.pattern.permute.xlu0 1
    %2666 = vperm.xlu0 %2665, %v575
    %v2667 = vpop.permute.xlu0 %2666
    %2669 = vset.pattern.permute.xlu0 1
    %2670 = vperm.xlu0 %2669, %v576
    %v2671 = vpop.permute.xlu0 %2670
    %2673 = vset.pattern.permute.xlu0 1
    %2674 = vperm.xlu0 %2673, %v577
    %v2675 = vpop.permute.xlu0 %2674
    %2677 = vset.pattern.permute.xlu0 1
    %2678 = vperm.xlu0 %2677, %v578
    %v2679 = vpop.permute.xlu0 %2678
    %2681 = vset.pattern.permute.xlu0 1
    %2682 = vperm.xlu0 %2681, %v579
    %v2683 = vpop.permute.xlu0 %2682
    %2685 = vset.pattern.permute.xlu0 1
    %2686 = vperm.xlu0 %2685, %v580
    %v2687 = vpop.permute.xlu0 %2686
    %2689 = vset.pattern.permute.xlu0 1
    %2690 = vperm.xlu0 %2689, %v581
    %v2691 = vpop.permute.xlu0 %2690
    %2693 = vset.pattern.permute.xlu0 1
    %2694 = vperm.xlu0 %2693, %v582
    %v2695 = vpop.permute.xlu0 %2694
    %2697 = vset.pattern.permute.xlu0 1
    %2698 = vperm.xlu0 %2697, %v583
    %v2699 = vpop.permute.xlu0 %2698
    %2701 = vset.pattern.permute.xlu0 1
    %2702 = vperm.xlu0 %2701, %v584
    %v2703 = vpop.permute.xlu0 %2702
    %2705 = vset.pattern.permute.xlu0 1
    %2706 = vperm.xlu0 %2705, %v585
    %v2707 = vpop.permute.xlu0 %2706
    %2709 = vset.pattern.permute.xlu0 1
    %2710 = vperm.xlu0 %2709, %v586
    %v2711 = vpop.permute.xlu0 %2710
    %2713 = vset.pattern.permute.xlu0 1
    %2714 = vperm.xlu0 %2713, %v587
    %v2715 = vpop.permute.xlu0 %2714
    %2717 = vset.pattern.permute.xlu0 1
    %2718 = vperm.xlu0 %2717, %v588
    %v2719 = vpop.permute.xlu0 %2718
    %2721 = vset.pattern.permute.xlu0 1
    %2722 = vperm.xlu0 %2721, %v589
    %v2723 = vpop.permute.xlu0 %2722
    %2725 = vset.pattern.permute.xlu0 1
    %2726 = vperm.xlu0 %2725, %v590
    %v2727 = vpop.permute.xlu0 %2726
    %2729 = vset.pattern.permute.xlu0 1
    %2730 = vperm.xlu0 %2729, %v591
    %v2731 = vpop.permute.xlu0 %2730
    %2733 = vset.pattern.permute.xlu0 1
    %2734 = vperm.xlu0 %2733, %v592
    %v2735 = vpop.permute.xlu0 %2734
    %2737 = vset.pattern.permute.xlu0 1
    %2738 = vperm.xlu0 %2737, %v593
    %v2739 = vpop.permute.xlu0 %2738
    %2741 = vset.pattern.permute.xlu0 1
    %2742 = vperm.xlu0 %2741, %v594
    %v2743 = vpop.permute.xlu0 %2742
    %2745 = vset.pattern.permute.xlu0 1
    %2746 = vperm.xlu0 %2745, %v595
    %v2747 = vpop.permute.xlu0 %2746
    %2749 = vset.pattern.permute.xlu0 1
    %2750 = vperm.xlu0 %2749, %v596
    %v2751 = vpop.permute.xlu0 %2750
    %2753 = vset.pattern.permute.xlu0 1
    %2754 = vperm.xlu0 %2753, %v597
    %v2755 = vpop.permute.xlu0 %2754
    %2757 = vset.pattern.permute.xlu0 1
    %2758 = vperm.xlu0 %2757, %v598
    %v2759 = vpop.permute.xlu0 %2758
    %2761 = vset.pattern.permute.xlu0 1
    %2762 = vperm.xlu0 %2761, %v599
    %v2763 = vpop.permute.xlu0 %2762
    %2765 = vset.pattern.permute.xlu0 1
    %2766 = vperm.xlu0 %2765, %v600
    %v2767 = vpop.permute.xlu0 %2766
    %2769 = vset.pattern.permute.xlu0 1
    %2770 = vperm.xlu0 %2769, %v601
    %v2771 = vpop.permute.xlu0 %2770
    %2773 = vset.pattern.permute.xlu0 1
    %2774 = vperm.xlu0 %2773, %v602
    %v2775 = vpop.permute.xlu0 %2774
    %2777 = vset.pattern.permute.xlu0 1
    %2778 = vperm.xlu0 %2777, %v603
    %v2779 = vpop.permute.xlu0 %2778
    %2781 = vset.pattern.permute.xlu0 1
    %2782 = vperm.xlu0 %2781, %v604
    %v2783 = vpop.permute.xlu0 %2782
    %2785 = vset.pattern.permute.xlu0 1
    %2786 = vperm.xlu0 %2785, %v605
    %v2787 = vpop.permute.xlu0 %2786
    %2789 = vset.pattern.permute.xlu0 1
    %2790 = vperm.xlu0 %2789, %v606
    %v2791 = vpop.permute.xlu0 %2790
    %2793 = vset.pattern.permute.xlu0 1
    %2794 = vperm.xlu0 %2793, %v607
    %v2795 = vpop.permute.xlu0 %2794
    %2797 = vset.pattern.permute.xlu0 1
    %2798 = vperm.xlu0 %2797, %v608
    %v2799 = vpop.permute.xlu0 %2798
    %2801 = vset.pattern.permute.xlu0 1
    %2802 = vperm.xlu0 %2801, %v609
    %v2803 = vpop.permute.xlu0 %2802
    %2805 = vset.pattern.permute.xlu0 1
    %2806 = vperm.xlu0 %2805, %v610
    %v2807 = vpop.permute.xlu0 %2806
    %2809 = vset.pattern.permute.xlu0 1
    %2810 = vperm.xlu0 %2809, %v611
    %v2811 = vpop.permute.xlu0 %2810
    %2813 = vset.pattern.permute.xlu0 1
    %2814 = vperm.xlu0 %2813, %v612
    %v2815 = vpop.permute.xlu0 %2814
    %2817 = vset.pattern.permute.xlu0 1
    %2818 = vperm.xlu0 %2817, %v613
    %v2819 = vpop.permute.xlu0 %2818
    %2821 = vset.pattern.permute.xlu0 1
    %2822 = vperm.xlu0 %2821, %v614
    %v2823 = vpop.permute.xlu0 %2822
    %2825 = vset.pattern.permute.xlu0 1
    %2826 = vperm.xlu0 %2825, %v615
    %v2827 = vpop.permute.xlu0 %2826
    %2829 = vset.pattern.permute.xlu0 1
    %2830 = vperm.xlu0 %2829, %v616
    %v2831 = vpop.permute.xlu0 %2830
    %2833 = vset.pattern.permute.xlu0 1
    %2834 = vperm.xlu0 %2833, %v617
    %v2835 = vpop.permute.xlu0 %2834
    %2837 = vset.pattern.permute.xlu0 1
    %2838 = vperm.xlu0 %2837, %v618
    %v2839 = vpop.permute.xlu0 %2838
    %2841 = vset.pattern.permute.xlu0 1
    %2842 = vperm.xlu0 %2841, %v619
    %v2843 = vpop.permute.xlu0 %2842
    %2845 = vset.pattern.permute.xlu0 1
    %2846 = vperm.xlu0 %2845, %v620
    %v2847 = vpop.permute.xlu0 %2846
    %2849 = vset.pattern.permute.xlu0 1
    %2850 = vperm.xlu0 %2849, %v621
    %v2851 = vpop.permute.xlu0 %2850
    %2853 = vset.pattern.permute.xlu0 1
    %2854 = vperm.xlu0 %2853, %v622
    %v2855 = vpop.permute.xlu0 %2854
    %2857 = vset.pattern.permute.xlu0 1
    %2858 = vperm.xlu0 %2857, %v623
    %v2859 = vpop.permute.xlu0 %2858
    %2861 = vset.pattern.permute.xlu0 1
    %2862 = vperm.xlu0 %2861, %v624
    %v2863 = vpop.permute.xlu0 %2862
    %2865 = vset.pattern.permute.xlu0 1
    %2866 = vperm.xlu0 %2865, %v625
    %v2867 = vpop.permute.xlu0 %2866
    %2869 = vset.pattern.permute.xlu0 1
    %2870 = vperm.xlu0 %2869, %v626
    %v2871 = vpop.permute.xlu0 %2870
    %2873 = vset.pattern.permute.xlu0 1
    %2874 = vperm.xlu0 %2873, %v627
    %v2875 = vpop.permute.xlu0 %2874
    %2877 = vset.pattern.permute.xlu0 1
    %2878 = vperm.xlu0 %2877, %v628
    %v2879 = vpop.permute.xlu0 %2878
    %2881 = vset.pattern.permute.xlu0 1
    %2882 = vperm.xlu0 %2881, %v629
    %v2883 = vpop.permute.xlu0 %2882
    %2885 = vset.pattern.permute.xlu0 1
    %2886 = vperm.xlu0 %2885, %v630
    %v2887 = vpop.permute.xlu0 %2886
    %2889 = vset.pattern.permute.xlu0 1
    %2890 = vperm.xlu0 %2889, %v631
    %v2891 = vpop.permute.xlu0 %2890
    %2893 = vset.pattern.permute.xlu0 1
    %2894 = vperm.xlu0 %2893, %v632
    %v2895 = vpop.permute.xlu0 %2894
    %2897 = vset.pattern.permute.xlu0 1
    %2898 = vperm.xlu0 %2897, %v633
    %v2899 = vpop.permute.xlu0 %2898
    %2901 = vset.pattern.permute.xlu0 1
    %2902 = vperm.xlu0 %2901, %v634
    %v2903 = vpop.permute.xlu0 %2902
    %2905 = vset.pattern.permute.xlu0 1
    %2906 = vperm.xlu0 %2905, %v635
    %v2907 = vpop.permute.xlu0 %2906
    %2909 = vset.pattern.permute.xlu0 1
    %2910 = vperm.xlu0 %2909, %v636
    %v2911 = vpop.permute.xlu0 %2910
    %2913 = vset.pattern.permute.xlu0 1
    %2914 = vperm.xlu0 %2913, %v637
    %v2915 = vpop.permute.xlu0 %2914
    %2917 = vset.pattern.permute.xlu0 1
    %2918 = vperm.xlu0 %2917, %v638
    %v2919 = vpop.permute.xlu0 %2918
    %2921 = vset.pattern.permute.xlu0 1
    %2922 = vperm.xlu0 %2921, %v639
    %v2923 = vpop.permute.xlu0 %2922
    %2925 = vset.pattern.permute.xlu0 1
    %2926 = vperm.xlu0 %2925, %v640
    %v2927 = vpop.permute.xlu0 %2926
    %2929 = vset.pattern.permute.xlu0 1
    %2930 = vperm.xlu0 %2929, %v641
    %v2931 = vpop.permute.xlu0 %2930
    %2933 = vset.pattern.permute.xlu0 1
    %2934 = vperm.xlu0 %2933, %v642
    %v2935 = vpop.permute.xlu0 %2934
    %2937 = vset.pattern.permute.xlu0 1
    %2938 = vperm.xlu0 %2937, %v643
    %v2939 = vpop.permute.xlu0 %2938
    %2941 = vset.pattern.permute.xlu0 1
    %2942 = vperm.xlu0 %2941, %v644
    %v2943 = vpop.permute.xlu0 %2942
    %2945 = vset.pattern.permute.xlu0 1
    %2946 = vperm.xlu0 %2945, %v645
    %v2947 = vpop.permute.xlu0 %2946
    %2949 = vset.pattern.permute.xlu0 1
    %2950 = vperm.xlu0 %2949, %v646
    %v2951 = vpop.permute.xlu0 %2950
    %2953 = vset.pattern.permute.xlu0 1
    %2954 = vperm.xlu0 %2953, %v647
    %v2955 = vpop.permute.xlu0 %2954
    %2957 = vset.pattern.permute.xlu0 1
    %2958 = vperm.xlu0 %2957, %v648
    %v2959 = vpop.permute.xlu0 %2958
    %2961 = vset.pattern.permute.xlu0 1
    %2962 = vperm.xlu0 %2961, %v649
    %v2963 = vpop.permute.xlu0 %2962
    %2965 = vset.pattern.permute.xlu0 1
    %2966 = vperm.xlu0 %2965, %v650
    %v2967 = vpop.permute.xlu0 %2966
    %2969 = vset.pattern.permute.xlu0 1
    %2970 = vperm.xlu0 %2969, %v651
    %v2971 = vpop.permute.xlu0 %2970
    %2973 = vset.pattern.permute.xlu0 1
    %2974 = vperm.xlu0 %2973, %v652
    %v2975 = vpop.permute.xlu0 %2974
    %2977 = vset.pattern.permute.xlu0 1
    %2978 = vperm.xlu0 %2977, %v653
    %v2979 = vpop.permute.xlu0 %2978
    %2981 = vset.pattern.permute.xlu0 1
    %2982 = vperm.xlu0 %2981, %v654
    %v2983 = vpop.permute.xlu0 %2982
    %2985 = vset.pattern.permute.xlu0 1
    %2986 = vperm.xlu0 %2985, %v655
    %v2987 = vpop.permute.xlu0 %2986
    %2989 = vset.pattern.permute.xlu0 1
    %2990 = vperm.xlu0 %2989, %v656
    %v2991 = vpop.permute.xlu0 %2990
    %2993 = vset.pattern.permute.xlu0 1
    %2994 = vperm.xlu0 %2993, %v657
    %v2995 = vpop.permute.xlu0 %2994
    %2997 = vset.pattern.permute.xlu0 1
    %2998 = vperm.xlu0 %2997, %v658
    %v2999 = vpop.permute.xlu0 %2998
    %3001 = vset.pattern.permute.xlu0 1
    %3002 = vperm.xlu0 %3001, %v659
    %v3003 = vpop.permute.xlu0 %3002
    %3005 = vset.pattern.permute.xlu0 1
    %3006 = vperm.xlu0 %3005, %v660
    %v3007 = vpop.permute.xlu0 %3006
    %3009 = vset.pattern.permute.xlu0 1
    %3010 = vperm.xlu0 %3009, %v661
    %v3011 = vpop.permute.xlu0 %3010
    %3013 = vset.pattern.permute.xlu0 1
    %3014 = vperm.xlu0 %3013, %v662
    %v3015 = vpop.permute.xlu0 %3014
    %3017 = vset.pattern.permute.xlu0 1
    %3018 = vperm.xlu0 %3017, %v663
    %v3019 = vpop.permute.xlu0 %3018
    %3021 = vset.pattern.permute.xlu0 1
    %3022 = vperm.xlu0 %3021, %v664
    %v3023 = vpop.permute.xlu0 %3022
    %3025 = vset.pattern.permute.xlu0 1
    %3026 = vperm.xlu0 %3025, %v665
    %v3027 = vpop.permute.xlu0 %3026
    %3029 = vset.pattern.permute.xlu0 1
    %3030 = vperm.xlu0 %3029, %v666
    %v3031 = vpop.permute.xlu0 %3030
    %3033 = vset.pattern.permute.xlu0 1
    %3034 = vperm.xlu0 %3033, %v667
    %v3035 = vpop.permute.xlu0 %3034
    %3037 = vset.pattern.permute.xlu0 1
    %3038 = vperm.xlu0 %3037, %v668
    %v3039 = vpop.permute.xlu0 %3038
    %3041 = vset.pattern.permute.xlu0 1
    %3042 = vperm.xlu0 %3041, %v669
    %v3043 = vpop.permute.xlu0 %3042
    %3045 = vset.pattern.permute.xlu0 1
    %3046 = vperm.xlu0 %3045, %v670
    %v3047 = vpop.permute.xlu0 %3046
    %3049 = vset.pattern.permute.xlu0 1
    %3050 = vperm.xlu0 %3049, %v671
    %v3051 = vpop.permute.xlu0 %3050
    %3053 = vset.pattern.permute.xlu0 1
    %3054 = vperm.xlu0 %3053, %v672
    %v3055 = vpop.permute.xlu0 %3054
    %3057 = vset.pattern.permute.xlu0 1
    %3058 = vperm.xlu0 %3057, %v673
    %v3059 = vpop.permute.xlu0 %3058
    %3061 = vset.pattern.permute.xlu0 1
    %3062 = vperm.xlu0 %3061, %v674
    %v3063 = vpop.permute.xlu0 %3062
    %3065 = vset.pattern.permute.xlu0 1
    %3066 = vperm.xlu0 %3065, %v675
    %v3067 = vpop.permute.xlu0 %3066
    %3069 = vset.pattern.permute.xlu0 1
    %3070 = vperm.xlu0 %3069, %v676
    %v3071 = vpop.permute.xlu0 %3070
    %3073 = vset.pattern.permute.xlu0 1
    %3074 = vperm.xlu0 %3073, %v677
    %v3075 = vpop.permute.xlu0 %3074
    %3077 = vset.pattern.permute.xlu0 1
    %3078 = vperm.xlu0 %3077, %v678
    %v3079 = vpop.permute.xlu0 %3078
    %3081 = vset.pattern.permute.xlu0 1
    %3082 = vperm.xlu0 %3081, %v679
    %v3083 = vpop.permute.xlu0 %3082
    %3085 = vset.pattern.permute.xlu0 1
    %3086 = vperm.xlu0 %3085, %v680
    %v3087 = vpop.permute.xlu0 %3086
    %3089 = vset.pattern.permute.xlu0 1
    %3090 = vperm.xlu0 %3089, %v681
    %v3091 = vpop.permute.xlu0 %3090
    %3093 = vset.pattern.permute.xlu0 1
    %3094 = vperm.xlu0 %3093, %v682
    %v3095 = vpop.permute.xlu0 %3094
    %3097 = vset.pattern.permute.xlu0 1
    %3098 = vperm.xlu0 %3097, %v683
    %v3099 = vpop.permute.xlu0 %3098
    %3101 = vset.pattern.permute.xlu0 1
    %3102 = vperm.xlu0 %3101, %v684
    %v3103 = vpop.permute.xlu0 %3102
    %3105 = vset.pattern.permute.xlu0 1
    %3106 = vperm.xlu0 %3105, %v685
    %v3107 = vpop.permute.xlu0 %3106
    %3109 = vset.pattern.permute.xlu0 1
    %3110 = vperm.xlu0 %3109, %v686
    %v3111 = vpop.permute.xlu0 %3110
    %3113 = vset.pattern.permute.xlu0 1
    %3114 = vperm.xlu0 %3113, %v687
    %v3115 = vpop.permute.xlu0 %3114
    %3117 = vset.pattern.permute.xlu0 1
    %3118 = vperm.xlu0 %3117, %v688
    %v3119 = vpop.permute.xlu0 %3118
    %3121 = vset.pattern.permute.xlu0 1
    %3122 = vperm.xlu0 %3121, %v689
    %v3123 = vpop.permute.xlu0 %3122
    %3125 = vset.pattern.permute.xlu0 1
    %3126 = vperm.xlu0 %3125, %v690
    %v3127 = vpop.permute.xlu0 %3126
    %3129 = vset.pattern.permute.xlu0 1
    %3130 = vperm.xlu0 %3129, %v691
    %v3131 = vpop.permute.xlu0 %3130
    %3133 = vset.pattern.permute.xlu0 1
    %3134 = vperm.xlu0 %3133, %v692
    %v3135 = vpop.permute.xlu0 %3134
    %3137 = vset.pattern.permute.xlu0 1
    %3138 = vperm.xlu0 %3137, %v693
    %v3139 = vpop.permute.xlu0 %3138
    %3141 = vset.pattern.permute.xlu0 1
    %3142 = vperm.xlu0 %3141, %v694
    %v3143 = vpop.permute.xlu0 %3142
    %3145 = vset.pattern.permute.xlu0 1
    %3146 = vperm.xlu0 %3145, %v695
    %v3147 = vpop.permute.xlu0 %3146
    %3149 = vset.pattern.permute.xlu0 1
    %3150 = vperm.xlu0 %3149, %v696
    %v3151 = vpop.permute.xlu0 %3150
    %3153 = vset.pattern.permute.xlu0 1
    %3154 = vperm.xlu0 %3153, %v697
    %v3155 = vpop.permute.xlu0 %3154
    %3157 = vset.pattern.permute.xlu0 1
    %3158 = vperm.xlu0 %3157, %v698
    %v3159 = vpop.permute.xlu0 %3158
    %3161 = vset.pattern.permute.xlu0 1
    %3162 = vperm.xlu0 %3161, %v699
    %v3163 = vpop.permute.xlu0 %3162
    %3165 = vset.pattern.permute.xlu0 1
    %3166 = vperm.xlu0 %3165, %v700
    %v3167 = vpop.permute.xlu0 %3166
    %3169 = vset.pattern.permute.xlu0 1
    %3170 = vperm.xlu0 %3169, %v701
    %v3171 = vpop.permute.xlu0 %3170
    %3173 = vset.pattern.permute.xlu0 1
    %3174 = vperm.xlu0 %3173, %v702
    %v3175 = vpop.permute.xlu0 %3174
    %3177 = vset.pattern.permute.xlu0 1
    %3178 = vperm.xlu0 %3177, %v703
    %v3179 = vpop.permute.xlu0 %3178
    %3181 = vset.pattern.permute.xlu0 1
    %3182 = vperm.xlu0 %3181, %v704
    %v3183 = vpop.permute.xlu0 %3182
    %3185 = vset.pattern.permute.xlu0 1
    %3186 = vperm.xlu0 %3185, %v705
    %v3187 = vpop.permute.xlu0 %3186
    %3189 = vset.pattern.permute.xlu0 1
    %3190 = vperm.xlu0 %3189, %v706
    %v3191 = vpop.permute.xlu0 %3190
    %3193 = vset.pattern.permute.xlu0 1
    %3194 = vperm.xlu0 %3193, %v707
    %v3195 = vpop.permute.xlu0 %3194
    %3197 = vset.pattern.permute.xlu0 1
    %3198 = vperm.xlu0 %3197, %v708
    %v3199 = vpop.permute.xlu0 %3198
    %3201 = vset.pattern.permute.xlu0 1
    %3202 = vperm.xlu0 %3201, %v709
    %v3203 = vpop.permute.xlu0 %3202
    %3205 = vset.pattern.permute.xlu0 1
    %3206 = vperm.xlu0 %3205, %v710
    %v3207 = vpop.permute.xlu0 %3206
    %3209 = vset.pattern.permute.xlu0 1
    %3210 = vperm.xlu0 %3209, %v711
    %v3211 = vpop.permute.xlu0 %3210
    %3213 = vset.pattern.permute.xlu0 1
    %3214 = vperm.xlu0 %3213, %v712
    %v3215 = vpop.permute.xlu0 %3214
    %3217 = vset.pattern.permute.xlu0 1
    %3218 = vperm.xlu0 %3217, %v713
    %v3219 = vpop.permute.xlu0 %3218
    %3221 = vset.pattern.permute.xlu0 1
    %3222 = vperm.xlu0 %3221, %v714
    %v3223 = vpop.permute.xlu0 %3222
    %3225 = vset.pattern.permute.xlu0 1
    %3226 = vperm.xlu0 %3225, %v715
    %v3227 = vpop.permute.xlu0 %3226
    %3229 = vset.pattern.permute.xlu0 1
    %3230 = vperm.xlu0 %3229, %v716
    %v3231 = vpop.permute.xlu0 %3230
    %3233 = vset.pattern.permute.xlu0 1
    %3234 = vperm.xlu0 %3233, %v717
    %v3235 = vpop.permute.xlu0 %3234
    %3237 = vset.pattern.permute.xlu0 1
    %3238 = vperm.xlu0 %3237, %v718
    %v3239 = vpop.permute.xlu0 %3238
    %3241 = vset.pattern.permute.xlu0 1
    %3242 = vperm.xlu0 %3241, %v719
    %v3243 = vpop.permute.xlu0 %3242
    %3245 = vset.pattern.permute.xlu0 1
    %3246 = vperm.xlu0 %3245, %v720
    %v3247 = vpop.permute.xlu0 %3246
    %3249 = vset.pattern.permute.xlu0 1
    %3250 = vperm.xlu0 %3249, %v721
    %v3251 = vpop.permute.xlu0 %3250
    %3253 = vset.pattern.permute.xlu0 1
    %3254 = vperm.xlu0 %3253, %v722
    %v3255 = vpop.permute.xlu0 %3254
    %3257 = vset.pattern.permute.xlu0 1
    %3258 = vperm.xlu0 %3257, %v723
    %v3259 = vpop.permute.xlu0 %3258
    %3261 = vset.pattern.permute.xlu0 1
    %3262 = vperm.xlu0 %3261, %v724
    %v3263 = vpop.permute.xlu0 %3262
    %3265 = vset.pattern.permute.xlu0 1
    %3266 = vperm.xlu0 %3265, %v725
    %v3267 = vpop.permute.xlu0 %3266
    %3269 = vset.pattern.permute.xlu0 1
    %3270 = vperm.xlu0 %3269, %v726
    %v3271 = vpop.permute.xlu0 %3270
    %3273 = vset.pattern.permute.xlu0 1
    %3274 = vperm.xlu0 %3273, %v727
    %v3275 = vpop.permute.xlu0 %3274
    %3277 = vset.pattern.permute.xlu0 1
    %3278 = vperm.xlu0 %3277, %v728
    %v3279 = vpop.permute.xlu0 %3278
    %3281 = vset.pattern.permute.xlu0 1
    %3282 = vperm.xlu0 %3281, %v729
    %v3283 = vpop.permute.xlu0 %3282
    %3285 = vset.pattern.permute.xlu0 1
    %3286 = vperm.xlu0 %3285, %v730
    %v3287 = vpop.permute.xlu0 %3286
    %3289 = vset.pattern.permute.xlu0 1
    %3290 = vperm.xlu0 %3289, %v731
    %v3291 = vpop.permute.xlu0 %3290
    %3293 = vset.pattern.permute.xlu0 1
    %3294 = vperm.xlu0 %3293, %v732
    %v3295 = vpop.permute.xlu0 %3294
    %3297 = vset.pattern.permute.xlu0 1
    %3298 = vperm.xlu0 %3297, %v733
    %v3299 = vpop.permute.xlu0 %3298
    %3301 = vset.pattern.permute.xlu0 1
    %3302 = vperm.xlu0 %3301, %v734
    %v3303 = vpop.permute.xlu0 %3302
    %3305 = vset.pattern.permute.xlu0 1
    %3306 = vperm.xlu0 %3305, %v735
    %v3307 = vpop.permute.xlu0 %3306
    %3309 = vset.pattern.permute.xlu0 1
    %3310 = vperm.xlu0 %3309, %v736
    %v3311 = vpop.permute.xlu0 %3310
    %3313 = vset.pattern.permute.xlu0 1
    %3314 = vperm.xlu0 %3313, %v737
    %v3315 = vpop.permute.xlu0 %3314
    %3317 = vset.pattern.permute.xlu0 1
    %3318 = vperm.xlu0 %3317, %v738
    %v3319 = vpop.permute.xlu0 %3318
    %3321 = vset.pattern.permute.xlu0 1
    %3322 = vperm.xlu0 %3321, %v739
    %v3323 = vpop.permute.xlu0 %3322
    %3325 = vset.pattern.permute.xlu0 1
    %3326 = vperm.xlu0 %3325, %v740
    %v3327 = vpop.permute.xlu0 %3326
    %3329 = vset.pattern.permute.xlu0 1
    %3330 = vperm.xlu0 %3329, %v741
    %v3331 = vpop.permute.xlu0 %3330
    %3333 = vset.pattern.permute.xlu0 1
    %3334 = vperm.xlu0 %3333, %v742
    %v3335 = vpop.permute.xlu0 %3334
    %3337 = vset.pattern.permute.xlu0 1
    %3338 = vperm.xlu0 %3337, %v743
    %v3339 = vpop.permute.xlu0 %3338
    %3341 = vset.pattern.permute.xlu0 1
    %3342 = vperm.xlu0 %3341, %v744
    %v3343 = vpop.permute.xlu0 %3342
    %3345 = vset.pattern.permute.xlu0 1
    %3346 = vperm.xlu0 %3345, %v745
    %v3347 = vpop.permute.xlu0 %3346
    %3349 = vset.pattern.permute.xlu0 1
    %3350 = vperm.xlu0 %3349, %v746
    %v3351 = vpop.permute.xlu0 %3350
    %3353 = vset.pattern.permute.xlu0 1
    %3354 = vperm.xlu0 %3353, %v747
    %v3355 = vpop.permute.xlu0 %3354
    %3357 = vset.pattern.permute.xlu0 1
    %3358 = vperm.xlu0 %3357, %v748
    %v3359 = vpop.permute.xlu0 %3358
    %3361 = vset.pattern.permute.xlu0 1
    %3362 = vperm.xlu0 %3361, %v749
    %v3363 = vpop.permute.xlu0 %3362
    %3365 = vset.pattern.permute.xlu0 1
    %3366 = vperm.xlu0 %3365, %v750
    %v3367 = vpop.permute.xlu0 %3366
    %3369 = vset.pattern.permute.xlu0 1
    %3370 = vperm.xlu0 %3369, %v751
    %v3371 = vpop.permute.xlu0 %3370
    %3373 = vset.pattern.permute.xlu0 1
    %3374 = vperm.xlu0 %3373, %v752
    %v3375 = vpop.permute.xlu0 %3374
    %3377 = vset.pattern.permute.xlu0 1
    %3378 = vperm.xlu0 %3377, %v753
    %v3379 = vpop.permute.xlu0 %3378
    %3381 = vset.pattern.permute.xlu0 1
    %3382 = vperm.xlu0 %3381, %v754
    %v3383 = vpop.permute.xlu0 %3382
    %3385 = vset.pattern.permute.xlu0 1
    %3386 = vperm.xlu0 %3385, %v755
    %v3387 = vpop.permute.xlu0 %3386
    %3389 = vset.pattern.permute.xlu0 1
    %3390 = vperm.xlu0 %3389, %v756
    %v3391 = vpop.permute.xlu0 %3390
    %3393 = vset.pattern.permute.xlu0 1
    %3394 = vperm.xlu0 %3393, %v757
    %v3395 = vpop.permute.xlu0 %3394
    %3397 = vset.pattern.permute.xlu0 1
    %3398 = vperm.xlu0 %3397, %v758
    %v3399 = vpop.permute.xlu0 %3398
    %3401 = vset.pattern.permute.xlu0 1
    %3402 = vperm.xlu0 %3401, %v759
    %v3403 = vpop.permute.xlu0 %3402
    %3405 = vset.pattern.permute.xlu0 1
    %3406 = vperm.xlu0 %3405, %v760
    %v3407 = vpop.permute.xlu0 %3406
    %3409 = vset.pattern.permute.xlu0 1
    %3410 = vperm.xlu0 %3409, %v761
    %v3411 = vpop.permute.xlu0 %3410
    %3413 = vset.pattern.permute.xlu0 1
    %3414 = vperm.xlu0 %3413, %v762
    %v3415 = vpop.permute.xlu0 %3414
    %3417 = vset.pattern.permute.xlu0 1
    %3418 = vperm.xlu0 %3417, %v763
    %v3419 = vpop.permute.xlu0 %3418
    %3421 = vset.pattern.permute.xlu0 1
    %3422 = vperm.xlu0 %3421, %v764
    %v3423 = vpop.permute.xlu0 %3422
    %3425 = vset.pattern.permute.xlu0 1
    %3426 = vperm.xlu0 %3425, %v765
    %v3427 = vpop.permute.xlu0 %3426
    %3429 = vset.pattern.permute.xlu0 1
    %3430 = vperm.xlu0 %3429, %v766
    %v3431 = vpop.permute.xlu0 %3430
    %3433 = vset.pattern.permute.xlu0 1
    %3434 = vperm.xlu0 %3433, %v767
    %v3435 = vpop.permute.xlu0 %3434
    %3437 = vset.pattern.permute.xlu0 1
    %3438 = vperm.xlu0 %3437, %v768
    %v3439 = vpop.permute.xlu0 %3438
    %3441 = vset.pattern.permute.xlu0 1
    %3442 = vperm.xlu0 %3441, %v769
    %v3443 = vpop.permute.xlu0 %3442
    %3445 = vset.pattern.permute.xlu0 1
    %3446 = vperm.xlu0 %3445, %v770
    %v3447 = vpop.permute.xlu0 %3446
    %3449 = vset.pattern.permute.xlu0 1
    %3450 = vperm.xlu0 %3449, %v771
    %v3451 = vpop.permute.xlu0 %3450
    %3453 = vset.pattern.permute.xlu0 1
    %3454 = vperm.xlu0 %3453, %v772
    %v3455 = vpop.permute.xlu0 %3454
    %3457 = vset.pattern.permute.xlu0 1
    %3458 = vperm.xlu0 %3457, %v773
    %v3459 = vpop.permute.xlu0 %3458
    %3461 = vset.pattern.permute.xlu0 1
    %3462 = vperm.xlu0 %3461, %v774
    %v3463 = vpop.permute.xlu0 %3462
    %3465 = vset.pattern.permute.xlu0 1
    %3466 = vperm.xlu0 %3465, %v775
    %v3467 = vpop.permute.xlu0 %3466
    %3469 = vset.pattern.permute.xlu0 1
    %3470 = vperm.xlu0 %3469, %v776
    %v3471 = vpop.permute.xlu0 %3470
    %3473 = vset.pattern.permute.xlu0 1
    %3474 = vperm.xlu0 %3473, %v777
    %v3475 = vpop.permute.xlu0 %3474
    %3477 = vset.pattern.permute.xlu0 1
    %3478 = vperm.xlu0 %3477, %v778
    %v3479 = vpop.permute.xlu0 %3478
    %3481 = vset.pattern.permute.xlu0 1
    %3482 = vperm.xlu0 %3481, %v779
    %v3483 = vpop.permute.xlu0 %3482
    %3485 = vset.pattern.permute.xlu0 1
    %3486 = vperm.xlu0 %3485, %v780
    %v3487 = vpop.permute.xlu0 %3486
    %3489 = vset.pattern.permute.xlu0 1
    %3490 = vperm.xlu0 %3489, %v781
    %v3491 = vpop.permute.xlu0 %3490
    %3493 = vset.pattern.permute.xlu0 1
    %3494 = vperm.xlu0 %3493, %v782
    %v3495 = vpop.permute.xlu0 %3494
    %3497 = vset.pattern.permute.xlu0 1
    %3498 = vperm.xlu0 %3497, %v783
    %v3499 = vpop.permute.xlu0 %3498
    %3501 = vset.pattern.permute.xlu0 1
    %3502 = vperm.xlu0 %3501, %v784
    %v3503 = vpop.permute.xlu0 %3502
    %3505 = vset.pattern.permute.xlu0 1
    %3506 = vperm.xlu0 %3505, %v785
    %v3507 = vpop.permute.xlu0 %3506
    %3509 = vset.pattern.permute.xlu0 1
    %3510 = vperm.xlu0 %3509, %v786
    %v3511 = vpop.permute.xlu0 %3510
    %3513 = vset.pattern.permute.xlu0 1
    %3514 = vperm.xlu0 %3513, %v787
    %v3515 = vpop.permute.xlu0 %3514
    %3517 = vset.pattern.permute.xlu0 1
    %3518 = vperm.xlu0 %3517, %v788
    %v3519 = vpop.permute.xlu0 %3518
    %3521 = vset.pattern.permute.xlu0 1
    %3522 = vperm.xlu0 %3521, %v789
    %v3523 = vpop.permute.xlu0 %3522
    %3525 = vset.pattern.permute.xlu0 1
    %3526 = vperm.xlu0 %3525, %v790
    %v3527 = vpop.permute.xlu0 %3526
    %3529 = vset.pattern.permute.xlu0 1
    %3530 = vperm.xlu0 %3529, %v791
    %v3531 = vpop.permute.xlu0 %3530
    %3533 = vset.pattern.permute.xlu0 1
    %3534 = vperm.xlu0 %3533, %v792
    %v3535 = vpop.permute.xlu0 %3534
    %3537 = vset.pattern.permute.xlu0 1
    %3538 = vperm.xlu0 %3537, %v793
    %v3539 = vpop.permute.xlu0 %3538
    %3541 = vset.pattern.permute.xlu0 1
    %3542 = vperm.xlu0 %3541, %v794
    %v3543 = vpop.permute.xlu0 %3542
    %3545 = vset.pattern.permute.xlu0 1
    %3546 = vperm.xlu0 %3545, %v795
    %v3547 = vpop.permute.xlu0 %3546
    %3549 = vset.pattern.permute.xlu0 1
    %3550 = vperm.xlu0 %3549, %v796
    %v3551 = vpop.permute.xlu0 %3550
    %3553 = vset.pattern.permute.xlu0 1
    %3554 = vperm.xlu0 %3553, %v797
    %v3555 = vpop.permute.xlu0 %3554
    %3557 = vset.pattern.permute.xlu0 1
    %3558 = vperm.xlu0 %3557, %v798
    %v3559 = vpop.permute.xlu0 %3558
    %3561 = vset.pattern.permute.xlu0 1
    %3562 = vperm.xlu0 %3561, %v799
    %v3563 = vpop.permute.xlu0 %3562
    %3565 = vset.pattern.permute.xlu0 1
    %3566 = vperm.xlu0 %3565, %v800
    %v3567 = vpop.permute.xlu0 %3566
    %3569 = vset.pattern.permute.xlu0 1
    %3570 = vperm.xlu0 %3569, %v801
    %v3571 = vpop.permute.xlu0 %3570
    %3573 = vset.pattern.permute.xlu0 1
    %3574 = vperm.xlu0 %3573, %v802
    %v3575 = vpop.permute.xlu0 %3574
    %3577 = vset.pattern.permute.xlu0 1
    %3578 = vperm.xlu0 %3577, %v803
    %v3579 = vpop.permute.xlu0 %3578
    %3581 = vset.pattern.permute.xlu0 1
    %3582 = vperm.xlu0 %3581, %v804
    %v3583 = vpop.permute.xlu0 %3582
    %3585 = vset.pattern.permute.xlu0 1
    %3586 = vperm.xlu0 %3585, %v805
    %v3587 = vpop.permute.xlu0 %3586
    %3589 = vset.pattern.permute.xlu0 1
    %3590 = vperm.xlu0 %3589, %v806
    %v3591 = vpop.permute.xlu0 %3590
    %3593 = vset.pattern.permute.xlu0 1
    %3594 = vperm.xlu0 %3593, %v807
    %v3595 = vpop.permute.xlu0 %3594
    %3597 = vset.pattern.permute.xlu0 1
    %3598 = vperm.xlu0 %3597, %v808
    %v3599 = vpop.permute.xlu0 %3598
    %3601 = vset.pattern.permute.xlu0 1
    %3602 = vperm.xlu0 %3601, %v809
    %v3603 = vpop.permute.xlu0 %3602
    %3605 = vset.pattern.permute.xlu0 1
    %3606 = vperm.xlu0 %3605, %v810
    %v3607 = vpop.permute.xlu0 %3606
    %3609 = vset.pattern.permute.xlu0 1
    %3610 = vperm.xlu0 %3609, %v811
    %v3611 = vpop.permute.xlu0 %3610
    %3613 = vset.pattern.permute.xlu0 1
    %3614 = vperm.xlu0 %3613, %v812
    %v3615 = vpop.permute.xlu0 %3614
    %3617 = vset.pattern.permute.xlu0 1
    %3618 = vperm.xlu0 %3617, %v813
    %v3619 = vpop.permute.xlu0 %3618
    %3621 = vset.pattern.permute.xlu0 1
    %3622 = vperm.xlu0 %3621, %v814
    %v3623 = vpop.permute.xlu0 %3622
    %3625 = vset.pattern.permute.xlu0 1
    %3626 = vperm.xlu0 %3625, %v815
    %v3627 = vpop.permute.xlu0 %3626
    %3629 = vset.pattern.permute.xlu0 1
    %3630 = vperm.xlu0 %3629, %v816
    %v3631 = vpop.permute.xlu0 %3630
    %3633 = vset.pattern.permute.xlu0 1
    %3634 = vperm.xlu0 %3633, %v817
    %v3635 = vpop.permute.xlu0 %3634
    %3637 = vset.pattern.permute.xlu0 1
    %3638 = vperm.xlu0 %3637, %v818
    %v3639 = vpop.permute.xlu0 %3638
    %3641 = vset.pattern.permute.xlu0 1
    %3642 = vperm.xlu0 %3641, %v819
    %v3643 = vpop.permute.xlu0 %3642
    %3645 = vset.pattern.permute.xlu0 1
    %3646 = vperm.xlu0 %3645, %v820
    %v3647 = vpop.permute.xlu0 %3646
    %v3649 = vlaneseq
    %v3650 = vshrl.u32 %v3649, 7
    %v3651 = vsub.s32 1, %v3650
    %v3652 = vrot.slane %v821, %v3651
    %v3653 = vmul.f32 %v2627, %v3652
    %v3654 = vmul.f32 %v2631, %v3652
    %v3655 = vmul.f32 %v2635, %v3652
    %v3656 = vmul.f32 %v2639, %v3652
    %v3657 = vmul.f32 %v2643, %v3652
    %v3658 = vmul.f32 %v2647, %v3652
    %v3659 = vmul.f32 %v2651, %v3652
    %v3660 = vmul.f32 %v2655, %v3652
    %v3661 = vmul.f32 %v2659, %v3652
    %v3662 = vmul.f32 %v2663, %v3652
    %v3663 = vmul.f32 %v2667, %v3652
    %v3664 = vmul.f32 %v2671, %v3652
    %v3665 = vmul.f32 %v2675, %v3652
    %v3666 = vmul.f32 %v2679, %v3652
    %v3667 = vmul.f32 %v2683, %v3652
    %v3668 = vmul.f32 %v2687, %v3652
    %v3669 = vmul.f32 %v2691, %v3652
    %v3670 = vmul.f32 %v2695, %v3652
    %v3671 = vmul.f32 %v2699, %v3652
    %v3672 = vmul.f32 %v2703, %v3652
    %v3673 = vmul.f32 %v2707, %v3652
    %v3674 = vmul.f32 %v2711, %v3652
    %v3675 = vmul.f32 %v2715, %v3652
    %v3676 = vmul.f32 %v2719, %v3652
    %v3677 = vmul.f32 %v2723, %v3652
    %v3678 = vmul.f32 %v2727, %v3652
    %v3679 = vmul.f32 %v2731, %v3652
    %v3680 = vmul.f32 %v2735, %v3652
    %v3681 = vmul.f32 %v2739, %v3652
    %v3682 = vmul.f32 %v2743, %v3652
    %v3683 = vmul.f32 %v2747, %v3652
    %v3684 = vmul.f32 %v2751, %v3652
    %v3685 = vmul.f32 %v2755, %v3652
    %v3686 = vmul.f32 %v2759, %v3652
    %v3687 = vmul.f32 %v2763, %v3652
    %v3688 = vmul.f32 %v2767, %v3652
    %v3689 = vmul.f32 %v2771, %v3652
    %v3690 = vmul.f32 %v2775, %v3652
    %v3691 = vmul.f32 %v2779, %v3652
    %v3692 = vmul.f32 %v2783, %v3652
    %v3693 = vmul.f32 %v2787, %v3652
    %v3694 = vmul.f32 %v2791, %v3652
    %v3695 = vmul.f32 %v2795, %v3652
    %v3696 = vmul.f32 %v2799, %v3652
    %v3697 = vmul.f32 %v2803, %v3652
    %v3698 = vmul.f32 %v2807, %v3652
    %v3699 = vmul.f32 %v2811, %v3652
    %v3700 = vmul.f32 %v2815, %v3652
    %v3701 = vmul.f32 %v2819, %v3652
    %v3702 = vmul.f32 %v2823, %v3652
    %v3703 = vmul.f32 %v2827, %v3652
    %v3704 = vmul.f32 %v2831, %v3652
    %v3705 = vmul.f32 %v2835, %v3652
    %v3706 = vmul.f32 %v2839, %v3652
    %v3707 = vmul.f32 %v2843, %v3652
    %v3708 = vmul.f32 %v2847, %v3652
    %v3709 = vmul.f32 %v2851, %v3652
    %v3710 = vmul.f32 %v2855, %v3652
    %v3711 = vmul.f32 %v2859, %v3652
    %v3712 = vmul.f32 %v2863, %v3652
    %v3713 = vmul.f32 %v2867, %v3652
    %v3714 = vmul.f32 %v2871, %v3652
    %v3715 = vmul.f32 %v2875, %v3652
    %v3716 = vmul.f32 %v2879, %v3652
    %v3717 = vmul.f32 %v2883, %v3652
    %v3718 = vmul.f32 %v2887, %v3652
    %v3719 = vmul.f32 %v2891, %v3652
    %v3720 = vmul.f32 %v2895, %v3652
    %v3721 = vmul.f32 %v2899, %v3652
    %v3722 = vmul.f32 %v2903, %v3652
    %v3723 = vmul.f32 %v2907, %v3652
    %v3724 = vmul.f32 %v2911, %v3652
    %v3725 = vmul.f32 %v2915, %v3652
    %v3726 = vmul.f32 %v2919, %v3652
    %v3727 = vmul.f32 %v2923, %v3652
    %v3728 = vmul.f32 %v2927, %v3652
    %v3729 = vmul.f32 %v2931, %v3652
    %v3730 = vmul.f32 %v2935, %v3652
    %v3731 = vmul.f32 %v2939, %v3652
    %v3732 = vmul.f32 %v2943, %v3652
    %v3733 = vmul.f32 %v2947, %v3652
    %v3734 = vmul.f32 %v2951, %v3652
    %v3735 = vmul.f32 %v2955, %v3652
    %v3736 = vmul.f32 %v2959, %v3652
    %v3737 = vmul.f32 %v2963, %v3652
    %v3738 = vmul.f32 %v2967, %v3652
    %v3739 = vmul.f32 %v2971, %v3652
    %v3740 = vmul.f32 %v2975, %v3652
    %v3741 = vmul.f32 %v2979, %v3652
    %v3742 = vmul.f32 %v2983, %v3652
    %v3743 = vmul.f32 %v2987, %v3652
    %v3744 = vmul.f32 %v2991, %v3652
    %v3745 = vmul.f32 %v2995, %v3652
    %v3746 = vmul.f32 %v2999, %v3652
    %v3747 = vmul.f32 %v3003, %v3652
    %v3748 = vmul.f32 %v3007, %v3652
    %v3749 = vmul.f32 %v3011, %v3652
    %v3750 = vmul.f32 %v3015, %v3652
    %v3751 = vmul.f32 %v3019, %v3652
    %v3752 = vmul.f32 %v3023, %v3652
    %v3753 = vmul.f32 %v3027, %v3652
    %v3754 = vmul.f32 %v3031, %v3652
    %v3755 = vmul.f32 %v3035, %v3652
    %v3756 = vmul.f32 %v3039, %v3652
    %v3757 = vmul.f32 %v3043, %v3652
    %v3758 = vmul.f32 %v3047, %v3652
    %v3759 = vmul.f32 %v3051, %v3652
    %v3760 = vmul.f32 %v3055, %v3652
    %v3761 = vmul.f32 %v3059, %v3652
    %v3762 = vmul.f32 %v3063, %v3652
    %v3763 = vmul.f32 %v3067, %v3652
    %v3764 = vmul.f32 %v3071, %v3652
    %v3765 = vmul.f32 %v3075, %v3652
    %v3766 = vmul.f32 %v3079, %v3652
    %v3767 = vmul.f32 %v3083, %v3652
    %v3768 = vmul.f32 %v3087, %v3652
    %v3769 = vmul.f32 %v3091, %v3652
    %v3770 = vmul.f32 %v3095, %v3652
    %v3771 = vmul.f32 %v3099, %v3652
    %v3772 = vmul.f32 %v3103, %v3652
    %v3773 = vmul.f32 %v3107, %v3652
    %v3774 = vmul.f32 %v3111, %v3652
    %v3775 = vmul.f32 %v3115, %v3652
    %v3776 = vmul.f32 %v3119, %v3652
    %v3777 = vmul.f32 %v3123, %v3652
    %v3778 = vmul.f32 %v3127, %v3652
    %v3779 = vmul.f32 %v3131, %v3652
    %v3780 = vmul.f32 %v3135, %v3652
    %v3781 = vmul.f32 %v3139, %v3652
    %v3782 = vmul.f32 %v3143, %v3652
    %v3783 = vmul.f32 %v3147, %v3652
    %v3784 = vmul.f32 %v3151, %v3652
    %v3785 = vmul.f32 %v3155, %v3652
    %v3786 = vmul.f32 %v3159, %v3652
    %v3787 = vmul.f32 %v3163, %v3652
    %v3788 = vmul.f32 %v3167, %v3652
    %v3789 = vmul.f32 %v3171, %v3652
    %v3790 = vmul.f32 %v3175, %v3652
    %v3791 = vmul.f32 %v3179, %v3652
    %v3792 = vmul.f32 %v3183, %v3652
    %v3793 = vmul.f32 %v3187, %v3652
    %v3794 = vmul.f32 %v3191, %v3652
    %v3795 = vmul.f32 %v3195, %v3652
    %v3796 = vmul.f32 %v3199, %v3652
    %v3797 = vmul.f32 %v3203, %v3652
    %v3798 = vmul.f32 %v3207, %v3652
    %v3799 = vmul.f32 %v3211, %v3652
    %v3800 = vmul.f32 %v3215, %v3652
    %v3801 = vmul.f32 %v3219, %v3652
    %v3802 = vmul.f32 %v3223, %v3652
    %v3803 = vmul.f32 %v3227, %v3652
    %v3804 = vmul.f32 %v3231, %v3652
    %v3805 = vmul.f32 %v3235, %v3652
    %v3806 = vmul.f32 %v3239, %v3652
    %v3807 = vmul.f32 %v3243, %v3652
    %v3808 = vmul.f32 %v3247, %v3652
    %v3809 = vmul.f32 %v3251, %v3652
    %v3810 = vmul.f32 %v3255, %v3652
    %v3811 = vmul.f32 %v3259, %v3652
    %v3812 = vmul.f32 %v3263, %v3652
    %v3813 = vmul.f32 %v3267, %v3652
    %v3814 = vmul.f32 %v3271, %v3652
    %v3815 = vmul.f32 %v3275, %v3652
    %v3816 = vmul.f32 %v3279, %v3652
    %v3817 = vmul.f32 %v3283, %v3652
    %v3818 = vmul.f32 %v3287, %v3652
    %v3819 = vmul.f32 %v3291, %v3652
    %v3820 = vmul.f32 %v3295, %v3652
    %v3821 = vmul.f32 %v3299, %v3652
    %v3822 = vmul.f32 %v3303, %v3652
    %v3823 = vmul.f32 %v3307, %v3652
    %v3824 = vmul.f32 %v3311, %v3652
    %v3825 = vmul.f32 %v3315, %v3652
    %v3826 = vmul.f32 %v3319, %v3652
    %v3827 = vmul.f32 %v3323, %v3652
    %v3828 = vmul.f32 %v3327, %v3652
    %v3829 = vmul.f32 %v3331, %v3652
    %v3830 = vmul.f32 %v3335, %v3652
    %v3831 = vmul.f32 %v3339, %v3652
    %v3832 = vmul.f32 %v3343, %v3652
    %v3833 = vmul.f32 %v3347, %v3652
    %v3834 = vmul.f32 %v3351, %v3652
    %v3835 = vmul.f32 %v3355, %v3652
    %v3836 = vmul.f32 %v3359, %v3652
    %v3837 = vmul.f32 %v3363, %v3652
    %v3838 = vmul.f32 %v3367, %v3652
    %v3839 = vmul.f32 %v3371, %v3652
    %v3840 = vmul.f32 %v3375, %v3652
    %v3841 = vmul.f32 %v3379, %v3652
    %v3842 = vmul.f32 %v3383, %v3652
    %v3843 = vmul.f32 %v3387, %v3652
    %v3844 = vmul.f32 %v3391, %v3652
    %v3845 = vmul.f32 %v3395, %v3652
    %v3846 = vmul.f32 %v3399, %v3652
    %v3847 = vmul.f32 %v3403, %v3652
    %v3848 = vmul.f32 %v3407, %v3652
    %v3849 = vmul.f32 %v3411, %v3652
    %v3850 = vmul.f32 %v3415, %v3652
    %v3851 = vmul.f32 %v3419, %v3652
    %v3852 = vmul.f32 %v3423, %v3652
    %v3853 = vmul.f32 %v3427, %v3652
    %v3854 = vmul.f32 %v3431, %v3652
    %v3855 = vmul.f32 %v3435, %v3652
    %v3856 = vmul.f32 %v3439, %v3652
    %v3857 = vmul.f32 %v3443, %v3652
    %v3858 = vmul.f32 %v3447, %v3652
    %v3859 = vmul.f32 %v3451, %v3652
    %v3860 = vmul.f32 %v3455, %v3652
    %v3861 = vmul.f32 %v3459, %v3652
    %v3862 = vmul.f32 %v3463, %v3652
    %v3863 = vmul.f32 %v3467, %v3652
    %v3864 = vmul.f32 %v3471, %v3652
    %v3865 = vmul.f32 %v3475, %v3652
    %v3866 = vmul.f32 %v3479, %v3652
    %v3867 = vmul.f32 %v3483, %v3652
    %v3868 = vmul.f32 %v3487, %v3652
    %v3869 = vmul.f32 %v3491, %v3652
    %v3870 = vmul.f32 %v3495, %v3652
    %v3871 = vmul.f32 %v3499, %v3652
    %v3872 = vmul.f32 %v3503, %v3652
    %v3873 = vmul.f32 %v3507, %v3652
    %v3874 = vmul.f32 %v3511, %v3652
    %v3875 = vmul.f32 %v3515, %v3652
    %v3876 = vmul.f32 %v3519, %v3652
    %v3877 = vmul.f32 %v3523, %v3652
    %v3878 = vmul.f32 %v3527, %v3652
    %v3879 = vmul.f32 %v3531, %v3652
    %v3880 = vmul.f32 %v3535, %v3652
    %v3881 = vmul.f32 %v3539, %v3652
    %v3882 = vmul.f32 %v3543, %v3652
    %v3883 = vmul.f32 %v3547, %v3652
    %v3884 = vmul.f32 %v3551, %v3652
    %v3885 = vmul.f32 %v3555, %v3652
    %v3886 = vmul.f32 %v3559, %v3652
    %v3887 = vmul.f32 %v3563, %v3652
    %v3888 = vmul.f32 %v3567, %v3652
    %v3889 = vmul.f32 %v3571, %v3652
    %v3890 = vmul.f32 %v3575, %v3652
    %v3891 = vmul.f32 %v3579, %v3652
    %v3892 = vmul.f32 %v3583, %v3652
    %v3893 = vmul.f32 %v3587, %v3652
    %v3894 = vmul.f32 %v3591, %v3652
    %v3895 = vmul.f32 %v3595, %v3652
    %v3896 = vmul.f32 %v3599, %v3652
    %v3897 = vmul.f32 %v3603, %v3652
    %v3898 = vmul.f32 %v3607, %v3652
    %v3899 = vmul.f32 %v3611, %v3652
    %v3900 = vmul.f32 %v3615, %v3652
    %v3901 = vmul.f32 %v3619, %v3652
    %v3902 = vmul.f32 %v3623, %v3652
    %v3903 = vmul.f32 %v3627, %v3652
    %v3904 = vmul.f32 %v3631, %v3652
    %v3905 = vmul.f32 %v3635, %v3652
    %v3906 = vmul.f32 %v3639, %v3652
    %v3907 = vmul.f32 %v3643, %v3652
    %v3908 = vmul.f32 %v3647, %v3652
    %v3909 = vadd.f32 %v2369, %v3653
    %v3910 = vadd.f32 %v2370, %v3654
    %v3911 = vadd.f32 %v2371, %v3655
    %v3912 = vadd.f32 %v2372, %v3656
    %v3913 = vadd.f32 %v2373, %v3657
    %v3914 = vadd.f32 %v2374, %v3658
    %v3915 = vadd.f32 %v2375, %v3659
    %v3916 = vadd.f32 %v2376, %v3660
    %v3917 = vadd.f32 %v2377, %v3661
    %v3918 = vadd.f32 %v2378, %v3662
    %v3919 = vadd.f32 %v2379, %v3663
    %v3920 = vadd.f32 %v2380, %v3664
    %v3921 = vadd.f32 %v2381, %v3665
    %v3922 = vadd.f32 %v2382, %v3666
    %v3923 = vadd.f32 %v2383, %v3667
    %v3924 = vadd.f32 %v2384, %v3668
    %v3925 = vadd.f32 %v2385, %v3669
    %v3926 = vadd.f32 %v2386, %v3670
    %v3927 = vadd.f32 %v2387, %v3671
    %v3928 = vadd.f32 %v2388, %v3672
    %v3929 = vadd.f32 %v2389, %v3673
    %v3930 = vadd.f32 %v2390, %v3674
    %v3931 = vadd.f32 %v2391, %v3675
    %v3932 = vadd.f32 %v2392, %v3676
    %v3933 = vadd.f32 %v2393, %v3677
    %v3934 = vadd.f32 %v2394, %v3678
    %v3935 = vadd.f32 %v2395, %v3679
    %v3936 = vadd.f32 %v2396, %v3680
    %v3937 = vadd.f32 %v2397, %v3681
    %v3938 = vadd.f32 %v2398, %v3682
    %v3939 = vadd.f32 %v2399, %v3683
    %v3940 = vadd.f32 %v2400, %v3684
    %v3941 = vadd.f32 %v2401, %v3685
    %v3942 = vadd.f32 %v2402, %v3686
    %v3943 = vadd.f32 %v2403, %v3687
    %v3944 = vadd.f32 %v2404, %v3688
    %v3945 = vadd.f32 %v2405, %v3689
    %v3946 = vadd.f32 %v2406, %v3690
    %v3947 = vadd.f32 %v2407, %v3691
    %v3948 = vadd.f32 %v2408, %v3692
    %v3949 = vadd.f32 %v2409, %v3693
    %v3950 = vadd.f32 %v2410, %v3694
    %v3951 = vadd.f32 %v2411, %v3695
    %v3952 = vadd.f32 %v2412, %v3696
    %v3953 = vadd.f32 %v2413, %v3697
    %v3954 = vadd.f32 %v2414, %v3698
    %v3955 = vadd.f32 %v2415, %v3699
    %v3956 = vadd.f32 %v2416, %v3700
    %v3957 = vadd.f32 %v2417, %v3701
    %v3958 = vadd.f32 %v2418, %v3702
    %v3959 = vadd.f32 %v2419, %v3703
    %v3960 = vadd.f32 %v2420, %v3704
    %v3961 = vadd.f32 %v2421, %v3705
    %v3962 = vadd.f32 %v2422, %v3706
    %v3963 = vadd.f32 %v2423, %v3707
    %v3964 = vadd.f32 %v2424, %v3708
    %v3965 = vadd.f32 %v2425, %v3709
    %v3966 = vadd.f32 %v2426, %v3710
    %v3967 = vadd.f32 %v2427, %v3711
    %v3968 = vadd.f32 %v2428, %v3712
    %v3969 = vadd.f32 %v2429, %v3713
    %v3970 = vadd.f32 %v2430, %v3714
    %v3971 = vadd.f32 %v2431, %v3715
    %v3972 = vadd.f32 %v2432, %v3716
    %v3973 = vadd.f32 %v2433, %v3717
    %v3974 = vadd.f32 %v2434, %v3718
    %v3975 = vadd.f32 %v2435, %v3719
    %v3976 = vadd.f32 %v2436, %v3720
    %v3977 = vadd.f32 %v2437, %v3721
    %v3978 = vadd.f32 %v2438, %v3722
    %v3979 = vadd.f32 %v2439, %v3723
    %v3980 = vadd.f32 %v2440, %v3724
    %v3981 = vadd.f32 %v2441, %v3725
    %v3982 = vadd.f32 %v2442, %v3726
    %v3983 = vadd.f32 %v2443, %v3727
    %v3984 = vadd.f32 %v2444, %v3728
    %v3985 = vadd.f32 %v2445, %v3729
    %v3986 = vadd.f32 %v2446, %v3730
    %v3987 = vadd.f32 %v2447, %v3731
    %v3988 = vadd.f32 %v2448, %v3732
    %v3989 = vadd.f32 %v2449, %v3733
    %v3990 = vadd.f32 %v2450, %v3734
    %v3991 = vadd.f32 %v2451, %v3735
    %v3992 = vadd.f32 %v2452, %v3736
    %v3993 = vadd.f32 %v2453, %v3737
    %v3994 = vadd.f32 %v2454, %v3738
    %v3995 = vadd.f32 %v2455, %v3739
    %v3996 = vadd.f32 %v2456, %v3740
    %v3997 = vadd.f32 %v2457, %v3741
    %v3998 = vadd.f32 %v2458, %v3742
    %v3999 = vadd.f32 %v2459, %v3743
    %v4000 = vadd.f32 %v2460, %v3744
    %v4001 = vadd.f32 %v2461, %v3745
    %v4002 = vadd.f32 %v2462, %v3746
    %v4003 = vadd.f32 %v2463, %v3747
    %v4004 = vadd.f32 %v2464, %v3748
    %v4005 = vadd.f32 %v2465, %v3749
    %v4006 = vadd.f32 %v2466, %v3750
    %v4007 = vadd.f32 %v2467, %v3751
    %v4008 = vadd.f32 %v2468, %v3752
    %v4009 = vadd.f32 %v2469, %v3753
    %v4010 = vadd.f32 %v2470, %v3754
    %v4011 = vadd.f32 %v2471, %v3755
    %v4012 = vadd.f32 %v2472, %v3756
    %v4013 = vadd.f32 %v2473, %v3757
    %v4014 = vadd.f32 %v2474, %v3758
    %v4015 = vadd.f32 %v2475, %v3759
    %v4016 = vadd.f32 %v2476, %v3760
    %v4017 = vadd.f32 %v2477, %v3761
    %v4018 = vadd.f32 %v2478, %v3762
    %v4019 = vadd.f32 %v2479, %v3763
    %v4020 = vadd.f32 %v2480, %v3764
    %v4021 = vadd.f32 %v2481, %v3765
    %v4022 = vadd.f32 %v2482, %v3766
    %v4023 = vadd.f32 %v2483, %v3767
    %v4024 = vadd.f32 %v2484, %v3768
    %v4025 = vadd.f32 %v2485, %v3769
    %v4026 = vadd.f32 %v2486, %v3770
    %v4027 = vadd.f32 %v2487, %v3771
    %v4028 = vadd.f32 %v2488, %v3772
    %v4029 = vadd.f32 %v2489, %v3773
    %v4030 = vadd.f32 %v2490, %v3774
    %v4031 = vadd.f32 %v2491, %v3775
    %v4032 = vadd.f32 %v2492, %v3776
    %v4033 = vadd.f32 %v2493, %v3777
    %v4034 = vadd.f32 %v2494, %v3778
    %v4035 = vadd.f32 %v2495, %v3779
    %v4036 = vadd.f32 %v2496, %v3780
    %v4037 = vadd.f32 %v2497, %v3781
    %v4038 = vadd.f32 %v2498, %v3782
    %v4039 = vadd.f32 %v2499, %v3783
    %v4040 = vadd.f32 %v2500, %v3784
    %v4041 = vadd.f32 %v2501, %v3785
    %v4042 = vadd.f32 %v2502, %v3786
    %v4043 = vadd.f32 %v2503, %v3787
    %v4044 = vadd.f32 %v2504, %v3788
    %v4045 = vadd.f32 %v2505, %v3789
    %v4046 = vadd.f32 %v2506, %v3790
    %v4047 = vadd.f32 %v2507, %v3791
    %v4048 = vadd.f32 %v2508, %v3792
    %v4049 = vadd.f32 %v2509, %v3793
    %v4050 = vadd.f32 %v2510, %v3794
    %v4051 = vadd.f32 %v2511, %v3795
    %v4052 = vadd.f32 %v2512, %v3796
    %v4053 = vadd.f32 %v2513, %v3797
    %v4054 = vadd.f32 %v2514, %v3798
    %v4055 = vadd.f32 %v2515, %v3799
    %v4056 = vadd.f32 %v2516, %v3800
    %v4057 = vadd.f32 %v2517, %v3801
    %v4058 = vadd.f32 %v2518, %v3802
    %v4059 = vadd.f32 %v2519, %v3803
    %v4060 = vadd.f32 %v2520, %v3804
    %v4061 = vadd.f32 %v2521, %v3805
    %v4062 = vadd.f32 %v2522, %v3806
    %v4063 = vadd.f32 %v2523, %v3807
    %v4064 = vadd.f32 %v2524, %v3808
    %v4065 = vadd.f32 %v2525, %v3809
    %v4066 = vadd.f32 %v2526, %v3810
    %v4067 = vadd.f32 %v2527, %v3811
    %v4068 = vadd.f32 %v2528, %v3812
    %v4069 = vadd.f32 %v2529, %v3813
    %v4070 = vadd.f32 %v2530, %v3814
    %v4071 = vadd.f32 %v2531, %v3815
    %v4072 = vadd.f32 %v2532, %v3816
    %v4073 = vadd.f32 %v2533, %v3817
    %v4074 = vadd.f32 %v2534, %v3818
    %v4075 = vadd.f32 %v2535, %v3819
    %v4076 = vadd.f32 %v2536, %v3820
    %v4077 = vadd.f32 %v2537, %v3821
    %v4078 = vadd.f32 %v2538, %v3822
    %v4079 = vadd.f32 %v2539, %v3823
    %v4080 = vadd.f32 %v2540, %v3824
    %v4081 = vadd.f32 %v2541, %v3825
    %v4082 = vadd.f32 %v2542, %v3826
    %v4083 = vadd.f32 %v2543, %v3827
    %v4084 = vadd.f32 %v2544, %v3828
    %v4085 = vadd.f32 %v2545, %v3829
    %v4086 = vadd.f32 %v2546, %v3830
    %v4087 = vadd.f32 %v2547, %v3831
    %v4088 = vadd.f32 %v2548, %v3832
    %v4089 = vadd.f32 %v2549, %v3833
    %v4090 = vadd.f32 %v2550, %v3834
    %v4091 = vadd.f32 %v2551, %v3835
    %v4092 = vadd.f32 %v2552, %v3836
    %v4093 = vadd.f32 %v2553, %v3837
    %v4094 = vadd.f32 %v2554, %v3838
    %v4095 = vadd.f32 %v2555, %v3839
    %v4096 = vadd.f32 %v2556, %v3840
    %v4097 = vadd.f32 %v2557, %v3841
    %v4098 = vadd.f32 %v2558, %v3842
    %v4099 = vadd.f32 %v2559, %v3843
    %v4100 = vadd.f32 %v2560, %v3844
    %v4101 = vadd.f32 %v2561, %v3845
    %v4102 = vadd.f32 %v2562, %v3846
    %v4103 = vadd.f32 %v2563, %v3847
    %v4104 = vadd.f32 %v2564, %v3848
    %v4105 = vadd.f32 %v2565, %v3849
    %v4106 = vadd.f32 %v2566, %v3850
    %v4107 = vadd.f32 %v2567, %v3851
    %v4108 = vadd.f32 %v2568, %v3852
    %v4109 = vadd.f32 %v2569, %v3853
    %v4110 = vadd.f32 %v2570, %v3854
    %v4111 = vadd.f32 %v2571, %v3855
    %v4112 = vadd.f32 %v2572, %v3856
    %v4113 = vadd.f32 %v2573, %v3857
    %v4114 = vadd.f32 %v2574, %v3858
    %v4115 = vadd.f32 %v2575, %v3859
    %v4116 = vadd.f32 %v2576, %v3860
    %v4117 = vadd.f32 %v2577, %v3861
    %v4118 = vadd.f32 %v2578, %v3862
    %v4119 = vadd.f32 %v2579, %v3863
    %v4120 = vadd.f32 %v2580, %v3864
    %v4121 = vadd.f32 %v2581, %v3865
    %v4122 = vadd.f32 %v2582, %v3866
    %v4123 = vadd.f32 %v2583, %v3867
    %v4124 = vadd.f32 %v2584, %v3868
    %v4125 = vadd.f32 %v2585, %v3869
    %v4126 = vadd.f32 %v2586, %v3870
    %v4127 = vadd.f32 %v2587, %v3871
    %v4128 = vadd.f32 %v2588, %v3872
    %v4129 = vadd.f32 %v2589, %v3873
    %v4130 = vadd.f32 %v2590, %v3874
    %v4131 = vadd.f32 %v2591, %v3875
    %v4132 = vadd.f32 %v2592, %v3876
    %v4133 = vadd.f32 %v2593, %v3877
    %v4134 = vadd.f32 %v2594, %v3878
    %v4135 = vadd.f32 %v2595, %v3879
    %v4136 = vadd.f32 %v2596, %v3880
    %v4137 = vadd.f32 %v2597, %v3881
    %v4138 = vadd.f32 %v2598, %v3882
    %v4139 = vadd.f32 %v2599, %v3883
    %v4140 = vadd.f32 %v2600, %v3884
    %v4141 = vadd.f32 %v2601, %v3885
    %v4142 = vadd.f32 %v2602, %v3886
    %v4143 = vadd.f32 %v2603, %v3887
    %v4144 = vadd.f32 %v2604, %v3888
    %v4145 = vadd.f32 %v2605, %v3889
    %v4146 = vadd.f32 %v2606, %v3890
    %v4147 = vadd.f32 %v2607, %v3891
    %v4148 = vadd.f32 %v2608, %v3892
    %v4149 = vadd.f32 %v2609, %v3893
    %v4150 = vadd.f32 %v2610, %v3894
    %v4151 = vadd.f32 %v2611, %v3895
    %v4152 = vadd.f32 %v2612, %v3896
    %v4153 = vadd.f32 %v2613, %v3897
    %v4154 = vadd.f32 %v2614, %v3898
    %v4155 = vadd.f32 %v2615, %v3899
    %v4156 = vadd.f32 %v2616, %v3900
    %v4157 = vadd.f32 %v2617, %v3901
    %v4158 = vadd.f32 %v2618, %v3902
    %v4159 = vadd.f32 %v2619, %v3903
    %v4160 = vadd.f32 %v2620, %v3904
    %v4161 = vadd.f32 %v2621, %v3905
    %v4162 = vadd.f32 %v2622, %v3906
    %v4163 = vadd.f32 %v2623, %v3907
    %v4164 = vadd.f32 %v2624, %v3908
    %4165 = vset.pattern.permute.xlu0 2
    %4166 = vperm.xlu0 %4165, %v565
    %v4167 = vpop.permute.xlu0 %4166
    %4169 = vset.pattern.permute.xlu0 2
    %4170 = vperm.xlu0 %4169, %v566
    %v4171 = vpop.permute.xlu0 %4170
    %4173 = vset.pattern.permute.xlu0 2
    %4174 = vperm.xlu0 %4173, %v567
    %v4175 = vpop.permute.xlu0 %4174
    %4177 = vset.pattern.permute.xlu0 2
    %4178 = vperm.xlu0 %4177, %v568
    %v4179 = vpop.permute.xlu0 %4178
    %4181 = vset.pattern.permute.xlu0 2
    %4182 = vperm.xlu0 %4181, %v569
    %v4183 = vpop.permute.xlu0 %4182
    %4185 = vset.pattern.permute.xlu0 2
    %4186 = vperm.xlu0 %4185, %v570
    %v4187 = vpop.permute.xlu0 %4186
    %4189 = vset.pattern.permute.xlu0 2
    %4190 = vperm.xlu0 %4189, %v571
    %v4191 = vpop.permute.xlu0 %4190
    %4193 = vset.pattern.permute.xlu0 2
    %4194 = vperm.xlu0 %4193, %v572
    %v4195 = vpop.permute.xlu0 %4194
    %4197 = vset.pattern.permute.xlu0 2
    %4198 = vperm.xlu0 %4197, %v573
    %v4199 = vpop.permute.xlu0 %4198
    %4201 = vset.pattern.permute.xlu0 2
    %4202 = vperm.xlu0 %4201, %v574
    %v4203 = vpop.permute.xlu0 %4202
    %4205 = vset.pattern.permute.xlu0 2
    %4206 = vperm.xlu0 %4205, %v575
    %v4207 = vpop.permute.xlu0 %4206
    %4209 = vset.pattern.permute.xlu0 2
    %4210 = vperm.xlu0 %4209, %v576
    %v4211 = vpop.permute.xlu0 %4210
    %4213 = vset.pattern.permute.xlu0 2
    %4214 = vperm.xlu0 %4213, %v577
    %v4215 = vpop.permute.xlu0 %4214
    %4217 = vset.pattern.permute.xlu0 2
    %4218 = vperm.xlu0 %4217, %v578
    %v4219 = vpop.permute.xlu0 %4218
    %4221 = vset.pattern.permute.xlu0 2
    %4222 = vperm.xlu0 %4221, %v579
    %v4223 = vpop.permute.xlu0 %4222
    %4225 = vset.pattern.permute.xlu0 2
    %4226 = vperm.xlu0 %4225, %v580
    %v4227 = vpop.permute.xlu0 %4226
    %4229 = vset.pattern.permute.xlu0 2
    %4230 = vperm.xlu0 %4229, %v581
    %v4231 = vpop.permute.xlu0 %4230
    %4233 = vset.pattern.permute.xlu0 2
    %4234 = vperm.xlu0 %4233, %v582
    %v4235 = vpop.permute.xlu0 %4234
    %4237 = vset.pattern.permute.xlu0 2
    %4238 = vperm.xlu0 %4237, %v583
    %v4239 = vpop.permute.xlu0 %4238
    %4241 = vset.pattern.permute.xlu0 2
    %4242 = vperm.xlu0 %4241, %v584
    %v4243 = vpop.permute.xlu0 %4242
    %4245 = vset.pattern.permute.xlu0 2
    %4246 = vperm.xlu0 %4245, %v585
    %v4247 = vpop.permute.xlu0 %4246
    %4249 = vset.pattern.permute.xlu0 2
    %4250 = vperm.xlu0 %4249, %v586
    %v4251 = vpop.permute.xlu0 %4250
    %4253 = vset.pattern.permute.xlu0 2
    %4254 = vperm.xlu0 %4253, %v587
    %v4255 = vpop.permute.xlu0 %4254
    %4257 = vset.pattern.permute.xlu0 2
    %4258 = vperm.xlu0 %4257, %v588
    %v4259 = vpop.permute.xlu0 %4258
    %4261 = vset.pattern.permute.xlu0 2
    %4262 = vperm.xlu0 %4261, %v589
    %v4263 = vpop.permute.xlu0 %4262
    %4265 = vset.pattern.permute.xlu0 2
    %4266 = vperm.xlu0 %4265, %v590
    %v4267 = vpop.permute.xlu0 %4266
    %4269 = vset.pattern.permute.xlu0 2
    %4270 = vperm.xlu0 %4269, %v591
    %v4271 = vpop.permute.xlu0 %4270
    %4273 = vset.pattern.permute.xlu0 2
    %4274 = vperm.xlu0 %4273, %v592
    %v4275 = vpop.permute.xlu0 %4274
    %4277 = vset.pattern.permute.xlu0 2
    %4278 = vperm.xlu0 %4277, %v593
    %v4279 = vpop.permute.xlu0 %4278
    %4281 = vset.pattern.permute.xlu0 2
    %4282 = vperm.xlu0 %4281, %v594
    %v4283 = vpop.permute.xlu0 %4282
    %4285 = vset.pattern.permute.xlu0 2
    %4286 = vperm.xlu0 %4285, %v595
    %v4287 = vpop.permute.xlu0 %4286
    %4289 = vset.pattern.permute.xlu0 2
    %4290 = vperm.xlu0 %4289, %v596
    %v4291 = vpop.permute.xlu0 %4290
    %4293 = vset.pattern.permute.xlu0 2
    %4294 = vperm.xlu0 %4293, %v597
    %v4295 = vpop.permute.xlu0 %4294
    %4297 = vset.pattern.permute.xlu0 2
    %4298 = vperm.xlu0 %4297, %v598
    %v4299 = vpop.permute.xlu0 %4298
    %4301 = vset.pattern.permute.xlu0 2
    %4302 = vperm.xlu0 %4301, %v599
    %v4303 = vpop.permute.xlu0 %4302
    %4305 = vset.pattern.permute.xlu0 2
    %4306 = vperm.xlu0 %4305, %v600
    %v4307 = vpop.permute.xlu0 %4306
    %4309 = vset.pattern.permute.xlu0 2
    %4310 = vperm.xlu0 %4309, %v601
    %v4311 = vpop.permute.xlu0 %4310
    %4313 = vset.pattern.permute.xlu0 2
    %4314 = vperm.xlu0 %4313, %v602
    %v4315 = vpop.permute.xlu0 %4314
    %4317 = vset.pattern.permute.xlu0 2
    %4318 = vperm.xlu0 %4317, %v603
    %v4319 = vpop.permute.xlu0 %4318
    %4321 = vset.pattern.permute.xlu0 2
    %4322 = vperm.xlu0 %4321, %v604
    %v4323 = vpop.permute.xlu0 %4322
    %4325 = vset.pattern.permute.xlu0 2
    %4326 = vperm.xlu0 %4325, %v605
    %v4327 = vpop.permute.xlu0 %4326
    %4329 = vset.pattern.permute.xlu0 2
    %4330 = vperm.xlu0 %4329, %v606
    %v4331 = vpop.permute.xlu0 %4330
    %4333 = vset.pattern.permute.xlu0 2
    %4334 = vperm.xlu0 %4333, %v607
    %v4335 = vpop.permute.xlu0 %4334
    %4337 = vset.pattern.permute.xlu0 2
    %4338 = vperm.xlu0 %4337, %v608
    %v4339 = vpop.permute.xlu0 %4338
    %4341 = vset.pattern.permute.xlu0 2
    %4342 = vperm.xlu0 %4341, %v609
    %v4343 = vpop.permute.xlu0 %4342
    %4345 = vset.pattern.permute.xlu0 2
    %4346 = vperm.xlu0 %4345, %v610
    %v4347 = vpop.permute.xlu0 %4346
    %4349 = vset.pattern.permute.xlu0 2
    %4350 = vperm.xlu0 %4349, %v611
    %v4351 = vpop.permute.xlu0 %4350
    %4353 = vset.pattern.permute.xlu0 2
    %4354 = vperm.xlu0 %4353, %v612
    %v4355 = vpop.permute.xlu0 %4354
    %4357 = vset.pattern.permute.xlu0 2
    %4358 = vperm.xlu0 %4357, %v613
    %v4359 = vpop.permute.xlu0 %4358
    %4361 = vset.pattern.permute.xlu0 2
    %4362 = vperm.xlu0 %4361, %v614
    %v4363 = vpop.permute.xlu0 %4362
    %4365 = vset.pattern.permute.xlu0 2
    %4366 = vperm.xlu0 %4365, %v615
    %v4367 = vpop.permute.xlu0 %4366
    %4369 = vset.pattern.permute.xlu0 2
    %4370 = vperm.xlu0 %4369, %v616
    %v4371 = vpop.permute.xlu0 %4370
    %4373 = vset.pattern.permute.xlu0 2
    %4374 = vperm.xlu0 %4373, %v617
    %v4375 = vpop.permute.xlu0 %4374
    %4377 = vset.pattern.permute.xlu0 2
    %4378 = vperm.xlu0 %4377, %v618
    %v4379 = vpop.permute.xlu0 %4378
    %4381 = vset.pattern.permute.xlu0 2
    %4382 = vperm.xlu0 %4381, %v619
    %v4383 = vpop.permute.xlu0 %4382
    %4385 = vset.pattern.permute.xlu0 2
    %4386 = vperm.xlu0 %4385, %v620
    %v4387 = vpop.permute.xlu0 %4386
    %4389 = vset.pattern.permute.xlu0 2
    %4390 = vperm.xlu0 %4389, %v621
    %v4391 = vpop.permute.xlu0 %4390
    %4393 = vset.pattern.permute.xlu0 2
    %4394 = vperm.xlu0 %4393, %v622
    %v4395 = vpop.permute.xlu0 %4394
    %4397 = vset.pattern.permute.xlu0 2
    %4398 = vperm.xlu0 %4397, %v623
    %v4399 = vpop.permute.xlu0 %4398
    %4401 = vset.pattern.permute.xlu0 2
    %4402 = vperm.xlu0 %4401, %v624
    %v4403 = vpop.permute.xlu0 %4402
    %4405 = vset.pattern.permute.xlu0 2
    %4406 = vperm.xlu0 %4405, %v625
    %v4407 = vpop.permute.xlu0 %4406
    %4409 = vset.pattern.permute.xlu0 2
    %4410 = vperm.xlu0 %4409, %v626
    %v4411 = vpop.permute.xlu0 %4410
    %4413 = vset.pattern.permute.xlu0 2
    %4414 = vperm.xlu0 %4413, %v627
    %v4415 = vpop.permute.xlu0 %4414
    %4417 = vset.pattern.permute.xlu0 2
    %4418 = vperm.xlu0 %4417, %v628
    %v4419 = vpop.permute.xlu0 %4418
    %4421 = vset.pattern.permute.xlu0 2
    %4422 = vperm.xlu0 %4421, %v629
    %v4423 = vpop.permute.xlu0 %4422
    %4425 = vset.pattern.permute.xlu0 2
    %4426 = vperm.xlu0 %4425, %v630
    %v4427 = vpop.permute.xlu0 %4426
    %4429 = vset.pattern.permute.xlu0 2
    %4430 = vperm.xlu0 %4429, %v631
    %v4431 = vpop.permute.xlu0 %4430
    %4433 = vset.pattern.permute.xlu0 2
    %4434 = vperm.xlu0 %4433, %v632
    %v4435 = vpop.permute.xlu0 %4434
    %4437 = vset.pattern.permute.xlu0 2
    %4438 = vperm.xlu0 %4437, %v633
    %v4439 = vpop.permute.xlu0 %4438
    %4441 = vset.pattern.permute.xlu0 2
    %4442 = vperm.xlu0 %4441, %v634
    %v4443 = vpop.permute.xlu0 %4442
    %4445 = vset.pattern.permute.xlu0 2
    %4446 = vperm.xlu0 %4445, %v635
    %v4447 = vpop.permute.xlu0 %4446
    %4449 = vset.pattern.permute.xlu0 2
    %4450 = vperm.xlu0 %4449, %v636
    %v4451 = vpop.permute.xlu0 %4450
    %4453 = vset.pattern.permute.xlu0 2
    %4454 = vperm.xlu0 %4453, %v637
    %v4455 = vpop.permute.xlu0 %4454
    %4457 = vset.pattern.permute.xlu0 2
    %4458 = vperm.xlu0 %4457, %v638
    %v4459 = vpop.permute.xlu0 %4458
    %4461 = vset.pattern.permute.xlu0 2
    %4462 = vperm.xlu0 %4461, %v639
    %v4463 = vpop.permute.xlu0 %4462
    %4465 = vset.pattern.permute.xlu0 2
    %4466 = vperm.xlu0 %4465, %v640
    %v4467 = vpop.permute.xlu0 %4466
    %4469 = vset.pattern.permute.xlu0 2
    %4470 = vperm.xlu0 %4469, %v641
    %v4471 = vpop.permute.xlu0 %4470
    %4473 = vset.pattern.permute.xlu0 2
    %4474 = vperm.xlu0 %4473, %v642
    %v4475 = vpop.permute.xlu0 %4474
    %4477 = vset.pattern.permute.xlu0 2
    %4478 = vperm.xlu0 %4477, %v643
    %v4479 = vpop.permute.xlu0 %4478
    %4481 = vset.pattern.permute.xlu0 2
    %4482 = vperm.xlu0 %4481, %v644
    %v4483 = vpop.permute.xlu0 %4482
    %4485 = vset.pattern.permute.xlu0 2
    %4486 = vperm.xlu0 %4485, %v645
    %v4487 = vpop.permute.xlu0 %4486
    %4489 = vset.pattern.permute.xlu0 2
    %4490 = vperm.xlu0 %4489, %v646
    %v4491 = vpop.permute.xlu0 %4490
    %4493 = vset.pattern.permute.xlu0 2
    %4494 = vperm.xlu0 %4493, %v647
    %v4495 = vpop.permute.xlu0 %4494
    %4497 = vset.pattern.permute.xlu0 2
    %4498 = vperm.xlu0 %4497, %v648
    %v4499 = vpop.permute.xlu0 %4498
    %4501 = vset.pattern.permute.xlu0 2
    %4502 = vperm.xlu0 %4501, %v649
    %v4503 = vpop.permute.xlu0 %4502
    %4505 = vset.pattern.permute.xlu0 2
    %4506 = vperm.xlu0 %4505, %v650
    %v4507 = vpop.permute.xlu0 %4506
    %4509 = vset.pattern.permute.xlu0 2
    %4510 = vperm.xlu0 %4509, %v651
    %v4511 = vpop.permute.xlu0 %4510
    %4513 = vset.pattern.permute.xlu0 2
    %4514 = vperm.xlu0 %4513, %v652
    %v4515 = vpop.permute.xlu0 %4514
    %4517 = vset.pattern.permute.xlu0 2
    %4518 = vperm.xlu0 %4517, %v653
    %v4519 = vpop.permute.xlu0 %4518
    %4521 = vset.pattern.permute.xlu0 2
    %4522 = vperm.xlu0 %4521, %v654
    %v4523 = vpop.permute.xlu0 %4522
    %4525 = vset.pattern.permute.xlu0 2
    %4526 = vperm.xlu0 %4525, %v655
    %v4527 = vpop.permute.xlu0 %4526
    %4529 = vset.pattern.permute.xlu0 2
    %4530 = vperm.xlu0 %4529, %v656
    %v4531 = vpop.permute.xlu0 %4530
    %4533 = vset.pattern.permute.xlu0 2
    %4534 = vperm.xlu0 %4533, %v657
    %v4535 = vpop.permute.xlu0 %4534
    %4537 = vset.pattern.permute.xlu0 2
    %4538 = vperm.xlu0 %4537, %v658
    %v4539 = vpop.permute.xlu0 %4538
    %4541 = vset.pattern.permute.xlu0 2
    %4542 = vperm.xlu0 %4541, %v659
    %v4543 = vpop.permute.xlu0 %4542
    %4545 = vset.pattern.permute.xlu0 2
    %4546 = vperm.xlu0 %4545, %v660
    %v4547 = vpop.permute.xlu0 %4546
    %4549 = vset.pattern.permute.xlu0 2
    %4550 = vperm.xlu0 %4549, %v661
    %v4551 = vpop.permute.xlu0 %4550
    %4553 = vset.pattern.permute.xlu0 2
    %4554 = vperm.xlu0 %4553, %v662
    %v4555 = vpop.permute.xlu0 %4554
    %4557 = vset.pattern.permute.xlu0 2
    %4558 = vperm.xlu0 %4557, %v663
    %v4559 = vpop.permute.xlu0 %4558
    %4561 = vset.pattern.permute.xlu0 2
    %4562 = vperm.xlu0 %4561, %v664
    %v4563 = vpop.permute.xlu0 %4562
    %4565 = vset.pattern.permute.xlu0 2
    %4566 = vperm.xlu0 %4565, %v665
    %v4567 = vpop.permute.xlu0 %4566
    %4569 = vset.pattern.permute.xlu0 2
    %4570 = vperm.xlu0 %4569, %v666
    %v4571 = vpop.permute.xlu0 %4570
    %4573 = vset.pattern.permute.xlu0 2
    %4574 = vperm.xlu0 %4573, %v667
    %v4575 = vpop.permute.xlu0 %4574
    %4577 = vset.pattern.permute.xlu0 2
    %4578 = vperm.xlu0 %4577, %v668
    %v4579 = vpop.permute.xlu0 %4578
    %4581 = vset.pattern.permute.xlu0 2
    %4582 = vperm.xlu0 %4581, %v669
    %v4583 = vpop.permute.xlu0 %4582
    %4585 = vset.pattern.permute.xlu0 2
    %4586 = vperm.xlu0 %4585, %v670
    %v4587 = vpop.permute.xlu0 %4586
    %4589 = vset.pattern.permute.xlu0 2
    %4590 = vperm.xlu0 %4589, %v671
    %v4591 = vpop.permute.xlu0 %4590
    %4593 = vset.pattern.permute.xlu0 2
    %4594 = vperm.xlu0 %4593, %v672
    %v4595 = vpop.permute.xlu0 %4594
    %4597 = vset.pattern.permute.xlu0 2
    %4598 = vperm.xlu0 %4597, %v673
    %v4599 = vpop.permute.xlu0 %4598
    %4601 = vset.pattern.permute.xlu0 2
    %4602 = vperm.xlu0 %4601, %v674
    %v4603 = vpop.permute.xlu0 %4602
    %4605 = vset.pattern.permute.xlu0 2
    %4606 = vperm.xlu0 %4605, %v675
    %v4607 = vpop.permute.xlu0 %4606
    %4609 = vset.pattern.permute.xlu0 2
    %4610 = vperm.xlu0 %4609, %v676
    %v4611 = vpop.permute.xlu0 %4610
    %4613 = vset.pattern.permute.xlu0 2
    %4614 = vperm.xlu0 %4613, %v677
    %v4615 = vpop.permute.xlu0 %4614
    %4617 = vset.pattern.permute.xlu0 2
    %4618 = vperm.xlu0 %4617, %v678
    %v4619 = vpop.permute.xlu0 %4618
    %4621 = vset.pattern.permute.xlu0 2
    %4622 = vperm.xlu0 %4621, %v679
    %v4623 = vpop.permute.xlu0 %4622
    %4625 = vset.pattern.permute.xlu0 2
    %4626 = vperm.xlu0 %4625, %v680
    %v4627 = vpop.permute.xlu0 %4626
    %4629 = vset.pattern.permute.xlu0 2
    %4630 = vperm.xlu0 %4629, %v681
    %v4631 = vpop.permute.xlu0 %4630
    %4633 = vset.pattern.permute.xlu0 2
    %4634 = vperm.xlu0 %4633, %v682
    %v4635 = vpop.permute.xlu0 %4634
    %4637 = vset.pattern.permute.xlu0 2
    %4638 = vperm.xlu0 %4637, %v683
    %v4639 = vpop.permute.xlu0 %4638
    %4641 = vset.pattern.permute.xlu0 2
    %4642 = vperm.xlu0 %4641, %v684
    %v4643 = vpop.permute.xlu0 %4642
    %4645 = vset.pattern.permute.xlu0 2
    %4646 = vperm.xlu0 %4645, %v685
    %v4647 = vpop.permute.xlu0 %4646
    %4649 = vset.pattern.permute.xlu0 2
    %4650 = vperm.xlu0 %4649, %v686
    %v4651 = vpop.permute.xlu0 %4650
    %4653 = vset.pattern.permute.xlu0 2
    %4654 = vperm.xlu0 %4653, %v687
    %v4655 = vpop.permute.xlu0 %4654
    %4657 = vset.pattern.permute.xlu0 2
    %4658 = vperm.xlu0 %4657, %v688
    %v4659 = vpop.permute.xlu0 %4658
    %4661 = vset.pattern.permute.xlu0 2
    %4662 = vperm.xlu0 %4661, %v689
    %v4663 = vpop.permute.xlu0 %4662
    %4665 = vset.pattern.permute.xlu0 2
    %4666 = vperm.xlu0 %4665, %v690
    %v4667 = vpop.permute.xlu0 %4666
    %4669 = vset.pattern.permute.xlu0 2
    %4670 = vperm.xlu0 %4669, %v691
    %v4671 = vpop.permute.xlu0 %4670
    %4673 = vset.pattern.permute.xlu0 2
    %4674 = vperm.xlu0 %4673, %v692
    %v4675 = vpop.permute.xlu0 %4674
    %4677 = vset.pattern.permute.xlu0 2
    %4678 = vperm.xlu0 %4677, %v693
    %v4679 = vpop.permute.xlu0 %4678
    %4681 = vset.pattern.permute.xlu0 2
    %4682 = vperm.xlu0 %4681, %v694
    %v4683 = vpop.permute.xlu0 %4682
    %4685 = vset.pattern.permute.xlu0 2
    %4686 = vperm.xlu0 %4685, %v695
    %v4687 = vpop.permute.xlu0 %4686
    %4689 = vset.pattern.permute.xlu0 2
    %4690 = vperm.xlu0 %4689, %v696
    %v4691 = vpop.permute.xlu0 %4690
    %4693 = vset.pattern.permute.xlu0 2
    %4694 = vperm.xlu0 %4693, %v697
    %v4695 = vpop.permute.xlu0 %4694
    %4697 = vset.pattern.permute.xlu0 2
    %4698 = vperm.xlu0 %4697, %v698
    %v4699 = vpop.permute.xlu0 %4698
    %4701 = vset.pattern.permute.xlu0 2
    %4702 = vperm.xlu0 %4701, %v699
    %v4703 = vpop.permute.xlu0 %4702
    %4705 = vset.pattern.permute.xlu0 2
    %4706 = vperm.xlu0 %4705, %v700
    %v4707 = vpop.permute.xlu0 %4706
    %4709 = vset.pattern.permute.xlu0 2
    %4710 = vperm.xlu0 %4709, %v701
    %v4711 = vpop.permute.xlu0 %4710
    %4713 = vset.pattern.permute.xlu0 2
    %4714 = vperm.xlu0 %4713, %v702
    %v4715 = vpop.permute.xlu0 %4714
    %4717 = vset.pattern.permute.xlu0 2
    %4718 = vperm.xlu0 %4717, %v703
    %v4719 = vpop.permute.xlu0 %4718
    %4721 = vset.pattern.permute.xlu0 2
    %4722 = vperm.xlu0 %4721, %v704
    %v4723 = vpop.permute.xlu0 %4722
    %4725 = vset.pattern.permute.xlu0 2
    %4726 = vperm.xlu0 %4725, %v705
    %v4727 = vpop.permute.xlu0 %4726
    %4729 = vset.pattern.permute.xlu0 2
    %4730 = vperm.xlu0 %4729, %v706
    %v4731 = vpop.permute.xlu0 %4730
    %4733 = vset.pattern.permute.xlu0 2
    %4734 = vperm.xlu0 %4733, %v707
    %v4735 = vpop.permute.xlu0 %4734
    %4737 = vset.pattern.permute.xlu0 2
    %4738 = vperm.xlu0 %4737, %v708
    %v4739 = vpop.permute.xlu0 %4738
    %4741 = vset.pattern.permute.xlu0 2
    %4742 = vperm.xlu0 %4741, %v709
    %v4743 = vpop.permute.xlu0 %4742
    %4745 = vset.pattern.permute.xlu0 2
    %4746 = vperm.xlu0 %4745, %v710
    %v4747 = vpop.permute.xlu0 %4746
    %4749 = vset.pattern.permute.xlu0 2
    %4750 = vperm.xlu0 %4749, %v711
    %v4751 = vpop.permute.xlu0 %4750
    %4753 = vset.pattern.permute.xlu0 2
    %4754 = vperm.xlu0 %4753, %v712
    %v4755 = vpop.permute.xlu0 %4754
    %4757 = vset.pattern.permute.xlu0 2
    %4758 = vperm.xlu0 %4757, %v713
    %v4759 = vpop.permute.xlu0 %4758
    %4761 = vset.pattern.permute.xlu0 2
    %4762 = vperm.xlu0 %4761, %v714
    %v4763 = vpop.permute.xlu0 %4762
    %4765 = vset.pattern.permute.xlu0 2
    %4766 = vperm.xlu0 %4765, %v715
    %v4767 = vpop.permute.xlu0 %4766
    %4769 = vset.pattern.permute.xlu0 2
    %4770 = vperm.xlu0 %4769, %v716
    %v4771 = vpop.permute.xlu0 %4770
    %4773 = vset.pattern.permute.xlu0 2
    %4774 = vperm.xlu0 %4773, %v717
    %v4775 = vpop.permute.xlu0 %4774
    %4777 = vset.pattern.permute.xlu0 2
    %4778 = vperm.xlu0 %4777, %v718
    %v4779 = vpop.permute.xlu0 %4778
    %4781 = vset.pattern.permute.xlu0 2
    %4782 = vperm.xlu0 %4781, %v719
    %v4783 = vpop.permute.xlu0 %4782
    %4785 = vset.pattern.permute.xlu0 2
    %4786 = vperm.xlu0 %4785, %v720
    %v4787 = vpop.permute.xlu0 %4786
    %4789 = vset.pattern.permute.xlu0 2
    %4790 = vperm.xlu0 %4789, %v721
    %v4791 = vpop.permute.xlu0 %4790
    %4793 = vset.pattern.permute.xlu0 2
    %4794 = vperm.xlu0 %4793, %v722
    %v4795 = vpop.permute.xlu0 %4794
    %4797 = vset.pattern.permute.xlu0 2
    %4798 = vperm.xlu0 %4797, %v723
    %v4799 = vpop.permute.xlu0 %4798
    %4801 = vset.pattern.permute.xlu0 2
    %4802 = vperm.xlu0 %4801, %v724
    %v4803 = vpop.permute.xlu0 %4802
    %4805 = vset.pattern.permute.xlu0 2
    %4806 = vperm.xlu0 %4805, %v725
    %v4807 = vpop.permute.xlu0 %4806
    %4809 = vset.pattern.permute.xlu0 2
    %4810 = vperm.xlu0 %4809, %v726
    %v4811 = vpop.permute.xlu0 %4810
    %4813 = vset.pattern.permute.xlu0 2
    %4814 = vperm.xlu0 %4813, %v727
    %v4815 = vpop.permute.xlu0 %4814
    %4817 = vset.pattern.permute.xlu0 2
    %4818 = vperm.xlu0 %4817, %v728
    %v4819 = vpop.permute.xlu0 %4818
    %4821 = vset.pattern.permute.xlu0 2
    %4822 = vperm.xlu0 %4821, %v729
    %v4823 = vpop.permute.xlu0 %4822
    %4825 = vset.pattern.permute.xlu0 2
    %4826 = vperm.xlu0 %4825, %v730
    %v4827 = vpop.permute.xlu0 %4826
    %4829 = vset.pattern.permute.xlu0 2
    %4830 = vperm.xlu0 %4829, %v731
    %v4831 = vpop.permute.xlu0 %4830
    %4833 = vset.pattern.permute.xlu0 2
    %4834 = vperm.xlu0 %4833, %v732
    %v4835 = vpop.permute.xlu0 %4834
    %4837 = vset.pattern.permute.xlu0 2
    %4838 = vperm.xlu0 %4837, %v733
    %v4839 = vpop.permute.xlu0 %4838
    %4841 = vset.pattern.permute.xlu0 2
    %4842 = vperm.xlu0 %4841, %v734
    %v4843 = vpop.permute.xlu0 %4842
    %4845 = vset.pattern.permute.xlu0 2
    %4846 = vperm.xlu0 %4845, %v735
    %v4847 = vpop.permute.xlu0 %4846
    %4849 = vset.pattern.permute.xlu0 2
    %4850 = vperm.xlu0 %4849, %v736
    %v4851 = vpop.permute.xlu0 %4850
    %4853 = vset.pattern.permute.xlu0 2
    %4854 = vperm.xlu0 %4853, %v737
    %v4855 = vpop.permute.xlu0 %4854
    %4857 = vset.pattern.permute.xlu0 2
    %4858 = vperm.xlu0 %4857, %v738
    %v4859 = vpop.permute.xlu0 %4858
    %4861 = vset.pattern.permute.xlu0 2
    %4862 = vperm.xlu0 %4861, %v739
    %v4863 = vpop.permute.xlu0 %4862
    %4865 = vset.pattern.permute.xlu0 2
    %4866 = vperm.xlu0 %4865, %v740
    %v4867 = vpop.permute.xlu0 %4866
    %4869 = vset.pattern.permute.xlu0 2
    %4870 = vperm.xlu0 %4869, %v741
    %v4871 = vpop.permute.xlu0 %4870
    %4873 = vset.pattern.permute.xlu0 2
    %4874 = vperm.xlu0 %4873, %v742
    %v4875 = vpop.permute.xlu0 %4874
    %4877 = vset.pattern.permute.xlu0 2
    %4878 = vperm.xlu0 %4877, %v743
    %v4879 = vpop.permute.xlu0 %4878
    %4881 = vset.pattern.permute.xlu0 2
    %4882 = vperm.xlu0 %4881, %v744
    %v4883 = vpop.permute.xlu0 %4882
    %4885 = vset.pattern.permute.xlu0 2
    %4886 = vperm.xlu0 %4885, %v745
    %v4887 = vpop.permute.xlu0 %4886
    %4889 = vset.pattern.permute.xlu0 2
    %4890 = vperm.xlu0 %4889, %v746
    %v4891 = vpop.permute.xlu0 %4890
    %4893 = vset.pattern.permute.xlu0 2
    %4894 = vperm.xlu0 %4893, %v747
    %v4895 = vpop.permute.xlu0 %4894
    %4897 = vset.pattern.permute.xlu0 2
    %4898 = vperm.xlu0 %4897, %v748
    %v4899 = vpop.permute.xlu0 %4898
    %4901 = vset.pattern.permute.xlu0 2
    %4902 = vperm.xlu0 %4901, %v749
    %v4903 = vpop.permute.xlu0 %4902
    %4905 = vset.pattern.permute.xlu0 2
    %4906 = vperm.xlu0 %4905, %v750
    %v4907 = vpop.permute.xlu0 %4906
    %4909 = vset.pattern.permute.xlu0 2
    %4910 = vperm.xlu0 %4909, %v751
    %v4911 = vpop.permute.xlu0 %4910
    %4913 = vset.pattern.permute.xlu0 2
    %4914 = vperm.xlu0 %4913, %v752
    %v4915 = vpop.permute.xlu0 %4914
    %4917 = vset.pattern.permute.xlu0 2
    %4918 = vperm.xlu0 %4917, %v753
    %v4919 = vpop.permute.xlu0 %4918
    %4921 = vset.pattern.permute.xlu0 2
    %4922 = vperm.xlu0 %4921, %v754
    %v4923 = vpop.permute.xlu0 %4922
    %4925 = vset.pattern.permute.xlu0 2
    %4926 = vperm.xlu0 %4925, %v755
    %v4927 = vpop.permute.xlu0 %4926
    %4929 = vset.pattern.permute.xlu0 2
    %4930 = vperm.xlu0 %4929, %v756
    %v4931 = vpop.permute.xlu0 %4930
    %4933 = vset.pattern.permute.xlu0 2
    %4934 = vperm.xlu0 %4933, %v757
    %v4935 = vpop.permute.xlu0 %4934
    %4937 = vset.pattern.permute.xlu0 2
    %4938 = vperm.xlu0 %4937, %v758
    %v4939 = vpop.permute.xlu0 %4938
    %4941 = vset.pattern.permute.xlu0 2
    %4942 = vperm.xlu0 %4941, %v759
    %v4943 = vpop.permute.xlu0 %4942
    %4945 = vset.pattern.permute.xlu0 2
    %4946 = vperm.xlu0 %4945, %v760
    %v4947 = vpop.permute.xlu0 %4946
    %4949 = vset.pattern.permute.xlu0 2
    %4950 = vperm.xlu0 %4949, %v761
    %v4951 = vpop.permute.xlu0 %4950
    %4953 = vset.pattern.permute.xlu0 2
    %4954 = vperm.xlu0 %4953, %v762
    %v4955 = vpop.permute.xlu0 %4954
    %4957 = vset.pattern.permute.xlu0 2
    %4958 = vperm.xlu0 %4957, %v763
    %v4959 = vpop.permute.xlu0 %4958
    %4961 = vset.pattern.permute.xlu0 2
    %4962 = vperm.xlu0 %4961, %v764
    %v4963 = vpop.permute.xlu0 %4962
    %4965 = vset.pattern.permute.xlu0 2
    %4966 = vperm.xlu0 %4965, %v765
    %v4967 = vpop.permute.xlu0 %4966
    %4969 = vset.pattern.permute.xlu0 2
    %4970 = vperm.xlu0 %4969, %v766
    %v4971 = vpop.permute.xlu0 %4970
    %4973 = vset.pattern.permute.xlu0 2
    %4974 = vperm.xlu0 %4973, %v767
    %v4975 = vpop.permute.xlu0 %4974
    %4977 = vset.pattern.permute.xlu0 2
    %4978 = vperm.xlu0 %4977, %v768
    %v4979 = vpop.permute.xlu0 %4978
    %4981 = vset.pattern.permute.xlu0 2
    %4982 = vperm.xlu0 %4981, %v769
    %v4983 = vpop.permute.xlu0 %4982
    %4985 = vset.pattern.permute.xlu0 2
    %4986 = vperm.xlu0 %4985, %v770
    %v4987 = vpop.permute.xlu0 %4986
    %4989 = vset.pattern.permute.xlu0 2
    %4990 = vperm.xlu0 %4989, %v771
    %v4991 = vpop.permute.xlu0 %4990
    %4993 = vset.pattern.permute.xlu0 2
    %4994 = vperm.xlu0 %4993, %v772
    %v4995 = vpop.permute.xlu0 %4994
    %4997 = vset.pattern.permute.xlu0 2
    %4998 = vperm.xlu0 %4997, %v773
    %v4999 = vpop.permute.xlu0 %4998
    %5001 = vset.pattern.permute.xlu0 2
    %5002 = vperm.xlu0 %5001, %v774
    %v5003 = vpop.permute.xlu0 %5002
    %5005 = vset.pattern.permute.xlu0 2
    %5006 = vperm.xlu0 %5005, %v775
    %v5007 = vpop.permute.xlu0 %5006
    %5009 = vset.pattern.permute.xlu0 2
    %5010 = vperm.xlu0 %5009, %v776
    %v5011 = vpop.permute.xlu0 %5010
    %5013 = vset.pattern.permute.xlu0 2
    %5014 = vperm.xlu0 %5013, %v777
    %v5015 = vpop.permute.xlu0 %5014
    %5017 = vset.pattern.permute.xlu0 2
    %5018 = vperm.xlu0 %5017, %v778
    %v5019 = vpop.permute.xlu0 %5018
    %5021 = vset.pattern.permute.xlu0 2
    %5022 = vperm.xlu0 %5021, %v779
    %v5023 = vpop.permute.xlu0 %5022
    %5025 = vset.pattern.permute.xlu0 2
    %5026 = vperm.xlu0 %5025, %v780
    %v5027 = vpop.permute.xlu0 %5026
    %5029 = vset.pattern.permute.xlu0 2
    %5030 = vperm.xlu0 %5029, %v781
    %v5031 = vpop.permute.xlu0 %5030
    %5033 = vset.pattern.permute.xlu0 2
    %5034 = vperm.xlu0 %5033, %v782
    %v5035 = vpop.permute.xlu0 %5034
    %5037 = vset.pattern.permute.xlu0 2
    %5038 = vperm.xlu0 %5037, %v783
    %v5039 = vpop.permute.xlu0 %5038
    %5041 = vset.pattern.permute.xlu0 2
    %5042 = vperm.xlu0 %5041, %v784
    %v5043 = vpop.permute.xlu0 %5042
    %5045 = vset.pattern.permute.xlu0 2
    %5046 = vperm.xlu0 %5045, %v785
    %v5047 = vpop.permute.xlu0 %5046
    %5049 = vset.pattern.permute.xlu0 2
    %5050 = vperm.xlu0 %5049, %v786
    %v5051 = vpop.permute.xlu0 %5050
    %5053 = vset.pattern.permute.xlu0 2
    %5054 = vperm.xlu0 %5053, %v787
    %v5055 = vpop.permute.xlu0 %5054
    %5057 = vset.pattern.permute.xlu0 2
    %5058 = vperm.xlu0 %5057, %v788
    %v5059 = vpop.permute.xlu0 %5058
    %5061 = vset.pattern.permute.xlu0 2
    %5062 = vperm.xlu0 %5061, %v789
    %v5063 = vpop.permute.xlu0 %5062
    %5065 = vset.pattern.permute.xlu0 2
    %5066 = vperm.xlu0 %5065, %v790
    %v5067 = vpop.permute.xlu0 %5066
    %5069 = vset.pattern.permute.xlu0 2
    %5070 = vperm.xlu0 %5069, %v791
    %v5071 = vpop.permute.xlu0 %5070
    %5073 = vset.pattern.permute.xlu0 2
    %5074 = vperm.xlu0 %5073, %v792
    %v5075 = vpop.permute.xlu0 %5074
    %5077 = vset.pattern.permute.xlu0 2
    %5078 = vperm.xlu0 %5077, %v793
    %v5079 = vpop.permute.xlu0 %5078
    %5081 = vset.pattern.permute.xlu0 2
    %5082 = vperm.xlu0 %5081, %v794
    %v5083 = vpop.permute.xlu0 %5082
    %5085 = vset.pattern.permute.xlu0 2
    %5086 = vperm.xlu0 %5085, %v795
    %v5087 = vpop.permute.xlu0 %5086
    %5089 = vset.pattern.permute.xlu0 2
    %5090 = vperm.xlu0 %5089, %v796
    %v5091 = vpop.permute.xlu0 %5090
    %5093 = vset.pattern.permute.xlu0 2
    %5094 = vperm.xlu0 %5093, %v797
    %v5095 = vpop.permute.xlu0 %5094
    %5097 = vset.pattern.permute.xlu0 2
    %5098 = vperm.xlu0 %5097, %v798
    %v5099 = vpop.permute.xlu0 %5098
    %5101 = vset.pattern.permute.xlu0 2
    %5102 = vperm.xlu0 %5101, %v799
    %v5103 = vpop.permute.xlu0 %5102
    %5105 = vset.pattern.permute.xlu0 2
    %5106 = vperm.xlu0 %5105, %v800
    %v5107 = vpop.permute.xlu0 %5106
    %5109 = vset.pattern.permute.xlu0 2
    %5110 = vperm.xlu0 %5109, %v801
    %v5111 = vpop.permute.xlu0 %5110
    %5113 = vset.pattern.permute.xlu0 2
    %5114 = vperm.xlu0 %5113, %v802
    %v5115 = vpop.permute.xlu0 %5114
    %5117 = vset.pattern.permute.xlu0 2
    %5118 = vperm.xlu0 %5117, %v803
    %v5119 = vpop.permute.xlu0 %5118
    %5121 = vset.pattern.permute.xlu0 2
    %5122 = vperm.xlu0 %5121, %v804
    %v5123 = vpop.permute.xlu0 %5122
    %5125 = vset.pattern.permute.xlu0 2
    %5126 = vperm.xlu0 %5125, %v805
    %v5127 = vpop.permute.xlu0 %5126
    %5129 = vset.pattern.permute.xlu0 2
    %5130 = vperm.xlu0 %5129, %v806
    %v5131 = vpop.permute.xlu0 %5130
    %5133 = vset.pattern.permute.xlu0 2
    %5134 = vperm.xlu0 %5133, %v807
    %v5135 = vpop.permute.xlu0 %5134
    %5137 = vset.pattern.permute.xlu0 2
    %5138 = vperm.xlu0 %5137, %v808
    %v5139 = vpop.permute.xlu0 %5138
    %5141 = vset.pattern.permute.xlu0 2
    %5142 = vperm.xlu0 %5141, %v809
    %v5143 = vpop.permute.xlu0 %5142
    %5145 = vset.pattern.permute.xlu0 2
    %5146 = vperm.xlu0 %5145, %v810
    %v5147 = vpop.permute.xlu0 %5146
    %5149 = vset.pattern.permute.xlu0 2
    %5150 = vperm.xlu0 %5149, %v811
    %v5151 = vpop.permute.xlu0 %5150
    %5153 = vset.pattern.permute.xlu0 2
    %5154 = vperm.xlu0 %5153, %v812
    %v5155 = vpop.permute.xlu0 %5154
    %5157 = vset.pattern.permute.xlu0 2
    %5158 = vperm.xlu0 %5157, %v813
    %v5159 = vpop.permute.xlu0 %5158
    %5161 = vset.pattern.permute.xlu0 2
    %5162 = vperm.xlu0 %5161, %v814
    %v5163 = vpop.permute.xlu0 %5162
    %5165 = vset.pattern.permute.xlu0 2
    %5166 = vperm.xlu0 %5165, %v815
    %v5167 = vpop.permute.xlu0 %5166
    %5169 = vset.pattern.permute.xlu0 2
    %5170 = vperm.xlu0 %5169, %v816
    %v5171 = vpop.permute.xlu0 %5170
    %5173 = vset.pattern.permute.xlu0 2
    %5174 = vperm.xlu0 %5173, %v817
    %v5175 = vpop.permute.xlu0 %5174
    %5177 = vset.pattern.permute.xlu0 2
    %5178 = vperm.xlu0 %5177, %v818
    %v5179 = vpop.permute.xlu0 %5178
    %5181 = vset.pattern.permute.xlu0 2
    %5182 = vperm.xlu0 %5181, %v819
    %v5183 = vpop.permute.xlu0 %5182
    %5185 = vset.pattern.permute.xlu0 2
    %5186 = vperm.xlu0 %5185, %v820
    %v5187 = vpop.permute.xlu0 %5186
    %v5189 = vlaneseq
    %v5190 = vshrl.u32 %v5189, 7
    %v5191 = vsub.s32 2, %v5190
    %v5192 = vrot.slane %v821, %v5191
    %v5193 = vmul.f32 %v4167, %v5192
    %v5194 = vmul.f32 %v4171, %v5192
    %v5195 = vmul.f32 %v4175, %v5192
    %v5196 = vmul.f32 %v4179, %v5192
    %v5197 = vmul.f32 %v4183, %v5192
    %v5198 = vmul.f32 %v4187, %v5192
    %v5199 = vmul.f32 %v4191, %v5192
    %v5200 = vmul.f32 %v4195, %v5192
    %v5201 = vmul.f32 %v4199, %v5192
    %v5202 = vmul.f32 %v4203, %v5192
    %v5203 = vmul.f32 %v4207, %v5192
    %v5204 = vmul.f32 %v4211, %v5192
    %v5205 = vmul.f32 %v4215, %v5192
    %v5206 = vmul.f32 %v4219, %v5192
    %v5207 = vmul.f32 %v4223, %v5192
    %v5208 = vmul.f32 %v4227, %v5192
    %v5209 = vmul.f32 %v4231, %v5192
    %v5210 = vmul.f32 %v4235, %v5192
    %v5211 = vmul.f32 %v4239, %v5192
    %v5212 = vmul.f32 %v4243, %v5192
    %v5213 = vmul.f32 %v4247, %v5192
    %v5214 = vmul.f32 %v4251, %v5192
    %v5215 = vmul.f32 %v4255, %v5192
    %v5216 = vmul.f32 %v4259, %v5192
    %v5217 = vmul.f32 %v4263, %v5192
    %v5218 = vmul.f32 %v4267, %v5192
    %v5219 = vmul.f32 %v4271, %v5192
    %v5220 = vmul.f32 %v4275, %v5192
    %v5221 = vmul.f32 %v4279, %v5192
    %v5222 = vmul.f32 %v4283, %v5192
    %v5223 = vmul.f32 %v4287, %v5192
    %v5224 = vmul.f32 %v4291, %v5192
    %v5225 = vmul.f32 %v4295, %v5192
    %v5226 = vmul.f32 %v4299, %v5192
    %v5227 = vmul.f32 %v4303, %v5192
    %v5228 = vmul.f32 %v4307, %v5192
    %v5229 = vmul.f32 %v4311, %v5192
    %v5230 = vmul.f32 %v4315, %v5192
    %v5231 = vmul.f32 %v4319, %v5192
    %v5232 = vmul.f32 %v4323, %v5192
    %v5233 = vmul.f32 %v4327, %v5192
    %v5234 = vmul.f32 %v4331, %v5192
    %v5235 = vmul.f32 %v4335, %v5192
    %v5236 = vmul.f32 %v4339, %v5192
    %v5237 = vmul.f32 %v4343, %v5192
    %v5238 = vmul.f32 %v4347, %v5192
    %v5239 = vmul.f32 %v4351, %v5192
    %v5240 = vmul.f32 %v4355, %v5192
    %v5241 = vmul.f32 %v4359, %v5192
    %v5242 = vmul.f32 %v4363, %v5192
    %v5243 = vmul.f32 %v4367, %v5192
    %v5244 = vmul.f32 %v4371, %v5192
    %v5245 = vmul.f32 %v4375, %v5192
    %v5246 = vmul.f32 %v4379, %v5192
    %v5247 = vmul.f32 %v4383, %v5192
    %v5248 = vmul.f32 %v4387, %v5192
    %v5249 = vmul.f32 %v4391, %v5192
    %v5250 = vmul.f32 %v4395, %v5192
    %v5251 = vmul.f32 %v4399, %v5192
    %v5252 = vmul.f32 %v4403, %v5192
    %v5253 = vmul.f32 %v4407, %v5192
    %v5254 = vmul.f32 %v4411, %v5192
    %v5255 = vmul.f32 %v4415, %v5192
    %v5256 = vmul.f32 %v4419, %v5192
    %v5257 = vmul.f32 %v4423, %v5192
    %v5258 = vmul.f32 %v4427, %v5192
    %v5259 = vmul.f32 %v4431, %v5192
    %v5260 = vmul.f32 %v4435, %v5192
    %v5261 = vmul.f32 %v4439, %v5192
    %v5262 = vmul.f32 %v4443, %v5192
    %v5263 = vmul.f32 %v4447, %v5192
    %v5264 = vmul.f32 %v4451, %v5192
    %v5265 = vmul.f32 %v4455, %v5192
    %v5266 = vmul.f32 %v4459, %v5192
    %v5267 = vmul.f32 %v4463, %v5192
    %v5268 = vmul.f32 %v4467, %v5192
    %v5269 = vmul.f32 %v4471, %v5192
    %v5270 = vmul.f32 %v4475, %v5192
    %v5271 = vmul.f32 %v4479, %v5192
    %v5272 = vmul.f32 %v4483, %v5192
    %v5273 = vmul.f32 %v4487, %v5192
    %v5274 = vmul.f32 %v4491, %v5192
    %v5275 = vmul.f32 %v4495, %v5192
    %v5276 = vmul.f32 %v4499, %v5192
    %v5277 = vmul.f32 %v4503, %v5192
    %v5278 = vmul.f32 %v4507, %v5192
    %v5279 = vmul.f32 %v4511, %v5192
    %v5280 = vmul.f32 %v4515, %v5192
    %v5281 = vmul.f32 %v4519, %v5192
    %v5282 = vmul.f32 %v4523, %v5192
    %v5283 = vmul.f32 %v4527, %v5192
    %v5284 = vmul.f32 %v4531, %v5192
    %v5285 = vmul.f32 %v4535, %v5192
    %v5286 = vmul.f32 %v4539, %v5192
    %v5287 = vmul.f32 %v4543, %v5192
    %v5288 = vmul.f32 %v4547, %v5192
    %v5289 = vmul.f32 %v4551, %v5192
    %v5290 = vmul.f32 %v4555, %v5192
    %v5291 = vmul.f32 %v4559, %v5192
    %v5292 = vmul.f32 %v4563, %v5192
    %v5293 = vmul.f32 %v4567, %v5192
    %v5294 = vmul.f32 %v4571, %v5192
    %v5295 = vmul.f32 %v4575, %v5192
    %v5296 = vmul.f32 %v4579, %v5192
    %v5297 = vmul.f32 %v4583, %v5192
    %v5298 = vmul.f32 %v4587, %v5192
    %v5299 = vmul.f32 %v4591, %v5192
    %v5300 = vmul.f32 %v4595, %v5192
    %v5301 = vmul.f32 %v4599, %v5192
    %v5302 = vmul.f32 %v4603, %v5192
    %v5303 = vmul.f32 %v4607, %v5192
    %v5304 = vmul.f32 %v4611, %v5192
    %v5305 = vmul.f32 %v4615, %v5192
    %v5306 = vmul.f32 %v4619, %v5192
    %v5307 = vmul.f32 %v4623, %v5192
    %v5308 = vmul.f32 %v4627, %v5192
    %v5309 = vmul.f32 %v4631, %v5192
    %v5310 = vmul.f32 %v4635, %v5192
    %v5311 = vmul.f32 %v4639, %v5192
    %v5312 = vmul.f32 %v4643, %v5192
    %v5313 = vmul.f32 %v4647, %v5192
    %v5314 = vmul.f32 %v4651, %v5192
    %v5315 = vmul.f32 %v4655, %v5192
    %v5316 = vmul.f32 %v4659, %v5192
    %v5317 = vmul.f32 %v4663, %v5192
    %v5318 = vmul.f32 %v4667, %v5192
    %v5319 = vmul.f32 %v4671, %v5192
    %v5320 = vmul.f32 %v4675, %v5192
    %v5321 = vmul.f32 %v4679, %v5192
    %v5322 = vmul.f32 %v4683, %v5192
    %v5323 = vmul.f32 %v4687, %v5192
    %v5324 = vmul.f32 %v4691, %v5192
    %v5325 = vmul.f32 %v4695, %v5192
    %v5326 = vmul.f32 %v4699, %v5192
    %v5327 = vmul.f32 %v4703, %v5192
    %v5328 = vmul.f32 %v4707, %v5192
    %v5329 = vmul.f32 %v4711, %v5192
    %v5330 = vmul.f32 %v4715, %v5192
    %v5331 = vmul.f32 %v4719, %v5192
    %v5332 = vmul.f32 %v4723, %v5192
    %v5333 = vmul.f32 %v4727, %v5192
    %v5334 = vmul.f32 %v4731, %v5192
    %v5335 = vmul.f32 %v4735, %v5192
    %v5336 = vmul.f32 %v4739, %v5192
    %v5337 = vmul.f32 %v4743, %v5192
    %v5338 = vmul.f32 %v4747, %v5192
    %v5339 = vmul.f32 %v4751, %v5192
    %v5340 = vmul.f32 %v4755, %v5192
    %v5341 = vmul.f32 %v4759, %v5192
    %v5342 = vmul.f32 %v4763, %v5192
    %v5343 = vmul.f32 %v4767, %v5192
    %v5344 = vmul.f32 %v4771, %v5192
    %v5345 = vmul.f32 %v4775, %v5192
    %v5346 = vmul.f32 %v4779, %v5192
    %v5347 = vmul.f32 %v4783, %v5192
    %v5348 = vmul.f32 %v4787, %v5192
    %v5349 = vmul.f32 %v4791, %v5192
    %v5350 = vmul.f32 %v4795, %v5192
    %v5351 = vmul.f32 %v4799, %v5192
    %v5352 = vmul.f32 %v4803, %v5192
    %v5353 = vmul.f32 %v4807, %v5192
    %v5354 = vmul.f32 %v4811, %v5192
    %v5355 = vmul.f32 %v4815, %v5192
    %v5356 = vmul.f32 %v4819, %v5192
    %v5357 = vmul.f32 %v4823, %v5192
    %v5358 = vmul.f32 %v4827, %v5192
    %v5359 = vmul.f32 %v4831, %v5192
    %v5360 = vmul.f32 %v4835, %v5192
    %v5361 = vmul.f32 %v4839, %v5192
    %v5362 = vmul.f32 %v4843, %v5192
    %v5363 = vmul.f32 %v4847, %v5192
    %v5364 = vmul.f32 %v4851, %v5192
    %v5365 = vmul.f32 %v4855, %v5192
    %v5366 = vmul.f32 %v4859, %v5192
    %v5367 = vmul.f32 %v4863, %v5192
    %v5368 = vmul.f32 %v4867, %v5192
    %v5369 = vmul.f32 %v4871, %v5192
    %v5370 = vmul.f32 %v4875, %v5192
    %v5371 = vmul.f32 %v4879, %v5192
    %v5372 = vmul.f32 %v4883, %v5192
    %v5373 = vmul.f32 %v4887, %v5192
    %v5374 = vmul.f32 %v4891, %v5192
    %v5375 = vmul.f32 %v4895, %v5192
    %v5376 = vmul.f32 %v4899, %v5192
    %v5377 = vmul.f32 %v4903, %v5192
    %v5378 = vmul.f32 %v4907, %v5192
    %v5379 = vmul.f32 %v4911, %v5192
    %v5380 = vmul.f32 %v4915, %v5192
    %v5381 = vmul.f32 %v4919, %v5192
    %v5382 = vmul.f32 %v4923, %v5192
    %v5383 = vmul.f32 %v4927, %v5192
    %v5384 = vmul.f32 %v4931, %v5192
    %v5385 = vmul.f32 %v4935, %v5192
    %v5386 = vmul.f32 %v4939, %v5192
    %v5387 = vmul.f32 %v4943, %v5192
    %v5388 = vmul.f32 %v4947, %v5192
    %v5389 = vmul.f32 %v4951, %v5192
    %v5390 = vmul.f32 %v4955, %v5192
    %v5391 = vmul.f32 %v4959, %v5192
    %v5392 = vmul.f32 %v4963, %v5192
    %v5393 = vmul.f32 %v4967, %v5192
    %v5394 = vmul.f32 %v4971, %v5192
    %v5395 = vmul.f32 %v4975, %v5192
    %v5396 = vmul.f32 %v4979, %v5192
    %v5397 = vmul.f32 %v4983, %v5192
    %v5398 = vmul.f32 %v4987, %v5192
    %v5399 = vmul.f32 %v4991, %v5192
    %v5400 = vmul.f32 %v4995, %v5192
    %v5401 = vmul.f32 %v4999, %v5192
    %v5402 = vmul.f32 %v5003, %v5192
    %v5403 = vmul.f32 %v5007, %v5192
    %v5404 = vmul.f32 %v5011, %v5192
    %v5405 = vmul.f32 %v5015, %v5192
    %v5406 = vmul.f32 %v5019, %v5192
    %v5407 = vmul.f32 %v5023, %v5192
    %v5408 = vmul.f32 %v5027, %v5192
    %v5409 = vmul.f32 %v5031, %v5192
    %v5410 = vmul.f32 %v5035, %v5192
    %v5411 = vmul.f32 %v5039, %v5192
    %v5412 = vmul.f32 %v5043, %v5192
    %v5413 = vmul.f32 %v5047, %v5192
    %v5414 = vmul.f32 %v5051, %v5192
    %v5415 = vmul.f32 %v5055, %v5192
    %v5416 = vmul.f32 %v5059, %v5192
    %v5417 = vmul.f32 %v5063, %v5192
    %v5418 = vmul.f32 %v5067, %v5192
    %v5419 = vmul.f32 %v5071, %v5192
    %v5420 = vmul.f32 %v5075, %v5192
    %v5421 = vmul.f32 %v5079, %v5192
    %v5422 = vmul.f32 %v5083, %v5192
    %v5423 = vmul.f32 %v5087, %v5192
    %v5424 = vmul.f32 %v5091, %v5192
    %v5425 = vmul.f32 %v5095, %v5192
    %v5426 = vmul.f32 %v5099, %v5192
    %v5427 = vmul.f32 %v5103, %v5192
    %v5428 = vmul.f32 %v5107, %v5192
    %v5429 = vmul.f32 %v5111, %v5192
    %v5430 = vmul.f32 %v5115, %v5192
    %v5431 = vmul.f32 %v5119, %v5192
    %v5432 = vmul.f32 %v5123, %v5192
    %v5433 = vmul.f32 %v5127, %v5192
    %v5434 = vmul.f32 %v5131, %v5192
    %v5435 = vmul.f32 %v5135, %v5192
    %v5436 = vmul.f32 %v5139, %v5192
    %v5437 = vmul.f32 %v5143, %v5192
    %v5438 = vmul.f32 %v5147, %v5192
    %v5439 = vmul.f32 %v5151, %v5192
    %v5440 = vmul.f32 %v5155, %v5192
    %v5441 = vmul.f32 %v5159, %v5192
    %v5442 = vmul.f32 %v5163, %v5192
    %v5443 = vmul.f32 %v5167, %v5192
    %v5444 = vmul.f32 %v5171, %v5192
    %v5445 = vmul.f32 %v5175, %v5192
    %v5446 = vmul.f32 %v5179, %v5192
    %v5447 = vmul.f32 %v5183, %v5192
    %v5448 = vmul.f32 %v5187, %v5192
    %v5449 = vadd.f32 %v3909, %v5193
    %v5450 = vadd.f32 %v3910, %v5194
    %v5451 = vadd.f32 %v3911, %v5195
    %v5452 = vadd.f32 %v3912, %v5196
    %v5453 = vadd.f32 %v3913, %v5197
    %v5454 = vadd.f32 %v3914, %v5198
    %v5455 = vadd.f32 %v3915, %v5199
    %v5456 = vadd.f32 %v3916, %v5200
    %v5457 = vadd.f32 %v3917, %v5201
    %v5458 = vadd.f32 %v3918, %v5202
    %v5459 = vadd.f32 %v3919, %v5203
    %v5460 = vadd.f32 %v3920, %v5204
    %v5461 = vadd.f32 %v3921, %v5205
    %v5462 = vadd.f32 %v3922, %v5206
    %v5463 = vadd.f32 %v3923, %v5207
    %v5464 = vadd.f32 %v3924, %v5208
    %v5465 = vadd.f32 %v3925, %v5209
    %v5466 = vadd.f32 %v3926, %v5210
    %v5467 = vadd.f32 %v3927, %v5211
    %v5468 = vadd.f32 %v3928, %v5212
    %v5469 = vadd.f32 %v3929, %v5213
    %v5470 = vadd.f32 %v3930, %v5214
    %v5471 = vadd.f32 %v3931, %v5215
    %v5472 = vadd.f32 %v3932, %v5216
    %v5473 = vadd.f32 %v3933, %v5217
    %v5474 = vadd.f32 %v3934, %v5218
    %v5475 = vadd.f32 %v3935, %v5219
    %v5476 = vadd.f32 %v3936, %v5220
    %v5477 = vadd.f32 %v3937, %v5221
    %v5478 = vadd.f32 %v3938, %v5222
    %v5479 = vadd.f32 %v3939, %v5223
    %v5480 = vadd.f32 %v3940, %v5224
    %v5481 = vadd.f32 %v3941, %v5225
    %v5482 = vadd.f32 %v3942, %v5226
    %v5483 = vadd.f32 %v3943, %v5227
    %v5484 = vadd.f32 %v3944, %v5228
    %v5485 = vadd.f32 %v3945, %v5229
    %v5486 = vadd.f32 %v3946, %v5230
    %v5487 = vadd.f32 %v3947, %v5231
    %v5488 = vadd.f32 %v3948, %v5232
    %v5489 = vadd.f32 %v3949, %v5233
    %v5490 = vadd.f32 %v3950, %v5234
    %v5491 = vadd.f32 %v3951, %v5235
    %v5492 = vadd.f32 %v3952, %v5236
    %v5493 = vadd.f32 %v3953, %v5237
    %v5494 = vadd.f32 %v3954, %v5238
    %v5495 = vadd.f32 %v3955, %v5239
    %v5496 = vadd.f32 %v3956, %v5240
    %v5497 = vadd.f32 %v3957, %v5241
    %v5498 = vadd.f32 %v3958, %v5242
    %v5499 = vadd.f32 %v3959, %v5243
    %v5500 = vadd.f32 %v3960, %v5244
    %v5501 = vadd.f32 %v3961, %v5245
    %v5502 = vadd.f32 %v3962, %v5246
    %v5503 = vadd.f32 %v3963, %v5247
    %v5504 = vadd.f32 %v3964, %v5248
    %v5505 = vadd.f32 %v3965, %v5249
    %v5506 = vadd.f32 %v3966, %v5250
    %v5507 = vadd.f32 %v3967, %v5251
    %v5508 = vadd.f32 %v3968, %v5252
    %v5509 = vadd.f32 %v3969, %v5253
    %v5510 = vadd.f32 %v3970, %v5254
    %v5511 = vadd.f32 %v3971, %v5255
    %v5512 = vadd.f32 %v3972, %v5256
    %v5513 = vadd.f32 %v3973, %v5257
    %v5514 = vadd.f32 %v3974, %v5258
    %v5515 = vadd.f32 %v3975, %v5259
    %v5516 = vadd.f32 %v3976, %v5260
    %v5517 = vadd.f32 %v3977, %v5261
    %v5518 = vadd.f32 %v3978, %v5262
    %v5519 = vadd.f32 %v3979, %v5263
    %v5520 = vadd.f32 %v3980, %v5264
    %v5521 = vadd.f32 %v3981, %v5265
    %v5522 = vadd.f32 %v3982, %v5266
    %v5523 = vadd.f32 %v3983, %v5267
    %v5524 = vadd.f32 %v3984, %v5268
    %v5525 = vadd.f32 %v3985, %v5269
    %v5526 = vadd.f32 %v3986, %v5270
    %v5527 = vadd.f32 %v3987, %v5271
    %v5528 = vadd.f32 %v3988, %v5272
    %v5529 = vadd.f32 %v3989, %v5273
    %v5530 = vadd.f32 %v3990, %v5274
    %v5531 = vadd.f32 %v3991, %v5275
    %v5532 = vadd.f32 %v3992, %v5276
    %v5533 = vadd.f32 %v3993, %v5277
    %v5534 = vadd.f32 %v3994, %v5278
    %v5535 = vadd.f32 %v3995, %v5279
    %v5536 = vadd.f32 %v3996, %v5280
    %v5537 = vadd.f32 %v3997, %v5281
    %v5538 = vadd.f32 %v3998, %v5282
    %v5539 = vadd.f32 %v3999, %v5283
    %v5540 = vadd.f32 %v4000, %v5284
    %v5541 = vadd.f32 %v4001, %v5285
    %v5542 = vadd.f32 %v4002, %v5286
    %v5543 = vadd.f32 %v4003, %v5287
    %v5544 = vadd.f32 %v4004, %v5288
    %v5545 = vadd.f32 %v4005, %v5289
    %v5546 = vadd.f32 %v4006, %v5290
    %v5547 = vadd.f32 %v4007, %v5291
    %v5548 = vadd.f32 %v4008, %v5292
    %v5549 = vadd.f32 %v4009, %v5293
    %v5550 = vadd.f32 %v4010, %v5294
    %v5551 = vadd.f32 %v4011, %v5295
    %v5552 = vadd.f32 %v4012, %v5296
    %v5553 = vadd.f32 %v4013, %v5297
    %v5554 = vadd.f32 %v4014, %v5298
    %v5555 = vadd.f32 %v4015, %v5299
    %v5556 = vadd.f32 %v4016, %v5300
    %v5557 = vadd.f32 %v4017, %v5301
    %v5558 = vadd.f32 %v4018, %v5302
    %v5559 = vadd.f32 %v4019, %v5303
    %v5560 = vadd.f32 %v4020, %v5304
    %v5561 = vadd.f32 %v4021, %v5305
    %v5562 = vadd.f32 %v4022, %v5306
    %v5563 = vadd.f32 %v4023, %v5307
    %v5564 = vadd.f32 %v4024, %v5308
    %v5565 = vadd.f32 %v4025, %v5309
    %v5566 = vadd.f32 %v4026, %v5310
    %v5567 = vadd.f32 %v4027, %v5311
    %v5568 = vadd.f32 %v4028, %v5312
    %v5569 = vadd.f32 %v4029, %v5313
    %v5570 = vadd.f32 %v4030, %v5314
    %v5571 = vadd.f32 %v4031, %v5315
    %v5572 = vadd.f32 %v4032, %v5316
    %v5573 = vadd.f32 %v4033, %v5317
    %v5574 = vadd.f32 %v4034, %v5318
    %v5575 = vadd.f32 %v4035, %v5319
    %v5576 = vadd.f32 %v4036, %v5320
    %v5577 = vadd.f32 %v4037, %v5321
    %v5578 = vadd.f32 %v4038, %v5322
    %v5579 = vadd.f32 %v4039, %v5323
    %v5580 = vadd.f32 %v4040, %v5324
    %v5581 = vadd.f32 %v4041, %v5325
    %v5582 = vadd.f32 %v4042, %v5326
    %v5583 = vadd.f32 %v4043, %v5327
    %v5584 = vadd.f32 %v4044, %v5328
    %v5585 = vadd.f32 %v4045, %v5329
    %v5586 = vadd.f32 %v4046, %v5330
    %v5587 = vadd.f32 %v4047, %v5331
    %v5588 = vadd.f32 %v4048, %v5332
    %v5589 = vadd.f32 %v4049, %v5333
    %v5590 = vadd.f32 %v4050, %v5334
    %v5591 = vadd.f32 %v4051, %v5335
    %v5592 = vadd.f32 %v4052, %v5336
    %v5593 = vadd.f32 %v4053, %v5337
    %v5594 = vadd.f32 %v4054, %v5338
    %v5595 = vadd.f32 %v4055, %v5339
    %v5596 = vadd.f32 %v4056, %v5340
    %v5597 = vadd.f32 %v4057, %v5341
    %v5598 = vadd.f32 %v4058, %v5342
    %v5599 = vadd.f32 %v4059, %v5343
    %v5600 = vadd.f32 %v4060, %v5344
    %v5601 = vadd.f32 %v4061, %v5345
    %v5602 = vadd.f32 %v4062, %v5346
    %v5603 = vadd.f32 %v4063, %v5347
    %v5604 = vadd.f32 %v4064, %v5348
    %v5605 = vadd.f32 %v4065, %v5349
    %v5606 = vadd.f32 %v4066, %v5350
    %v5607 = vadd.f32 %v4067, %v5351
    %v5608 = vadd.f32 %v4068, %v5352
    %v5609 = vadd.f32 %v4069, %v5353
    %v5610 = vadd.f32 %v4070, %v5354
    %v5611 = vadd.f32 %v4071, %v5355
    %v5612 = vadd.f32 %v4072, %v5356
    %v5613 = vadd.f32 %v4073, %v5357
    %v5614 = vadd.f32 %v4074, %v5358
    %v5615 = vadd.f32 %v4075, %v5359
    %v5616 = vadd.f32 %v4076, %v5360
    %v5617 = vadd.f32 %v4077, %v5361
    %v5618 = vadd.f32 %v4078, %v5362
    %v5619 = vadd.f32 %v4079, %v5363
    %v5620 = vadd.f32 %v4080, %v5364
    %v5621 = vadd.f32 %v4081, %v5365
    %v5622 = vadd.f32 %v4082, %v5366
    %v5623 = vadd.f32 %v4083, %v5367
    %v5624 = vadd.f32 %v4084, %v5368
    %v5625 = vadd.f32 %v4085, %v5369
    %v5626 = vadd.f32 %v4086, %v5370
    %v5627 = vadd.f32 %v4087, %v5371
    %v5628 = vadd.f32 %v4088, %v5372
    %v5629 = vadd.f32 %v4089, %v5373
    %v5630 = vadd.f32 %v4090, %v5374
    %v5631 = vadd.f32 %v4091, %v5375
    %v5632 = vadd.f32 %v4092, %v5376
    %v5633 = vadd.f32 %v4093, %v5377
    %v5634 = vadd.f32 %v4094, %v5378
    %v5635 = vadd.f32 %v4095, %v5379
    %v5636 = vadd.f32 %v4096, %v5380
    %v5637 = vadd.f32 %v4097, %v5381
    %v5638 = vadd.f32 %v4098, %v5382
    %v5639 = vadd.f32 %v4099, %v5383
    %v5640 = vadd.f32 %v4100, %v5384
    %v5641 = vadd.f32 %v4101, %v5385
    %v5642 = vadd.f32 %v4102, %v5386
    %v5643 = vadd.f32 %v4103, %v5387
    %v5644 = vadd.f32 %v4104, %v5388
    %v5645 = vadd.f32 %v4105, %v5389
    %v5646 = vadd.f32 %v4106, %v5390
    %v5647 = vadd.f32 %v4107, %v5391
    %v5648 = vadd.f32 %v4108, %v5392
    %v5649 = vadd.f32 %v4109, %v5393
    %v5650 = vadd.f32 %v4110, %v5394
    %v5651 = vadd.f32 %v4111, %v5395
    %v5652 = vadd.f32 %v4112, %v5396
    %v5653 = vadd.f32 %v4113, %v5397
    %v5654 = vadd.f32 %v4114, %v5398
    %v5655 = vadd.f32 %v4115, %v5399
    %v5656 = vadd.f32 %v4116, %v5400
    %v5657 = vadd.f32 %v4117, %v5401
    %v5658 = vadd.f32 %v4118, %v5402
    %v5659 = vadd.f32 %v4119, %v5403
    %v5660 = vadd.f32 %v4120, %v5404
    %v5661 = vadd.f32 %v4121, %v5405
    %v5662 = vadd.f32 %v4122, %v5406
    %v5663 = vadd.f32 %v4123, %v5407
    %v5664 = vadd.f32 %v4124, %v5408
    %v5665 = vadd.f32 %v4125, %v5409
    %v5666 = vadd.f32 %v4126, %v5410
    %v5667 = vadd.f32 %v4127, %v5411
    %v5668 = vadd.f32 %v4128, %v5412
    %v5669 = vadd.f32 %v4129, %v5413
    %v5670 = vadd.f32 %v4130, %v5414
    %v5671 = vadd.f32 %v4131, %v5415
    %v5672 = vadd.f32 %v4132, %v5416
    %v5673 = vadd.f32 %v4133, %v5417
    %v5674 = vadd.f32 %v4134, %v5418
    %v5675 = vadd.f32 %v4135, %v5419
    %v5676 = vadd.f32 %v4136, %v5420
    %v5677 = vadd.f32 %v4137, %v5421
    %v5678 = vadd.f32 %v4138, %v5422
    %v5679 = vadd.f32 %v4139, %v5423
    %v5680 = vadd.f32 %v4140, %v5424
    %v5681 = vadd.f32 %v4141, %v5425
    %v5682 = vadd.f32 %v4142, %v5426
    %v5683 = vadd.f32 %v4143, %v5427
    %v5684 = vadd.f32 %v4144, %v5428
    %v5685 = vadd.f32 %v4145, %v5429
    %v5686 = vadd.f32 %v4146, %v5430
    %v5687 = vadd.f32 %v4147, %v5431
    %v5688 = vadd.f32 %v4148, %v5432
    %v5689 = vadd.f32 %v4149, %v5433
    %v5690 = vadd.f32 %v4150, %v5434
    %v5691 = vadd.f32 %v4151, %v5435
    %v5692 = vadd.f32 %v4152, %v5436
    %v5693 = vadd.f32 %v4153, %v5437
    %v5694 = vadd.f32 %v4154, %v5438
    %v5695 = vadd.f32 %v4155, %v5439
    %v5696 = vadd.f32 %v4156, %v5440
    %v5697 = vadd.f32 %v4157, %v5441
    %v5698 = vadd.f32 %v4158, %v5442
    %v5699 = vadd.f32 %v4159, %v5443
    %v5700 = vadd.f32 %v4160, %v5444
    %v5701 = vadd.f32 %v4161, %v5445
    %v5702 = vadd.f32 %v4162, %v5446
    %v5703 = vadd.f32 %v4163, %v5447
    %v5704 = vadd.f32 %v4164, %v5448
    // Predicated region
    $region26: #{tpu_custom_call.1} parent=1 // pred_check
      %p5705 = pneg %p382
    $region27: #{tpu_custom_call.1} parent=1 // pred_check_branch
      %5707 = sbr.rel (%p5705) target = $region29
    $region28: #{tpu_custom_call.1} parent=1 // pred_region
      %vm5708 = vcmask 17408
      %5709 = vst.msk [vmem:[#allocation4] sm:$0x3] %vm5708, 0.0
    $region29: #{tpu_custom_call.1} parent=1 // pred_fallthru
      _
    %v5710 = vld [vmem:[#allocation4] sm:$0x1]
    %vm5711 = vcmask 23552
    %v5712 = vsel %vm5711, %v5449, 0.0
    %v5713 = vsel %vm5711, %v5450, 0.0
    %v5714 = vadd.f32 %v5712, %v5713
    %v5715 = vsel %vm5711, %v5451, 0.0
    %v5716 = vadd.f32 %v5714, %v5715
    %v5717 = vsel %vm5711, %v5452, 0.0
    %v5718 = vadd.f32 %v5716, %v5717
    %v5719 = vsel %vm5711, %v5453, 0.0
    %v5720 = vadd.f32 %v5718, %v5719
    %v5721 = vsel %vm5711, %v5454, 0.0
    %v5722 = vadd.f32 %v5720, %v5721
    %v5723 = vsel %vm5711, %v5455, 0.0
    %v5724 = vadd.f32 %v5722, %v5723
    %v5725 = vsel %vm5711, %v5456, 0.0
    %v5726 = vadd.f32 %v5724, %v5725
    %v5727 = vsel %vm5711, %v5457, 0.0
    %v5728 = vadd.f32 %v5726, %v5727
    %v5729 = vsel %vm5711, %v5458, 0.0
    %v5730 = vadd.f32 %v5728, %v5729
    %v5731 = vsel %vm5711, %v5459, 0.0
    %v5732 = vadd.f32 %v5730, %v5731
    %v5733 = vsel %vm5711, %v5460, 0.0
    %v5734 = vadd.f32 %v5732, %v5733
    %v5735 = vsel %vm5711, %v5461, 0.0
    %v5736 = vadd.f32 %v5734, %v5735
    %v5737 = vsel %vm5711, %v5462, 0.0
    %v5738 = vadd.f32 %v5736, %v5737
    %v5739 = vsel %vm5711, %v5463, 0.0
    %v5740 = vadd.f32 %v5738, %v5739
    %v5741 = vsel %vm5711, %v5464, 0.0
    %v5742 = vadd.f32 %v5740, %v5741
    %v5743 = vsel %vm5711, %v5465, 0.0
    %v5744 = vadd.f32 %v5742, %v5743
    %v5745 = vsel %vm5711, %v5466, 0.0
    %v5746 = vadd.f32 %v5744, %v5745
    %v5747 = vsel %vm5711, %v5467, 0.0
    %v5748 = vadd.f32 %v5746, %v5747
    %v5749 = vsel %vm5711, %v5468, 0.0
    %v5750 = vadd.f32 %v5748, %v5749
    %v5751 = vsel %vm5711, %v5469, 0.0
    %v5752 = vadd.f32 %v5750, %v5751
    %v5753 = vsel %vm5711, %v5470, 0.0
    %v5754 = vadd.f32 %v5752, %v5753
    %v5755 = vsel %vm5711, %v5471, 0.0
    %v5756 = vadd.f32 %v5754, %v5755
    %v5757 = vsel %vm5711, %v5472, 0.0
    %v5758 = vadd.f32 %v5756, %v5757
    %v5759 = vsel %vm5711, %v5473, 0.0
    %v5760 = vadd.f32 %v5758, %v5759
    %v5761 = vsel %vm5711, %v5474, 0.0
    %v5762 = vadd.f32 %v5760, %v5761
    %v5763 = vsel %vm5711, %v5475, 0.0
    %v5764 = vadd.f32 %v5762, %v5763
    %v5765 = vsel %vm5711, %v5476, 0.0
    %v5766 = vadd.f32 %v5764, %v5765
    %v5767 = vsel %vm5711, %v5477, 0.0
    %v5768 = vadd.f32 %v5766, %v5767
    %v5769 = vsel %vm5711, %v5478, 0.0
    %v5770 = vadd.f32 %v5768, %v5769
    %v5771 = vsel %vm5711, %v5479, 0.0
    %v5772 = vadd.f32 %v5770, %v5771
    %v5773 = vsel %vm5711, %v5480, 0.0
    %v5774 = vadd.f32 %v5772, %v5773
    %v5775 = vsel %vm5711, %v5481, 0.0
    %v5776 = vadd.f32 %v5774, %v5775
    %v5777 = vsel %vm5711, %v5482, 0.0
    %v5778 = vadd.f32 %v5776, %v5777
    %v5779 = vsel %vm5711, %v5483, 0.0
    %v5780 = vadd.f32 %v5778, %v5779
    %v5781 = vsel %vm5711, %v5484, 0.0
    %v5782 = vadd.f32 %v5780, %v5781
    %v5783 = vsel %vm5711, %v5485, 0.0
    %v5784 = vadd.f32 %v5782, %v5783
    %v5785 = vsel %vm5711, %v5486, 0.0
    %v5786 = vadd.f32 %v5784, %v5785
    %v5787 = vsel %vm5711, %v5487, 0.0
    %v5788 = vadd.f32 %v5786, %v5787
    %v5789 = vsel %vm5711, %v5488, 0.0
    %v5790 = vadd.f32 %v5788, %v5789
    %v5791 = vsel %vm5711, %v5489, 0.0
    %v5792 = vadd.f32 %v5790, %v5791
    %v5793 = vsel %vm5711, %v5490, 0.0
    %v5794 = vadd.f32 %v5792, %v5793
    %v5795 = vsel %vm5711, %v5491, 0.0
    %v5796 = vadd.f32 %v5794, %v5795
    %v5797 = vsel %vm5711, %v5492, 0.0
    %v5798 = vadd.f32 %v5796, %v5797
    %v5799 = vsel %vm5711, %v5493, 0.0
    %v5800 = vadd.f32 %v5798, %v5799
    %v5801 = vsel %vm5711, %v5494, 0.0
    %v5802 = vadd.f32 %v5800, %v5801
    %v5803 = vsel %vm5711, %v5495, 0.0
    %v5804 = vadd.f32 %v5802, %v5803
    %v5805 = vsel %vm5711, %v5496, 0.0
    %v5806 = vadd.f32 %v5804, %v5805
    %v5807 = vsel %vm5711, %v5497, 0.0
    %v5808 = vadd.f32 %v5806, %v5807
    %v5809 = vsel %vm5711, %v5498, 0.0
    %v5810 = vadd.f32 %v5808, %v5809
    %v5811 = vsel %vm5711, %v5499, 0.0
    %v5812 = vadd.f32 %v5810, %v5811
    %v5813 = vsel %vm5711, %v5500, 0.0
    %v5814 = vadd.f32 %v5812, %v5813
    %v5815 = vsel %vm5711, %v5501, 0.0
    %v5816 = vadd.f32 %v5814, %v5815
    %v5817 = vsel %vm5711, %v5502, 0.0
    %v5818 = vadd.f32 %v5816, %v5817
    %v5819 = vsel %vm5711, %v5503, 0.0
    %v5820 = vadd.f32 %v5818, %v5819
    %v5821 = vsel %vm5711, %v5504, 0.0
    %v5822 = vadd.f32 %v5820, %v5821
    %v5823 = vsel %vm5711, %v5505, 0.0
    %v5824 = vadd.f32 %v5822, %v5823
    %v5825 = vsel %vm5711, %v5506, 0.0
    %v5826 = vadd.f32 %v5824, %v5825
    %v5827 = vsel %vm5711, %v5507, 0.0
    %v5828 = vadd.f32 %v5826, %v5827
    %v5829 = vsel %vm5711, %v5508, 0.0
    %v5830 = vadd.f32 %v5828, %v5829
    %v5831 = vsel %vm5711, %v5509, 0.0
    %v5832 = vadd.f32 %v5830, %v5831
    %v5833 = vsel %vm5711, %v5510, 0.0
    %v5834 = vadd.f32 %v5832, %v5833
    %v5835 = vsel %vm5711, %v5511, 0.0
    %v5836 = vadd.f32 %v5834, %v5835
    %v5837 = vsel %vm5711, %v5512, 0.0
    %v5838 = vadd.f32 %v5836, %v5837
    %v5839 = vsel %vm5711, %v5513, 0.0
    %v5840 = vadd.f32 %v5838, %v5839
    %v5841 = vsel %vm5711, %v5514, 0.0
    %v5842 = vadd.f32 %v5840, %v5841
    %v5843 = vsel %vm5711, %v5515, 0.0
    %v5844 = vadd.f32 %v5842, %v5843
    %v5845 = vsel %vm5711, %v5516, 0.0
    %v5846 = vadd.f32 %v5844, %v5845
    %v5847 = vsel %vm5711, %v5517, 0.0
    %v5848 = vadd.f32 %v5846, %v5847
    %v5849 = vsel %vm5711, %v5518, 0.0
    %v5850 = vadd.f32 %v5848, %v5849
    %v5851 = vsel %vm5711, %v5519, 0.0
    %v5852 = vadd.f32 %v5850, %v5851
    %v5853 = vsel %vm5711, %v5520, 0.0
    %v5854 = vadd.f32 %v5852, %v5853
    %v5855 = vsel %vm5711, %v5521, 0.0
    %v5856 = vadd.f32 %v5854, %v5855
    %v5857 = vsel %vm5711, %v5522, 0.0
    %v5858 = vadd.f32 %v5856, %v5857
    %v5859 = vsel %vm5711, %v5523, 0.0
    %v5860 = vadd.f32 %v5858, %v5859
    %v5861 = vsel %vm5711, %v5524, 0.0
    %v5862 = vadd.f32 %v5860, %v5861
    %v5863 = vsel %vm5711, %v5525, 0.0
    %v5864 = vadd.f32 %v5862, %v5863
    %v5865 = vsel %vm5711, %v5526, 0.0
    %v5866 = vadd.f32 %v5864, %v5865
    %v5867 = vsel %vm5711, %v5527, 0.0
    %v5868 = vadd.f32 %v5866, %v5867
    %v5869 = vsel %vm5711, %v5528, 0.0
    %v5870 = vadd.f32 %v5868, %v5869
    %v5871 = vsel %vm5711, %v5529, 0.0
    %v5872 = vadd.f32 %v5870, %v5871
    %v5873 = vsel %vm5711, %v5530, 0.0
    %v5874 = vadd.f32 %v5872, %v5873
    %v5875 = vsel %vm5711, %v5531, 0.0
    %v5876 = vadd.f32 %v5874, %v5875
    %v5877 = vsel %vm5711, %v5532, 0.0
    %v5878 = vadd.f32 %v5876, %v5877
    %v5879 = vsel %vm5711, %v5533, 0.0
    %v5880 = vadd.f32 %v5878, %v5879
    %v5881 = vsel %vm5711, %v5534, 0.0
    %v5882 = vadd.f32 %v5880, %v5881
    %v5883 = vsel %vm5711, %v5535, 0.0
    %v5884 = vadd.f32 %v5882, %v5883
    %v5885 = vsel %vm5711, %v5536, 0.0
    %v5886 = vadd.f32 %v5884, %v5885
    %v5887 = vsel %vm5711, %v5537, 0.0
    %v5888 = vadd.f32 %v5886, %v5887
    %v5889 = vsel %vm5711, %v5538, 0.0
    %v5890 = vadd.f32 %v5888, %v5889
    %v5891 = vsel %vm5711, %v5539, 0.0
    %v5892 = vadd.f32 %v5890, %v5891
    %v5893 = vsel %vm5711, %v5540, 0.0
    %v5894 = vadd.f32 %v5892, %v5893
    %v5895 = vsel %vm5711, %v5541, 0.0
    %v5896 = vadd.f32 %v5894, %v5895
    %v5897 = vsel %vm5711, %v5542, 0.0
    %v5898 = vadd.f32 %v5896, %v5897
    %v5899 = vsel %vm5711, %v5543, 0.0
    %v5900 = vadd.f32 %v5898, %v5899
    %v5901 = vsel %vm5711, %v5544, 0.0
    %v5902 = vadd.f32 %v5900, %v5901
    %v5903 = vsel %vm5711, %v5545, 0.0
    %v5904 = vadd.f32 %v5902, %v5903
    %v5905 = vsel %vm5711, %v5546, 0.0
    %v5906 = vadd.f32 %v5904, %v5905
    %v5907 = vsel %vm5711, %v5547, 0.0
    %v5908 = vadd.f32 %v5906, %v5907
    %v5909 = vsel %vm5711, %v5548, 0.0
    %v5910 = vadd.f32 %v5908, %v5909
    %v5911 = vsel %vm5711, %v5549, 0.0
    %v5912 = vadd.f32 %v5910, %v5911
    %v5913 = vsel %vm5711, %v5550, 0.0
    %v5914 = vadd.f32 %v5912, %v5913
    %v5915 = vsel %vm5711, %v5551, 0.0
    %v5916 = vadd.f32 %v5914, %v5915
    %v5917 = vsel %vm5711, %v5552, 0.0
    %v5918 = vadd.f32 %v5916, %v5917
    %v5919 = vsel %vm5711, %v5553, 0.0
    %v5920 = vadd.f32 %v5918, %v5919
    %v5921 = vsel %vm5711, %v5554, 0.0
    %v5922 = vadd.f32 %v5920, %v5921
    %v5923 = vsel %vm5711, %v5555, 0.0
    %v5924 = vadd.f32 %v5922, %v5923
    %v5925 = vsel %vm5711, %v5556, 0.0
    %v5926 = vadd.f32 %v5924, %v5925
    %v5927 = vsel %vm5711, %v5557, 0.0
    %v5928 = vadd.f32 %v5926, %v5927
    %v5929 = vsel %vm5711, %v5558, 0.0
    %v5930 = vadd.f32 %v5928, %v5929
    %v5931 = vsel %vm5711, %v5559, 0.0
    %v5932 = vadd.f32 %v5930, %v5931
    %v5933 = vsel %vm5711, %v5560, 0.0
    %v5934 = vadd.f32 %v5932, %v5933
    %v5935 = vsel %vm5711, %v5561, 0.0
    %v5936 = vadd.f32 %v5934, %v5935
    %v5937 = vsel %vm5711, %v5562, 0.0
    %v5938 = vadd.f32 %v5936, %v5937
    %v5939 = vsel %vm5711, %v5563, 0.0
    %v5940 = vadd.f32 %v5938, %v5939
    %v5941 = vsel %vm5711, %v5564, 0.0
    %v5942 = vadd.f32 %v5940, %v5941
    %v5943 = vsel %vm5711, %v5565, 0.0
    %v5944 = vadd.f32 %v5942, %v5943
    %v5945 = vsel %vm5711, %v5566, 0.0
    %v5946 = vadd.f32 %v5944, %v5945
    %v5947 = vsel %vm5711, %v5567, 0.0
    %v5948 = vadd.f32 %v5946, %v5947
    %v5949 = vsel %vm5711, %v5568, 0.0
    %v5950 = vadd.f32 %v5948, %v5949
    %v5951 = vsel %vm5711, %v5569, 0.0
    %v5952 = vadd.f32 %v5950, %v5951
    %v5953 = vsel %vm5711, %v5570, 0.0
    %v5954 = vadd.f32 %v5952, %v5953
    %v5955 = vsel %vm5711, %v5571, 0.0
    %v5956 = vadd.f32 %v5954, %v5955
    %v5957 = vsel %vm5711, %v5572, 0.0
    %v5958 = vadd.f32 %v5956, %v5957
    %v5959 = vsel %vm5711, %v5573, 0.0
    %v5960 = vadd.f32 %v5958, %v5959
    %v5961 = vsel %vm5711, %v5574, 0.0
    %v5962 = vadd.f32 %v5960, %v5961
    %v5963 = vsel %vm5711, %v5575, 0.0
    %v5964 = vadd.f32 %v5962, %v5963
    %v5965 = vsel %vm5711, %v5576, 0.0
    %v5966 = vadd.f32 %v5964, %v5965
    %v5967 = vsel %vm5711, %v5577, 0.0
    %v5968 = vadd.f32 %v5966, %v5967
    %v5969 = vsel %vm5711, %v5578, 0.0
    %v5970 = vadd.f32 %v5968, %v5969
    %v5971 = vsel %vm5711, %v5579, 0.0
    %v5972 = vadd.f32 %v5970, %v5971
    %v5973 = vsel %vm5711, %v5580, 0.0
    %v5974 = vadd.f32 %v5972, %v5973
    %v5975 = vsel %vm5711, %v5581, 0.0
    %v5976 = vadd.f32 %v5974, %v5975
    %v5977 = vsel %vm5711, %v5582, 0.0
    %v5978 = vadd.f32 %v5976, %v5977
    %v5979 = vsel %vm5711, %v5583, 0.0
    %v5980 = vadd.f32 %v5978, %v5979
    %v5981 = vsel %vm5711, %v5584, 0.0
    %v5982 = vadd.f32 %v5980, %v5981
    %v5983 = vsel %vm5711, %v5585, 0.0
    %v5984 = vadd.f32 %v5982, %v5983
    %v5985 = vsel %vm5711, %v5586, 0.0
    %v5986 = vadd.f32 %v5984, %v5985
    %v5987 = vsel %vm5711, %v5587, 0.0
    %v5988 = vadd.f32 %v5986, %v5987
    %v5989 = vsel %vm5711, %v5588, 0.0
    %v5990 = vadd.f32 %v5988, %v5989
    %v5991 = vsel %vm5711, %v5589, 0.0
    %v5992 = vadd.f32 %v5990, %v5991
    %v5993 = vsel %vm5711, %v5590, 0.0
    %v5994 = vadd.f32 %v5992, %v5993
    %v5995 = vsel %vm5711, %v5591, 0.0
    %v5996 = vadd.f32 %v5994, %v5995
    %v5997 = vsel %vm5711, %v5592, 0.0
    %v5998 = vadd.f32 %v5996, %v5997
    %v5999 = vsel %vm5711, %v5593, 0.0
    %v6000 = vadd.f32 %v5998, %v5999
    %v6001 = vsel %vm5711, %v5594, 0.0
    %v6002 = vadd.f32 %v6000, %v6001
    %v6003 = vsel %vm5711, %v5595, 0.0
    %v6004 = vadd.f32 %v6002, %v6003
    %v6005 = vsel %vm5711, %v5596, 0.0
    %v6006 = vadd.f32 %v6004, %v6005
    %v6007 = vsel %vm5711, %v5597, 0.0
    %v6008 = vadd.f32 %v6006, %v6007
    %v6009 = vsel %vm5711, %v5598, 0.0
    %v6010 = vadd.f32 %v6008, %v6009
    %v6011 = vsel %vm5711, %v5599, 0.0
    %v6012 = vadd.f32 %v6010, %v6011
    %v6013 = vsel %vm5711, %v5600, 0.0
    %v6014 = vadd.f32 %v6012, %v6013
    %v6015 = vsel %vm5711, %v5601, 0.0
    %v6016 = vadd.f32 %v6014, %v6015
    %v6017 = vsel %vm5711, %v5602, 0.0
    %v6018 = vadd.f32 %v6016, %v6017
    %v6019 = vsel %vm5711, %v5603, 0.0
    %v6020 = vadd.f32 %v6018, %v6019
    %v6021 = vsel %vm5711, %v5604, 0.0
    %v6022 = vadd.f32 %v6020, %v6021
    %v6023 = vsel %vm5711, %v5605, 0.0
    %v6024 = vadd.f32 %v6022, %v6023
    %v6025 = vsel %vm5711, %v5606, 0.0
    %v6026 = vadd.f32 %v6024, %v6025
    %v6027 = vsel %vm5711, %v5607, 0.0
    %v6028 = vadd.f32 %v6026, %v6027
    %v6029 = vsel %vm5711, %v5608, 0.0
    %v6030 = vadd.f32 %v6028, %v6029
    %v6031 = vsel %vm5711, %v5609, 0.0
    %v6032 = vadd.f32 %v6030, %v6031
    %v6033 = vsel %vm5711, %v5610, 0.0
    %v6034 = vadd.f32 %v6032, %v6033
    %v6035 = vsel %vm5711, %v5611, 0.0
    %v6036 = vadd.f32 %v6034, %v6035
    %v6037 = vsel %vm5711, %v5612, 0.0
    %v6038 = vadd.f32 %v6036, %v6037
    %v6039 = vsel %vm5711, %v5613, 0.0
    %v6040 = vadd.f32 %v6038, %v6039
    %v6041 = vsel %vm5711, %v5614, 0.0
    %v6042 = vadd.f32 %v6040, %v6041
    %v6043 = vsel %vm5711, %v5615, 0.0
    %v6044 = vadd.f32 %v6042, %v6043
    %v6045 = vsel %vm5711, %v5616, 0.0
    %v6046 = vadd.f32 %v6044, %v6045
    %v6047 = vsel %vm5711, %v5617, 0.0
    %v6048 = vadd.f32 %v6046, %v6047
    %v6049 = vsel %vm5711, %v5618, 0.0
    %v6050 = vadd.f32 %v6048, %v6049
    %v6051 = vsel %vm5711, %v5619, 0.0
    %v6052 = vadd.f32 %v6050, %v6051
    %v6053 = vsel %vm5711, %v5620, 0.0
    %v6054 = vadd.f32 %v6052, %v6053
    %v6055 = vsel %vm5711, %v5621, 0.0
    %v6056 = vadd.f32 %v6054, %v6055
    %v6057 = vsel %vm5711, %v5622, 0.0
    %v6058 = vadd.f32 %v6056, %v6057
    %v6059 = vsel %vm5711, %v5623, 0.0
    %v6060 = vadd.f32 %v6058, %v6059
    %v6061 = vsel %vm5711, %v5624, 0.0
    %v6062 = vadd.f32 %v6060, %v6061
    %v6063 = vsel %vm5711, %v5625, 0.0
    %v6064 = vadd.f32 %v6062, %v6063
    %v6065 = vsel %vm5711, %v5626, 0.0
    %v6066 = vadd.f32 %v6064, %v6065
    %v6067 = vsel %vm5711, %v5627, 0.0
    %v6068 = vadd.f32 %v6066, %v6067
    %v6069 = vsel %vm5711, %v5628, 0.0
    %v6070 = vadd.f32 %v6068, %v6069
    %v6071 = vsel %vm5711, %v5629, 0.0
    %v6072 = vadd.f32 %v6070, %v6071
    %v6073 = vsel %vm5711, %v5630, 0.0
    %v6074 = vadd.f32 %v6072, %v6073
    %v6075 = vsel %vm5711, %v5631, 0.0
    %v6076 = vadd.f32 %v6074, %v6075
    %v6077 = vsel %vm5711, %v5632, 0.0
    %v6078 = vadd.f32 %v6076, %v6077
    %v6079 = vsel %vm5711, %v5633, 0.0
    %v6080 = vadd.f32 %v6078, %v6079
    %v6081 = vsel %vm5711, %v5634, 0.0
    %v6082 = vadd.f32 %v6080, %v6081
    %v6083 = vsel %vm5711, %v5635, 0.0
    %v6084 = vadd.f32 %v6082, %v6083
    %v6085 = vsel %vm5711, %v5636, 0.0
    %v6086 = vadd.f32 %v6084, %v6085
    %v6087 = vsel %vm5711, %v5637, 0.0
    %v6088 = vadd.f32 %v6086, %v6087
    %v6089 = vsel %vm5711, %v5638, 0.0
    %v6090 = vadd.f32 %v6088, %v6089
    %v6091 = vsel %vm5711, %v5639, 0.0
    %v6092 = vadd.f32 %v6090, %v6091
    %v6093 = vsel %vm5711, %v5640, 0.0
    %v6094 = vadd.f32 %v6092, %v6093
    %v6095 = vsel %vm5711, %v5641, 0.0
    %v6096 = vadd.f32 %v6094, %v6095
    %v6097 = vsel %vm5711, %v5642, 0.0
    %v6098 = vadd.f32 %v6096, %v6097
    %v6099 = vsel %vm5711, %v5643, 0.0
    %v6100 = vadd.f32 %v6098, %v6099
    %v6101 = vsel %vm5711, %v5644, 0.0
    %v6102 = vadd.f32 %v6100, %v6101
    %v6103 = vsel %vm5711, %v5645, 0.0
    %v6104 = vadd.f32 %v6102, %v6103
    %v6105 = vsel %vm5711, %v5646, 0.0
    %v6106 = vadd.f32 %v6104, %v6105
    %v6107 = vsel %vm5711, %v5647, 0.0
    %v6108 = vadd.f32 %v6106, %v6107
    %v6109 = vsel %vm5711, %v5648, 0.0
    %v6110 = vadd.f32 %v6108, %v6109
    %v6111 = vsel %vm5711, %v5649, 0.0
    %v6112 = vadd.f32 %v6110, %v6111
    %v6113 = vsel %vm5711, %v5650, 0.0
    %v6114 = vadd.f32 %v6112, %v6113
    %v6115 = vsel %vm5711, %v5651, 0.0
    %v6116 = vadd.f32 %v6114, %v6115
    %v6117 = vsel %vm5711, %v5652, 0.0
    %v6118 = vadd.f32 %v6116, %v6117
    %v6119 = vsel %vm5711, %v5653, 0.0
    %v6120 = vadd.f32 %v6118, %v6119
    %v6121 = vsel %vm5711, %v5654, 0.0
    %v6122 = vadd.f32 %v6120, %v6121
    %v6123 = vsel %vm5711, %v5655, 0.0
    %v6124 = vadd.f32 %v6122, %v6123
    %v6125 = vsel %vm5711, %v5656, 0.0
    %v6126 = vadd.f32 %v6124, %v6125
    %v6127 = vsel %vm5711, %v5657, 0.0
    %v6128 = vadd.f32 %v6126, %v6127
    %v6129 = vsel %vm5711, %v5658, 0.0
    %v6130 = vadd.f32 %v6128, %v6129
    %v6131 = vsel %vm5711, %v5659, 0.0
    %v6132 = vadd.f32 %v6130, %v6131
    %v6133 = vsel %vm5711, %v5660, 0.0
    %v6134 = vadd.f32 %v6132, %v6133
    %v6135 = vsel %vm5711, %v5661, 0.0
    %v6136 = vadd.f32 %v6134, %v6135
    %v6137 = vsel %vm5711, %v5662, 0.0
    %v6138 = vadd.f32 %v6136, %v6137
    %v6139 = vsel %vm5711, %v5663, 0.0
    %v6140 = vadd.f32 %v6138, %v6139
    %v6141 = vsel %vm5711, %v5664, 0.0
    %v6142 = vadd.f32 %v6140, %v6141
    %v6143 = vsel %vm5711, %v5665, 0.0
    %v6144 = vadd.f32 %v6142, %v6143
    %v6145 = vsel %vm5711, %v5666, 0.0
    %v6146 = vadd.f32 %v6144, %v6145
    %v6147 = vsel %vm5711, %v5667, 0.0
    %v6148 = vadd.f32 %v6146, %v6147
    %v6149 = vsel %vm5711, %v5668, 0.0
    %v6150 = vadd.f32 %v6148, %v6149
    %v6151 = vsel %vm5711, %v5669, 0.0
    %v6152 = vadd.f32 %v6150, %v6151
    %v6153 = vsel %vm5711, %v5670, 0.0
    %v6154 = vadd.f32 %v6152, %v6153
    %v6155 = vsel %vm5711, %v5671, 0.0
    %v6156 = vadd.f32 %v6154, %v6155
    %v6157 = vsel %vm5711, %v5672, 0.0
    %v6158 = vadd.f32 %v6156, %v6157
    %v6159 = vsel %vm5711, %v5673, 0.0
    %v6160 = vadd.f32 %v6158, %v6159
    %v6161 = vsel %vm5711, %v5674, 0.0
    %v6162 = vadd.f32 %v6160, %v6161
    %v6163 = vsel %vm5711, %v5675, 0.0
    %v6164 = vadd.f32 %v6162, %v6163
    %v6165 = vsel %vm5711, %v5676, 0.0
    %v6166 = vadd.f32 %v6164, %v6165
    %v6167 = vsel %vm5711, %v5677, 0.0
    %v6168 = vadd.f32 %v6166, %v6167
    %v6169 = vsel %vm5711, %v5678, 0.0
    %v6170 = vadd.f32 %v6168, %v6169
    %v6171 = vsel %vm5711, %v5679, 0.0
    %v6172 = vadd.f32 %v6170, %v6171
    %v6173 = vsel %vm5711, %v5680, 0.0
    %v6174 = vadd.f32 %v6172, %v6173
    %v6175 = vsel %vm5711, %v5681, 0.0
    %v6176 = vadd.f32 %v6174, %v6175
    %v6177 = vsel %vm5711, %v5682, 0.0
    %v6178 = vadd.f32 %v6176, %v6177
    %v6179 = vsel %vm5711, %v5683, 0.0
    %v6180 = vadd.f32 %v6178, %v6179
    %v6181 = vsel %vm5711, %v5684, 0.0
    %v6182 = vadd.f32 %v6180, %v6181
    %v6183 = vsel %vm5711, %v5685, 0.0
    %v6184 = vadd.f32 %v6182, %v6183
    %v6185 = vsel %vm5711, %v5686, 0.0
    %v6186 = vadd.f32 %v6184, %v6185
    %v6187 = vsel %vm5711, %v5687, 0.0
    %v6188 = vadd.f32 %v6186, %v6187
    %v6189 = vsel %vm5711, %v5688, 0.0
    %v6190 = vadd.f32 %v6188, %v6189
    %v6191 = vsel %vm5711, %v5689, 0.0
    %v6192 = vadd.f32 %v6190, %v6191
    %v6193 = vsel %vm5711, %v5690, 0.0
    %v6194 = vadd.f32 %v6192, %v6193
    %v6195 = vsel %vm5711, %v5691, 0.0
    %v6196 = vadd.f32 %v6194, %v6195
    %v6197 = vsel %vm5711, %v5692, 0.0
    %v6198 = vadd.f32 %v6196, %v6197
    %v6199 = vsel %vm5711, %v5693, 0.0
    %v6200 = vadd.f32 %v6198, %v6199
    %v6201 = vsel %vm5711, %v5694, 0.0
    %v6202 = vadd.f32 %v6200, %v6201
    %v6203 = vsel %vm5711, %v5695, 0.0
    %v6204 = vadd.f32 %v6202, %v6203
    %v6205 = vsel %vm5711, %v5696, 0.0
    %v6206 = vadd.f32 %v6204, %v6205
    %v6207 = vsel %vm5711, %v5697, 0.0
    %v6208 = vadd.f32 %v6206, %v6207
    %v6209 = vsel %vm5711, %v5698, 0.0
    %v6210 = vadd.f32 %v6208, %v6209
    %v6211 = vsel %vm5711, %v5699, 0.0
    %v6212 = vadd.f32 %v6210, %v6211
    %v6213 = vsel %vm5711, %v5700, 0.0
    %v6214 = vadd.f32 %v6212, %v6213
    %v6215 = vsel %vm5711, %v5701, 0.0
    %v6216 = vadd.f32 %v6214, %v6215
    %v6217 = vsel %vm5711, %v5702, 0.0
    %v6218 = vadd.f32 %v6216, %v6217
    %v6219 = vsel %vm5711, %v5703, 0.0
    %v6220 = vadd.f32 %v6218, %v6219
    %v6221 = vsel %vm5711, %v5704, 0.0
    %v6222 = vadd.f32 %v6220, %v6221
    %v6223 = vrot.slane %v6222, 4
    %v6224 = vadd.f32 %v6222, %v6223
    %v6225 = vrot.slane %v6224, 2
    %v6226 = vadd.f32 %v6224, %v6225
    %v6227 = vrot.slane %v6226, 1
    %v6228 = vadd.f32 %v6226, %v6227
    %v6229 = vadd.f32 %v5710, %v6228
    %vm6230 = vcmask 16384
    %6231 = vst.msk [vmem:[#allocation4] sm:$0x1] %vm6230, %v6229
    %v6232 = vld [vmem:[#allocation4 + $0x1] sm:$0x1]
    %v6233 = vmul.f32 %v5449, %v5449
    %v6234 = vmul.f32 %v5450, %v5450
    %v6235 = vmul.f32 %v5451, %v5451
    %v6236 = vmul.f32 %v5452, %v5452
    %v6237 = vmul.f32 %v5453, %v5453
    %v6238 = vmul.f32 %v5454, %v5454
    %v6239 = vmul.f32 %v5455, %v5455
    %v6240 = vmul.f32 %v5456, %v5456
    %v6241 = vmul.f32 %v5457, %v5457
    %v6242 = vmul.f32 %v5458, %v5458
    %v6243 = vmul.f32 %v5459, %v5459
    %v6244 = vmul.f32 %v5460, %v5460
    %v6245 = vmul.f32 %v5461, %v5461
    %v6246 = vmul.f32 %v5462, %v5462
    %v6247 = vmul.f32 %v5463, %v5463
    %v6248 = vmul.f32 %v5464, %v5464
    %v6249 = vmul.f32 %v5465, %v5465
    %v6250 = vmul.f32 %v5466, %v5466
    %v6251 = vmul.f32 %v5467, %v5467
    %v6252 = vmul.f32 %v5468, %v5468
    %v6253 = vmul.f32 %v5469, %v5469
    %v6254 = vmul.f32 %v5470, %v5470
    %v6255 = vmul.f32 %v5471, %v5471
    %v6256 = vmul.f32 %v5472, %v5472
    %v6257 = vmul.f32 %v5473, %v5473
    %v6258 = vmul.f32 %v5474, %v5474
    %v6259 = vmul.f32 %v5475, %v5475
    %v6260 = vmul.f32 %v5476, %v5476
    %v6261 = vmul.f32 %v5477, %v5477
    %v6262 = vmul.f32 %v5478, %v5478
    %v6263 = vmul.f32 %v5479, %v5479
    %v6264 = vmul.f32 %v5480, %v5480
    %v6265 = vmul.f32 %v5481, %v5481
    %v6266 = vmul.f32 %v5482, %v5482
    %v6267 = vmul.f32 %v5483, %v5483
    %v6268 = vmul.f32 %v5484, %v5484
    %v6269 = vmul.f32 %v5485, %v5485
    %v6270 = vmul.f32 %v5486, %v5486
    %v6271 = vmul.f32 %v5487, %v5487
    %v6272 = vmul.f32 %v5488, %v5488
    %v6273 = vmul.f32 %v5489, %v5489
    %v6274 = vmul.f32 %v5490, %v5490
    %v6275 = vmul.f32 %v5491, %v5491
    %v6276 = vmul.f32 %v5492, %v5492
    %v6277 = vmul.f32 %v5493, %v5493
    %v6278 = vmul.f32 %v5494, %v5494
    %v6279 = vmul.f32 %v5495, %v5495
    %v6280 = vmul.f32 %v5496, %v5496
    %v6281 = vmul.f32 %v5497, %v5497
    %v6282 = vmul.f32 %v5498, %v5498
    %v6283 = vmul.f32 %v5499, %v5499
    %v6284 = vmul.f32 %v5500, %v5500
    %v6285 = vmul.f32 %v5501, %v5501
    %v6286 = vmul.f32 %v5502, %v5502
    %v6287 = vmul.f32 %v5503, %v5503
    %v6288 = vmul.f32 %v5504, %v5504
    %v6289 = vmul.f32 %v5505, %v5505
    %v6290 = vmul.f32 %v5506, %v5506
    %v6291 = vmul.f32 %v5507, %v5507
    %v6292 = vmul.f32 %v5508, %v5508
    %v6293 = vmul.f32 %v5509, %v5509
    %v6294 = vmul.f32 %v5510, %v5510
    %v6295 = vmul.f32 %v5511, %v5511
    %v6296 = vmul.f32 %v5512, %v5512
    %v6297 = vmul.f32 %v5513, %v5513
    %v6298 = vmul.f32 %v5514, %v5514
    %v6299 = vmul.f32 %v5515, %v5515
    %v6300 = vmul.f32 %v5516, %v5516
    %v6301 = vmul.f32 %v5517, %v5517
    %v6302 = vmul.f32 %v5518, %v5518
    %v6303 = vmul.f32 %v5519, %v5519
    %v6304 = vmul.f32 %v5520, %v5520
    %v6305 = vmul.f32 %v5521, %v5521
    %v6306 = vmul.f32 %v5522, %v5522
    %v6307 = vmul.f32 %v5523, %v5523
    %v6308 = vmul.f32 %v5524, %v5524
    %v6309 = vmul.f32 %v5525, %v5525
    %v6310 = vmul.f32 %v5526, %v5526
    %v6311 = vmul.f32 %v5527, %v5527
    %v6312 = vmul.f32 %v5528, %v5528
    %v6313 = vmul.f32 %v5529, %v5529
    %v6314 = vmul.f32 %v5530, %v5530
    %v6315 = vmul.f32 %v5531, %v5531
    %v6316 = vmul.f32 %v5532, %v5532
    %v6317 = vmul.f32 %v5533, %v5533
    %v6318 = vmul.f32 %v5534, %v5534
    %v6319 = vmul.f32 %v5535, %v5535
    %v6320 = vmul.f32 %v5536, %v5536
    %v6321 = vmul.f32 %v5537, %v5537
    %v6322 = vmul.f32 %v5538, %v5538
    %v6323 = vmul.f32 %v5539, %v5539
    %v6324 = vmul.f32 %v5540, %v5540
    %v6325 = vmul.f32 %v5541, %v5541
    %v6326 = vmul.f32 %v5542, %v5542
    %v6327 = vmul.f32 %v5543, %v5543
    %v6328 = vmul.f32 %v5544, %v5544
    %v6329 = vmul.f32 %v5545, %v5545
    %v6330 = vmul.f32 %v5546, %v5546
    %v6331 = vmul.f32 %v5547, %v5547
    %v6332 = vmul.f32 %v5548, %v5548
    %v6333 = vmul.f32 %v5549, %v5549
    %v6334 = vmul.f32 %v5550, %v5550
    %v6335 = vmul.f32 %v5551, %v5551
    %v6336 = vmul.f32 %v5552, %v5552
    %v6337 = vmul.f32 %v5553, %v5553
    %v6338 = vmul.f32 %v5554, %v5554
    %v6339 = vmul.f32 %v5555, %v5555
    %v6340 = vmul.f32 %v5556, %v5556
    %v6341 = vmul.f32 %v5557, %v5557
    %v6342 = vmul.f32 %v5558, %v5558
    %v6343 = vmul.f32 %v5559, %v5559
    %v6344 = vmul.f32 %v5560, %v5560
    %v6345 = vmul.f32 %v5561, %v5561
    %v6346 = vmul.f32 %v5562, %v5562
    %v6347 = vmul.f32 %v5563, %v5563
    %v6348 = vmul.f32 %v5564, %v5564
    %v6349 = vmul.f32 %v5565, %v5565
    %v6350 = vmul.f32 %v5566, %v5566
    %v6351 = vmul.f32 %v5567, %v5567
    %v6352 = vmul.f32 %v5568, %v5568
    %v6353 = vmul.f32 %v5569, %v5569
    %v6354 = vmul.f32 %v5570, %v5570
    %v6355 = vmul.f32 %v5571, %v5571
    %v6356 = vmul.f32 %v5572, %v5572
    %v6357 = vmul.f32 %v5573, %v5573
    %v6358 = vmul.f32 %v5574, %v5574
    %v6359 = vmul.f32 %v5575, %v5575
    %v6360 = vmul.f32 %v5576, %v5576
    %v6361 = vmul.f32 %v5577, %v5577
    %v6362 = vmul.f32 %v5578, %v5578
    %v6363 = vmul.f32 %v5579, %v5579
    %v6364 = vmul.f32 %v5580, %v5580
    %v6365 = vmul.f32 %v5581, %v5581
    %v6366 = vmul.f32 %v5582, %v5582
    %v6367 = vmul.f32 %v5583, %v5583
    %v6368 = vmul.f32 %v5584, %v5584
    %v6369 = vmul.f32 %v5585, %v5585
    %v6370 = vmul.f32 %v5586, %v5586
    %v6371 = vmul.f32 %v5587, %v5587
    %v6372 = vmul.f32 %v5588, %v5588
    %v6373 = vmul.f32 %v5589, %v5589
    %v6374 = vmul.f32 %v5590, %v5590
    %v6375 = vmul.f32 %v5591, %v5591
    %v6376 = vmul.f32 %v5592, %v5592
    %v6377 = vmul.f32 %v5593, %v5593
    %v6378 = vmul.f32 %v5594, %v5594
    %v6379 = vmul.f32 %v5595, %v5595
    %v6380 = vmul.f32 %v5596, %v5596
    %v6381 = vmul.f32 %v5597, %v5597
    %v6382 = vmul.f32 %v5598, %v5598
    %v6383 = vmul.f32 %v5599, %v5599
    %v6384 = vmul.f32 %v5600, %v5600
    %v6385 = vmul.f32 %v5601, %v5601
    %v6386 = vmul.f32 %v5602, %v5602
    %v6387 = vmul.f32 %v5603, %v5603
    %v6388 = vmul.f32 %v5604, %v5604
    %v6389 = vmul.f32 %v5605, %v5605
    %v6390 = vmul.f32 %v5606, %v5606
    %v6391 = vmul.f32 %v5607, %v5607
    %v6392 = vmul.f32 %v5608, %v5608
    %v6393 = vmul.f32 %v5609, %v5609
    %v6394 = vmul.f32 %v5610, %v5610
    %v6395 = vmul.f32 %v5611, %v5611
    %v6396 = vmul.f32 %v5612, %v5612
    %v6397 = vmul.f32 %v5613, %v5613
    %v6398 = vmul.f32 %v5614, %v5614
    %v6399 = vmul.f32 %v5615, %v5615
    %v6400 = vmul.f32 %v5616, %v5616
    %v6401 = vmul.f32 %v5617, %v5617
    %v6402 = vmul.f32 %v5618, %v5618
    %v6403 = vmul.f32 %v5619, %v5619
    %v6404 = vmul.f32 %v5620, %v5620
    %v6405 = vmul.f32 %v5621, %v5621
    %v6406 = vmul.f32 %v5622, %v5622
    %v6407 = vmul.f32 %v5623, %v5623
    %v6408 = vmul.f32 %v5624, %v5624
    %v6409 = vmul.f32 %v5625, %v5625
    %v6410 = vmul.f32 %v5626, %v5626
    %v6411 = vmul.f32 %v5627, %v5627
    %v6412 = vmul.f32 %v5628, %v5628
    %v6413 = vmul.f32 %v5629, %v5629
    %v6414 = vmul.f32 %v5630, %v5630
    %v6415 = vmul.f32 %v5631, %v5631
    %v6416 = vmul.f32 %v5632, %v5632
    %v6417 = vmul.f32 %v5633, %v5633
    %v6418 = vmul.f32 %v5634, %v5634
    %v6419 = vmul.f32 %v5635, %v5635
    %v6420 = vmul.f32 %v5636, %v5636
    %v6421 = vmul.f32 %v5637, %v5637
    %v6422 = vmul.f32 %v5638, %v5638
    %v6423 = vmul.f32 %v5639, %v5639
    %v6424 = vmul.f32 %v5640, %v5640
    %v6425 = vmul.f32 %v5641, %v5641
    %v6426 = vmul.f32 %v5642, %v5642
    %v6427 = vmul.f32 %v5643, %v5643
    %v6428 = vmul.f32 %v5644, %v5644
    %v6429 = vmul.f32 %v5645, %v5645
    %v6430 = vmul.f32 %v5646, %v5646
    %v6431 = vmul.f32 %v5647, %v5647
    %v6432 = vmul.f32 %v5648, %v5648
    %v6433 = vmul.f32 %v5649, %v5649
    %v6434 = vmul.f32 %v5650, %v5650
    %v6435 = vmul.f32 %v5651, %v5651
    %v6436 = vmul.f32 %v5652, %v5652
    %v6437 = vmul.f32 %v5653, %v5653
    %v6438 = vmul.f32 %v5654, %v5654
    %v6439 = vmul.f32 %v5655, %v5655
    %v6440 = vmul.f32 %v5656, %v5656
    %v6441 = vmul.f32 %v5657, %v5657
    %v6442 = vmul.f32 %v5658, %v5658
    %v6443 = vmul.f32 %v5659, %v5659
    %v6444 = vmul.f32 %v5660, %v5660
    %v6445 = vmul.f32 %v5661, %v5661
    %v6446 = vmul.f32 %v5662, %v5662
    %v6447 = vmul.f32 %v5663, %v5663
    %v6448 = vmul.f32 %v5664, %v5664
    %v6449 = vmul.f32 %v5665, %v5665
    %v6450 = vmul.f32 %v5666, %v5666
    %v6451 = vmul.f32 %v5667, %v5667
    %v6452 = vmul.f32 %v5668, %v5668
    %v6453 = vmul.f32 %v5669, %v5669
    %v6454 = vmul.f32 %v5670, %v5670
    %v6455 = vmul.f32 %v5671, %v5671
    %v6456 = vmul.f32 %v5672, %v5672
    %v6457 = vmul.f32 %v5673, %v5673
    %v6458 = vmul.f32 %v5674, %v5674
    %v6459 = vmul.f32 %v5675, %v5675
    %v6460 = vmul.f32 %v5676, %v5676
    %v6461 = vmul.f32 %v5677, %v5677
    %v6462 = vmul.f32 %v5678, %v5678
    %v6463 = vmul.f32 %v5679, %v5679
    %v6464 = vmul.f32 %v5680, %v5680
    %v6465 = vmul.f32 %v5681, %v5681
    %v6466 = vmul.f32 %v5682, %v5682
    %v6467 = vmul.f32 %v5683, %v5683
    %v6468 = vmul.f32 %v5684, %v5684
    %v6469 = vmul.f32 %v5685, %v5685
    %v6470 = vmul.f32 %v5686, %v5686
    %v6471 = vmul.f32 %v5687, %v5687
    %v6472 = vmul.f32 %v5688, %v5688
    %v6473 = vmul.f32 %v5689, %v5689
    %v6474 = vmul.f32 %v5690, %v5690
    %v6475 = vmul.f32 %v5691, %v5691
    %v6476 = vmul.f32 %v5692, %v5692
    %v6477 = vmul.f32 %v5693, %v5693
    %v6478 = vmul.f32 %v5694, %v5694
    %v6479 = vmul.f32 %v5695, %v5695
    %v6480 = vmul.f32 %v5696, %v5696
    %v6481 = vmul.f32 %v5697, %v5697
    %v6482 = vmul.f32 %v5698, %v5698
    %v6483 = vmul.f32 %v5699, %v5699
    %v6484 = vmul.f32 %v5700, %v5700
    %v6485 = vmul.f32 %v5701, %v5701
    %v6486 = vmul.f32 %v5702, %v5702
    %v6487 = vmul.f32 %v5703, %v5703
    %v6488 = vmul.f32 %v5704, %v5704
    %v6489 = vsel %vm5711, %v6233, 0.0
    %v6490 = vsel %vm5711, %v6234, 0.0
    %v6491 = vadd.f32 %v6489, %v6490
    %v6492 = vsel %vm5711, %v6235, 0.0
    %v6493 = vadd.f32 %v6491, %v6492
    %v6494 = vsel %vm5711, %v6236, 0.0
    %v6495 = vadd.f32 %v6493, %v6494
    %v6496 = vsel %vm5711, %v6237, 0.0
    %v6497 = vadd.f32 %v6495, %v6496
    %v6498 = vsel %vm5711, %v6238, 0.0
    %v6499 = vadd.f32 %v6497, %v6498
    %v6500 = vsel %vm5711, %v6239, 0.0
    %v6501 = vadd.f32 %v6499, %v6500
    %v6502 = vsel %vm5711, %v6240, 0.0
    %v6503 = vadd.f32 %v6501, %v6502
    %v6504 = vsel %vm5711, %v6241, 0.0
    %v6505 = vadd.f32 %v6503, %v6504
    %v6506 = vsel %vm5711, %v6242, 0.0
    %v6507 = vadd.f32 %v6505, %v6506
    %v6508 = vsel %vm5711, %v6243, 0.0
    %v6509 = vadd.f32 %v6507, %v6508
    %v6510 = vsel %vm5711, %v6244, 0.0
    %v6511 = vadd.f32 %v6509, %v6510
    %v6512 = vsel %vm5711, %v6245, 0.0
    %v6513 = vadd.f32 %v6511, %v6512
    %v6514 = vsel %vm5711, %v6246, 0.0
    %v6515 = vadd.f32 %v6513, %v6514
    %v6516 = vsel %vm5711, %v6247, 0.0
    %v6517 = vadd.f32 %v6515, %v6516
    %v6518 = vsel %vm5711, %v6248, 0.0
    %v6519 = vadd.f32 %v6517, %v6518
    %v6520 = vsel %vm5711, %v6249, 0.0
    %v6521 = vadd.f32 %v6519, %v6520
    %v6522 = vsel %vm5711, %v6250, 0.0
    %v6523 = vadd.f32 %v6521, %v6522
    %v6524 = vsel %vm5711, %v6251, 0.0
    %v6525 = vadd.f32 %v6523, %v6524
    %v6526 = vsel %vm5711, %v6252, 0.0
    %v6527 = vadd.f32 %v6525, %v6526
    %v6528 = vsel %vm5711, %v6253, 0.0
    %v6529 = vadd.f32 %v6527, %v6528
    %v6530 = vsel %vm5711, %v6254, 0.0
    %v6531 = vadd.f32 %v6529, %v6530
    %v6532 = vsel %vm5711, %v6255, 0.0
    %v6533 = vadd.f32 %v6531, %v6532
    %v6534 = vsel %vm5711, %v6256, 0.0
    %v6535 = vadd.f32 %v6533, %v6534
    %v6536 = vsel %vm5711, %v6257, 0.0
    %v6537 = vadd.f32 %v6535, %v6536
    %v6538 = vsel %vm5711, %v6258, 0.0
    %v6539 = vadd.f32 %v6537, %v6538
    %v6540 = vsel %vm5711, %v6259, 0.0
    %v6541 = vadd.f32 %v6539, %v6540
    %v6542 = vsel %vm5711, %v6260, 0.0
    %v6543 = vadd.f32 %v6541, %v6542
    %v6544 = vsel %vm5711, %v6261, 0.0
    %v6545 = vadd.f32 %v6543, %v6544
    %v6546 = vsel %vm5711, %v6262, 0.0
    %v6547 = vadd.f32 %v6545, %v6546
    %v6548 = vsel %vm5711, %v6263, 0.0
    %v6549 = vadd.f32 %v6547, %v6548
    %v6550 = vsel %vm5711, %v6264, 0.0
    %v6551 = vadd.f32 %v6549, %v6550
    %v6552 = vsel %vm5711, %v6265, 0.0
    %v6553 = vadd.f32 %v6551, %v6552
    %v6554 = vsel %vm5711, %v6266, 0.0
    %v6555 = vadd.f32 %v6553, %v6554
    %v6556 = vsel %vm5711, %v6267, 0.0
    %v6557 = vadd.f32 %v6555, %v6556
    %v6558 = vsel %vm5711, %v6268, 0.0
    %v6559 = vadd.f32 %v6557, %v6558
    %v6560 = vsel %vm5711, %v6269, 0.0
    %v6561 = vadd.f32 %v6559, %v6560
    %v6562 = vsel %vm5711, %v6270, 0.0
    %v6563 = vadd.f32 %v6561, %v6562
    %v6564 = vsel %vm5711, %v6271, 0.0
    %v6565 = vadd.f32 %v6563, %v6564
    %v6566 = vsel %vm5711, %v6272, 0.0
    %v6567 = vadd.f32 %v6565, %v6566
    %v6568 = vsel %vm5711, %v6273, 0.0
    %v6569 = vadd.f32 %v6567, %v6568
    %v6570 = vsel %vm5711, %v6274, 0.0
    %v6571 = vadd.f32 %v6569, %v6570
    %v6572 = vsel %vm5711, %v6275, 0.0
    %v6573 = vadd.f32 %v6571, %v6572
    %v6574 = vsel %vm5711, %v6276, 0.0
    %v6575 = vadd.f32 %v6573, %v6574
    %v6576 = vsel %vm5711, %v6277, 0.0
    %v6577 = vadd.f32 %v6575, %v6576
    %v6578 = vsel %vm5711, %v6278, 0.0
    %v6579 = vadd.f32 %v6577, %v6578
    %v6580 = vsel %vm5711, %v6279, 0.0
    %v6581 = vadd.f32 %v6579, %v6580
    %v6582 = vsel %vm5711, %v6280, 0.0
    %v6583 = vadd.f32 %v6581, %v6582
    %v6584 = vsel %vm5711, %v6281, 0.0
    %v6585 = vadd.f32 %v6583, %v6584
    %v6586 = vsel %vm5711, %v6282, 0.0
    %v6587 = vadd.f32 %v6585, %v6586
    %v6588 = vsel %vm5711, %v6283, 0.0
    %v6589 = vadd.f32 %v6587, %v6588
    %v6590 = vsel %vm5711, %v6284, 0.0
    %v6591 = vadd.f32 %v6589, %v6590
    %v6592 = vsel %vm5711, %v6285, 0.0
    %v6593 = vadd.f32 %v6591, %v6592
    %v6594 = vsel %vm5711, %v6286, 0.0
    %v6595 = vadd.f32 %v6593, %v6594
    %v6596 = vsel %vm5711, %v6287, 0.0
    %v6597 = vadd.f32 %v6595, %v6596
    %v6598 = vsel %vm5711, %v6288, 0.0
    %v6599 = vadd.f32 %v6597, %v6598
    %v6600 = vsel %vm5711, %v6289, 0.0
    %v6601 = vadd.f32 %v6599, %v6600
    %v6602 = vsel %vm5711, %v6290, 0.0
    %v6603 = vadd.f32 %v6601, %v6602
    %v6604 = vsel %vm5711, %v6291, 0.0
    %v6605 = vadd.f32 %v6603, %v6604
    %v6606 = vsel %vm5711, %v6292, 0.0
    %v6607 = vadd.f32 %v6605, %v6606
    %v6608 = vsel %vm5711, %v6293, 0.0
    %v6609 = vadd.f32 %v6607, %v6608
    %v6610 = vsel %vm5711, %v6294, 0.0
    %v6611 = vadd.f32 %v6609, %v6610
    %v6612 = vsel %vm5711, %v6295, 0.0
    %v6613 = vadd.f32 %v6611, %v6612
    %v6614 = vsel %vm5711, %v6296, 0.0
    %v6615 = vadd.f32 %v6613, %v6614
    %v6616 = vsel %vm5711, %v6297, 0.0
    %v6617 = vadd.f32 %v6615, %v6616
    %v6618 = vsel %vm5711, %v6298, 0.0
    %v6619 = vadd.f32 %v6617, %v6618
    %v6620 = vsel %vm5711, %v6299, 0.0
    %v6621 = vadd.f32 %v6619, %v6620
    %v6622 = vsel %vm5711, %v6300, 0.0
    %v6623 = vadd.f32 %v6621, %v6622
    %v6624 = vsel %vm5711, %v6301, 0.0
    %v6625 = vadd.f32 %v6623, %v6624
    %v6626 = vsel %vm5711, %v6302, 0.0
    %v6627 = vadd.f32 %v6625, %v6626
    %v6628 = vsel %vm5711, %v6303, 0.0
    %v6629 = vadd.f32 %v6627, %v6628
    %v6630 = vsel %vm5711, %v6304, 0.0
    %v6631 = vadd.f32 %v6629, %v6630
    %v6632 = vsel %vm5711, %v6305, 0.0
    %v6633 = vadd.f32 %v6631, %v6632
    %v6634 = vsel %vm5711, %v6306, 0.0
    %v6635 = vadd.f32 %v6633, %v6634
    %v6636 = vsel %vm5711, %v6307, 0.0
    %v6637 = vadd.f32 %v6635, %v6636
    %v6638 = vsel %vm5711, %v6308, 0.0
    %v6639 = vadd.f32 %v6637, %v6638
    %v6640 = vsel %vm5711, %v6309, 0.0
    %v6641 = vadd.f32 %v6639, %v6640
    %v6642 = vsel %vm5711, %v6310, 0.0
    %v6643 = vadd.f32 %v6641, %v6642
    %v6644 = vsel %vm5711, %v6311, 0.0
    %v6645 = vadd.f32 %v6643, %v6644
    %v6646 = vsel %vm5711, %v6312, 0.0
    %v6647 = vadd.f32 %v6645, %v6646
    %v6648 = vsel %vm5711, %v6313, 0.0
    %v6649 = vadd.f32 %v6647, %v6648
    %v6650 = vsel %vm5711, %v6314, 0.0
    %v6651 = vadd.f32 %v6649, %v6650
    %v6652 = vsel %vm5711, %v6315, 0.0
    %v6653 = vadd.f32 %v6651, %v6652
    %v6654 = vsel %vm5711, %v6316, 0.0
    %v6655 = vadd.f32 %v6653, %v6654
    %v6656 = vsel %vm5711, %v6317, 0.0
    %v6657 = vadd.f32 %v6655, %v6656
    %v6658 = vsel %vm5711, %v6318, 0.0
    %v6659 = vadd.f32 %v6657, %v6658
    %v6660 = vsel %vm5711, %v6319, 0.0
    %v6661 = vadd.f32 %v6659, %v6660
    %v6662 = vsel %vm5711, %v6320, 0.0
    %v6663 = vadd.f32 %v6661, %v6662
    %v6664 = vsel %vm5711, %v6321, 0.0
    %v6665 = vadd.f32 %v6663, %v6664
    %v6666 = vsel %vm5711, %v6322, 0.0
    %v6667 = vadd.f32 %v6665, %v6666
    %v6668 = vsel %vm5711, %v6323, 0.0
    %v6669 = vadd.f32 %v6667, %v6668
    %v6670 = vsel %vm5711, %v6324, 0.0
    %v6671 = vadd.f32 %v6669, %v6670
    %v6672 = vsel %vm5711, %v6325, 0.0
    %v6673 = vadd.f32 %v6671, %v6672
    %v6674 = vsel %vm5711, %v6326, 0.0
    %v6675 = vadd.f32 %v6673, %v6674
    %v6676 = vsel %vm5711, %v6327, 0.0
    %v6677 = vadd.f32 %v6675, %v6676
    %v6678 = vsel %vm5711, %v6328, 0.0
    %v6679 = vadd.f32 %v6677, %v6678
    %v6680 = vsel %vm5711, %v6329, 0.0
    %v6681 = vadd.f32 %v6679, %v6680
    %v6682 = vsel %vm5711, %v6330, 0.0
    %v6683 = vadd.f32 %v6681, %v6682
    %v6684 = vsel %vm5711, %v6331, 0.0
    %v6685 = vadd.f32 %v6683, %v6684
    %v6686 = vsel %vm5711, %v6332, 0.0
    %v6687 = vadd.f32 %v6685, %v6686
    %v6688 = vsel %vm5711, %v6333, 0.0
    %v6689 = vadd.f32 %v6687, %v6688
    %v6690 = vsel %vm5711, %v6334, 0.0
    %v6691 = vadd.f32 %v6689, %v6690
    %v6692 = vsel %vm5711, %v6335, 0.0
    %v6693 = vadd.f32 %v6691, %v6692
    %v6694 = vsel %vm5711, %v6336, 0.0
    %v6695 = vadd.f32 %v6693, %v6694
    %v6696 = vsel %vm5711, %v6337, 0.0
    %v6697 = vadd.f32 %v6695, %v6696
    %v6698 = vsel %vm5711, %v6338, 0.0
    %v6699 = vadd.f32 %v6697, %v6698
    %v6700 = vsel %vm5711, %v6339, 0.0
    %v6701 = vadd.f32 %v6699, %v6700
    %v6702 = vsel %vm5711, %v6340, 0.0
    %v6703 = vadd.f32 %v6701, %v6702
    %v6704 = vsel %vm5711, %v6341, 0.0
    %v6705 = vadd.f32 %v6703, %v6704
    %v6706 = vsel %vm5711, %v6342, 0.0
    %v6707 = vadd.f32 %v6705, %v6706
    %v6708 = vsel %vm5711, %v6343, 0.0
    %v6709 = vadd.f32 %v6707, %v6708
    %v6710 = vsel %vm5711, %v6344, 0.0
    %v6711 = vadd.f32 %v6709, %v6710
    %v6712 = vsel %vm5711, %v6345, 0.0
    %v6713 = vadd.f32 %v6711, %v6712
    %v6714 = vsel %vm5711, %v6346, 0.0
    %v6715 = vadd.f32 %v6713, %v6714
    %v6716 = vsel %vm5711, %v6347, 0.0
    %v6717 = vadd.f32 %v6715, %v6716
    %v6718 = vsel %vm5711, %v6348, 0.0
    %v6719 = vadd.f32 %v6717, %v6718
    %v6720 = vsel %vm5711, %v6349, 0.0
    %v6721 = vadd.f32 %v6719, %v6720
    %v6722 = vsel %vm5711, %v6350, 0.0
    %v6723 = vadd.f32 %v6721, %v6722
    %v6724 = vsel %vm5711, %v6351, 0.0
    %v6725 = vadd.f32 %v6723, %v6724
    %v6726 = vsel %vm5711, %v6352, 0.0
    %v6727 = vadd.f32 %v6725, %v6726
    %v6728 = vsel %vm5711, %v6353, 0.0
    %v6729 = vadd.f32 %v6727, %v6728
    %v6730 = vsel %vm5711, %v6354, 0.0
    %v6731 = vadd.f32 %v6729, %v6730
    %v6732 = vsel %vm5711, %v6355, 0.0
    %v6733 = vadd.f32 %v6731, %v6732
    %v6734 = vsel %vm5711, %v6356, 0.0
    %v6735 = vadd.f32 %v6733, %v6734
    %v6736 = vsel %vm5711, %v6357, 0.0
    %v6737 = vadd.f32 %v6735, %v6736
    %v6738 = vsel %vm5711, %v6358, 0.0
    %v6739 = vadd.f32 %v6737, %v6738
    %v6740 = vsel %vm5711, %v6359, 0.0
    %v6741 = vadd.f32 %v6739, %v6740
    %v6742 = vsel %vm5711, %v6360, 0.0
    %v6743 = vadd.f32 %v6741, %v6742
    %v6744 = vsel %vm5711, %v6361, 0.0
    %v6745 = vadd.f32 %v6743, %v6744
    %v6746 = vsel %vm5711, %v6362, 0.0
    %v6747 = vadd.f32 %v6745, %v6746
    %v6748 = vsel %vm5711, %v6363, 0.0
    %v6749 = vadd.f32 %v6747, %v6748
    %v6750 = vsel %vm5711, %v6364, 0.0
    %v6751 = vadd.f32 %v6749, %v6750
    %v6752 = vsel %vm5711, %v6365, 0.0
    %v6753 = vadd.f32 %v6751, %v6752
    %v6754 = vsel %vm5711, %v6366, 0.0
    %v6755 = vadd.f32 %v6753, %v6754
    %v6756 = vsel %vm5711, %v6367, 0.0
    %v6757 = vadd.f32 %v6755, %v6756
    %v6758 = vsel %vm5711, %v6368, 0.0
    %v6759 = vadd.f32 %v6757, %v6758
    %v6760 = vsel %vm5711, %v6369, 0.0
    %v6761 = vadd.f32 %v6759, %v6760
    %v6762 = vsel %vm5711, %v6370, 0.0
    %v6763 = vadd.f32 %v6761, %v6762
    %v6764 = vsel %vm5711, %v6371, 0.0
    %v6765 = vadd.f32 %v6763, %v6764
    %v6766 = vsel %vm5711, %v6372, 0.0
    %v6767 = vadd.f32 %v6765, %v6766
    %v6768 = vsel %vm5711, %v6373, 0.0
    %v6769 = vadd.f32 %v6767, %v6768
    %v6770 = vsel %vm5711, %v6374, 0.0
    %v6771 = vadd.f32 %v6769, %v6770
    %v6772 = vsel %vm5711, %v6375, 0.0
    %v6773 = vadd.f32 %v6771, %v6772
    %v6774 = vsel %vm5711, %v6376, 0.0
    %v6775 = vadd.f32 %v6773, %v6774
    %v6776 = vsel %vm5711, %v6377, 0.0
    %v6777 = vadd.f32 %v6775, %v6776
    %v6778 = vsel %vm5711, %v6378, 0.0
    %v6779 = vadd.f32 %v6777, %v6778
    %v6780 = vsel %vm5711, %v6379, 0.0
    %v6781 = vadd.f32 %v6779, %v6780
    %v6782 = vsel %vm5711, %v6380, 0.0
    %v6783 = vadd.f32 %v6781, %v6782
    %v6784 = vsel %vm5711, %v6381, 0.0
    %v6785 = vadd.f32 %v6783, %v6784
    %v6786 = vsel %vm5711, %v6382, 0.0
    %v6787 = vadd.f32 %v6785, %v6786
    %v6788 = vsel %vm5711, %v6383, 0.0
    %v6789 = vadd.f32 %v6787, %v6788
    %v6790 = vsel %vm5711, %v6384, 0.0
    %v6791 = vadd.f32 %v6789, %v6790
    %v6792 = vsel %vm5711, %v6385, 0.0
    %v6793 = vadd.f32 %v6791, %v6792
    %v6794 = vsel %vm5711, %v6386, 0.0
    %v6795 = vadd.f32 %v6793, %v6794
    %v6796 = vsel %vm5711, %v6387, 0.0
    %v6797 = vadd.f32 %v6795, %v6796
    %v6798 = vsel %vm5711, %v6388, 0.0
    %v6799 = vadd.f32 %v6797, %v6798
    %v6800 = vsel %vm5711, %v6389, 0.0
    %v6801 = vadd.f32 %v6799, %v6800
    %v6802 = vsel %vm5711, %v6390, 0.0
    %v6803 = vadd.f32 %v6801, %v6802
    %v6804 = vsel %vm5711, %v6391, 0.0
    %v6805 = vadd.f32 %v6803, %v6804
    %v6806 = vsel %vm5711, %v6392, 0.0
    %v6807 = vadd.f32 %v6805, %v6806
    %v6808 = vsel %vm5711, %v6393, 0.0
    %v6809 = vadd.f32 %v6807, %v6808
    %v6810 = vsel %vm5711, %v6394, 0.0
    %v6811 = vadd.f32 %v6809, %v6810
    %v6812 = vsel %vm5711, %v6395, 0.0
    %v6813 = vadd.f32 %v6811, %v6812
    %v6814 = vsel %vm5711, %v6396, 0.0
    %v6815 = vadd.f32 %v6813, %v6814
    %v6816 = vsel %vm5711, %v6397, 0.0
    %v6817 = vadd.f32 %v6815, %v6816
    %v6818 = vsel %vm5711, %v6398, 0.0
    %v6819 = vadd.f32 %v6817, %v6818
    %v6820 = vsel %vm5711, %v6399, 0.0
    %v6821 = vadd.f32 %v6819, %v6820
    %v6822 = vsel %vm5711, %v6400, 0.0
    %v6823 = vadd.f32 %v6821, %v6822
    %v6824 = vsel %vm5711, %v6401, 0.0
    %v6825 = vadd.f32 %v6823, %v6824
    %v6826 = vsel %vm5711, %v6402, 0.0
    %v6827 = vadd.f32 %v6825, %v6826
    %v6828 = vsel %vm5711, %v6403, 0.0
    %v6829 = vadd.f32 %v6827, %v6828
    %v6830 = vsel %vm5711, %v6404, 0.0
    %v6831 = vadd.f32 %v6829, %v6830
    %v6832 = vsel %vm5711, %v6405, 0.0
    %v6833 = vadd.f32 %v6831, %v6832
    %v6834 = vsel %vm5711, %v6406, 0.0
    %v6835 = vadd.f32 %v6833, %v6834
    %v6836 = vsel %vm5711, %v6407, 0.0
    %v6837 = vadd.f32 %v6835, %v6836
    %v6838 = vsel %vm5711, %v6408, 0.0
    %v6839 = vadd.f32 %v6837, %v6838
    %v6840 = vsel %vm5711, %v6409, 0.0
    %v6841 = vadd.f32 %v6839, %v6840
    %v6842 = vsel %vm5711, %v6410, 0.0
    %v6843 = vadd.f32 %v6841, %v6842
    %v6844 = vsel %vm5711, %v6411, 0.0
    %v6845 = vadd.f32 %v6843, %v6844
    %v6846 = vsel %vm5711, %v6412, 0.0
    %v6847 = vadd.f32 %v6845, %v6846
    %v6848 = vsel %vm5711, %v6413, 0.0
    %v6849 = vadd.f32 %v6847, %v6848
    %v6850 = vsel %vm5711, %v6414, 0.0
    %v6851 = vadd.f32 %v6849, %v6850
    %v6852 = vsel %vm5711, %v6415, 0.0
    %v6853 = vadd.f32 %v6851, %v6852
    %v6854 = vsel %vm5711, %v6416, 0.0
    %v6855 = vadd.f32 %v6853, %v6854
    %v6856 = vsel %vm5711, %v6417, 0.0
    %v6857 = vadd.f32 %v6855, %v6856
    %v6858 = vsel %vm5711, %v6418, 0.0
    %v6859 = vadd.f32 %v6857, %v6858
    %v6860 = vsel %vm5711, %v6419, 0.0
    %v6861 = vadd.f32 %v6859, %v6860
    %v6862 = vsel %vm5711, %v6420, 0.0
    %v6863 = vadd.f32 %v6861, %v6862
    %v6864 = vsel %vm5711, %v6421, 0.0
    %v6865 = vadd.f32 %v6863, %v6864
    %v6866 = vsel %vm5711, %v6422, 0.0
    %v6867 = vadd.f32 %v6865, %v6866
    %v6868 = vsel %vm5711, %v6423, 0.0
    %v6869 = vadd.f32 %v6867, %v6868
    %v6870 = vsel %vm5711, %v6424, 0.0
    %v6871 = vadd.f32 %v6869, %v6870
    %v6872 = vsel %vm5711, %v6425, 0.0
    %v6873 = vadd.f32 %v6871, %v6872
    %v6874 = vsel %vm5711, %v6426, 0.0
    %v6875 = vadd.f32 %v6873, %v6874
    %v6876 = vsel %vm5711, %v6427, 0.0
    %v6877 = vadd.f32 %v6875, %v6876
    %v6878 = vsel %vm5711, %v6428, 0.0
    %v6879 = vadd.f32 %v6877, %v6878
    %v6880 = vsel %vm5711, %v6429, 0.0
    %v6881 = vadd.f32 %v6879, %v6880
    %v6882 = vsel %vm5711, %v6430, 0.0
    %v6883 = vadd.f32 %v6881, %v6882
    %v6884 = vsel %vm5711, %v6431, 0.0
    %v6885 = vadd.f32 %v6883, %v6884
    %v6886 = vsel %vm5711, %v6432, 0.0
    %v6887 = vadd.f32 %v6885, %v6886
    %v6888 = vsel %vm5711, %v6433, 0.0
    %v6889 = vadd.f32 %v6887, %v6888
    %v6890 = vsel %vm5711, %v6434, 0.0
    %v6891 = vadd.f32 %v6889, %v6890
    %v6892 = vsel %vm5711, %v6435, 0.0
    %v6893 = vadd.f32 %v6891, %v6892
    %v6894 = vsel %vm5711, %v6436, 0.0
    %v6895 = vadd.f32 %v6893, %v6894
    %v6896 = vsel %vm5711, %v6437, 0.0
    %v6897 = vadd.f32 %v6895, %v6896
    %v6898 = vsel %vm5711, %v6438, 0.0
    %v6899 = vadd.f32 %v6897, %v6898
    %v6900 = vsel %vm5711, %v6439, 0.0
    %v6901 = vadd.f32 %v6899, %v6900
    %v6902 = vsel %vm5711, %v6440, 0.0
    %v6903 = vadd.f32 %v6901, %v6902
    %v6904 = vsel %vm5711, %v6441, 0.0
    %v6905 = vadd.f32 %v6903, %v6904
    %v6906 = vsel %vm5711, %v6442, 0.0
    %v6907 = vadd.f32 %v6905, %v6906
    %v6908 = vsel %vm5711, %v6443, 0.0
    %v6909 = vadd.f32 %v6907, %v6908
    %v6910 = vsel %vm5711, %v6444, 0.0
    %v6911 = vadd.f32 %v6909, %v6910
    %v6912 = vsel %vm5711, %v6445, 0.0
    %v6913 = vadd.f32 %v6911, %v6912
    %v6914 = vsel %vm5711, %v6446, 0.0
    %v6915 = vadd.f32 %v6913, %v6914
    %v6916 = vsel %vm5711, %v6447, 0.0
    %v6917 = vadd.f32 %v6915, %v6916
    %v6918 = vsel %vm5711, %v6448, 0.0
    %v6919 = vadd.f32 %v6917, %v6918
    %v6920 = vsel %vm5711, %v6449, 0.0
    %v6921 = vadd.f32 %v6919, %v6920
    %v6922 = vsel %vm5711, %v6450, 0.0
    %v6923 = vadd.f32 %v6921, %v6922
    %v6924 = vsel %vm5711, %v6451, 0.0
    %v6925 = vadd.f32 %v6923, %v6924
    %v6926 = vsel %vm5711, %v6452, 0.0
    %v6927 = vadd.f32 %v6925, %v6926
    %v6928 = vsel %vm5711, %v6453, 0.0
    %v6929 = vadd.f32 %v6927, %v6928
    %v6930 = vsel %vm5711, %v6454, 0.0
    %v6931 = vadd.f32 %v6929, %v6930
    %v6932 = vsel %vm5711, %v6455, 0.0
    %v6933 = vadd.f32 %v6931, %v6932
    %v6934 = vsel %vm5711, %v6456, 0.0
    %v6935 = vadd.f32 %v6933, %v6934
    %v6936 = vsel %vm5711, %v6457, 0.0
    %v6937 = vadd.f32 %v6935, %v6936
    %v6938 = vsel %vm5711, %v6458, 0.0
    %v6939 = vadd.f32 %v6937, %v6938
    %v6940 = vsel %vm5711, %v6459, 0.0
    %v6941 = vadd.f32 %v6939, %v6940
    %v6942 = vsel %vm5711, %v6460, 0.0
    %v6943 = vadd.f32 %v6941, %v6942
    %v6944 = vsel %vm5711, %v6461, 0.0
    %v6945 = vadd.f32 %v6943, %v6944
    %v6946 = vsel %vm5711, %v6462, 0.0
    %v6947 = vadd.f32 %v6945, %v6946
    %v6948 = vsel %vm5711, %v6463, 0.0
    %v6949 = vadd.f32 %v6947, %v6948
    %v6950 = vsel %vm5711, %v6464, 0.0
    %v6951 = vadd.f32 %v6949, %v6950
    %v6952 = vsel %vm5711, %v6465, 0.0
    %v6953 = vadd.f32 %v6951, %v6952
    %v6954 = vsel %vm5711, %v6466, 0.0
    %v6955 = vadd.f32 %v6953, %v6954
    %v6956 = vsel %vm5711, %v6467, 0.0
    %v6957 = vadd.f32 %v6955, %v6956
    %v6958 = vsel %vm5711, %v6468, 0.0
    %v6959 = vadd.f32 %v6957, %v6958
    %v6960 = vsel %vm5711, %v6469, 0.0
    %v6961 = vadd.f32 %v6959, %v6960
    %v6962 = vsel %vm5711, %v6470, 0.0
    %v6963 = vadd.f32 %v6961, %v6962
    %v6964 = vsel %vm5711, %v6471, 0.0
    %v6965 = vadd.f32 %v6963, %v6964
    %v6966 = vsel %vm5711, %v6472, 0.0
    %v6967 = vadd.f32 %v6965, %v6966
    %v6968 = vsel %vm5711, %v6473, 0.0
    %v6969 = vadd.f32 %v6967, %v6968
    %v6970 = vsel %vm5711, %v6474, 0.0
    %v6971 = vadd.f32 %v6969, %v6970
    %v6972 = vsel %vm5711, %v6475, 0.0
    %v6973 = vadd.f32 %v6971, %v6972
    %v6974 = vsel %vm5711, %v6476, 0.0
    %v6975 = vadd.f32 %v6973, %v6974
    %v6976 = vsel %vm5711, %v6477, 0.0
    %v6977 = vadd.f32 %v6975, %v6976
    %v6978 = vsel %vm5711, %v6478, 0.0
    %v6979 = vadd.f32 %v6977, %v6978
    %v6980 = vsel %vm5711, %v6479, 0.0
    %v6981 = vadd.f32 %v6979, %v6980
    %v6982 = vsel %vm5711, %v6480, 0.0
    %v6983 = vadd.f32 %v6981, %v6982
    %v6984 = vsel %vm5711, %v6481, 0.0
    %v6985 = vadd.f32 %v6983, %v6984
    %v6986 = vsel %vm5711, %v6482, 0.0
    %v6987 = vadd.f32 %v6985, %v6986
    %v6988 = vsel %vm5711, %v6483, 0.0
    %v6989 = vadd.f32 %v6987, %v6988
    %v6990 = vsel %vm5711, %v6484, 0.0
    %v6991 = vadd.f32 %v6989, %v6990
    %v6992 = vsel %vm5711, %v6485, 0.0
    %v6993 = vadd.f32 %v6991, %v6992
    %v6994 = vsel %vm5711, %v6486, 0.0
    %v6995 = vadd.f32 %v6993, %v6994
    %v6996 = vsel %vm5711, %v6487, 0.0
    %v6997 = vadd.f32 %v6995, %v6996
    %v6998 = vsel %vm5711, %v6488, 0.0
    %v6999 = vadd.f32 %v6997, %v6998
    %v7000 = vrot.slane %v6999, 4
    %v7001 = vadd.f32 %v6999, %v7000
    %v7002 = vrot.slane %v7001, 2
    %v7003 = vadd.f32 %v7001, %v7002
    %v7004 = vrot.slane %v7003, 1
    %v7005 = vadd.f32 %v7003, %v7004
    %v7006 = vadd.f32 %v6232, %v7005
    %7007 = vst.msk [vmem:[#allocation4 + $0x1] sm:$0x1] %vm6230, %v7006
    // Predicated region
    $region30: #{tpu_custom_call.1} parent=1 // pred_check
      _
    $region31: #{tpu_custom_call.1} parent=1 // pred_check_branch
      %7009 = sbr.rel (0) target = $region33
    $region32: #{tpu_custom_call.1} parent=1 // pred_region
      %s7011 = ssub.s32 32, 32
      %7012 = vsyncadd [#allocation3], %s7011
      %s7014 = sshll.u32 [#allocation2], 4
      %s7015 = int_to_ptr.vmem [resolvable:$true] %s7014
      %7017 = dma.vmem_to_hbm [thread:$0]  %s7015, 32, %s5, [#allocation3]
    $region33: #{tpu_custom_call.1} parent=1 // pred_fallthru
      _
    // Predicated region
    $region34: #{tpu_custom_call.1} parent=1 // pred_check
      _
    $region35: #{tpu_custom_call.1} parent=1 // pred_check_branch
      %7019 = sbr.rel (0) target = $region37
    $region36: #{tpu_custom_call.1} parent=1 // pred_region
      %s7021 = ssub.s32 32, 32
      %7022 = vsyncadd [#allocation5], %s7021
      %s7024 = sshll.u32 [#allocation4], 4
      %s7025 = int_to_ptr.vmem [resolvable:$true] %s7024
      %7027 = dma.vmem_to_hbm [thread:$0]  %s7025, 32, %s6, [#allocation5]
    $region37: #{tpu_custom_call.1} parent=1 // pred_fallthru
      _
    // Predicated region
    $region38: #{tpu_custom_call.1} parent=1 // pred_check
      _
    $region39: #{tpu_custom_call.1} parent=1 // pred_check_branch
      %7029 = sbr.rel (0) target = $region41
    $region40: #{tpu_custom_call.1} parent=1 // pred_region
      %7030 = dma.done [#allocation3], 32
    $region41: #{tpu_custom_call.1} parent=1 // pred_fallthru
      _
    // Predicated region
    $region42: #{tpu_custom_call.1} parent=1 // pred_check
      _
    $region43: #{tpu_custom_call.1} parent=1 // pred_check_branch
      %7032 = sbr.rel (0) target = $region45
    $region44: #{tpu_custom_call.1} parent=1 // pred_region
      %7033 = dma.done [#allocation5], 32
    $region45: #{tpu_custom_call.1} parent=1 // pred_fallthru
      _
    %7034 = vsyncpa [#allocation3], 1
    %7035 = vsyncpa [#allocation5], 1

</llo_original>
